<compile_context>
chip_gen: v6e
topology: v6e:2x2x1
jax: 0.10.0
libtpu: 0.0.40
codegen_flags: <defaults>
</compile_context>

<pallas_src>
import functools
import math

import jax
import jax.numpy as jnp
from jax.experimental import pallas as pl
from jax.experimental.pallas import tpu as pltpu

# ----------------------------- constants ------------------------------------
HOP_LENGTH = 200
NUM_MELS = 128
N_FFTS = 1024
SAMPLING_RATE = 16000
WIN_LENGTH = 800

# Small synthetic config (the real module uses embed_dim=768, depth=12).
EMBED_DIM = 128
NUM_HEADS = 4
DEPTH = 2
MLP_RATIO = 4
MASKED_RATIO = 0.8
SPEC_MEAN = -4.5
SPEC_STD = 4.0

VMEM_LIMIT = 48 * 1024 * 1024


def _round_up(x, m):
    return ((x + m - 1) // m) * m


# ======= Pallas kernel: (optional LN) + matmul + bias (+gelu / +residual) ====
def _linear_kernel(*refs, act, has_residual, has_ln):
    it = iter(refs)
    x_ref = next(it)
    if has_ln:
        g_ref = next(it)
        bl_ref = next(it)
    w_ref = next(it)
    b_ref = next(it)
    r_ref = next(it) if has_residual else None
    o_ref = next(it)

    x = x_ref[...]
    if has_ln:
        xf = x.astype(jnp.float32)
        mu = jnp.mean(xf, axis=-1, keepdims=True)
        var = jnp.mean(jnp.square(xf - mu), axis=-1, keepdims=True)
        x = ((xf - mu) * jax.lax.rsqrt(var + 1e-5)) * g_ref[...] + bl_ref[...]

    out = jnp.dot(x.astype(jnp.bfloat16), w_ref[...],
                  preferred_element_type=jnp.float32) + b_ref[...]
    if act == "gelu":
        out = jax.nn.gelu(out, approximate=True)
    if has_residual:
        out = out + r_ref[...].astype(jnp.float32)
    o_ref[...] = out.astype(o_ref.dtype)


def pallas_linear(x, w, b, *, ln_gamma=None, ln_beta=None, act="none",
                  residual=None, out_dtype=None):
    """y = LN?(x) @ w + b  (optional GELU, optional fused residual add).

    x: (..., K) f32/bf16 (cast to bf16 inside the kernel — x is read once),
    w: (K, N) pre-cast bf16, b: (N,). K and N must be 128-multiples (true for
    every layer of this model). The full K contraction runs in one grid step.
    """
    orig_shape = x.shape
    K, N = w.shape
    out_dtype = out_dtype if out_dtype is not None else x.dtype
    x2 = x.reshape(-1, K)
    M = x2.shape[0]

    has_ln = ln_gamma is not None
    has_res = residual is not None

    tn = 256 if N % 256 == 0 else 128
    Mp = _round_up(M, 16)
    tm = 16
    for cand in (512, 256, 128, 64, 32):
        if Mp % cand == 0:
            tm = cand
            break

    if Mp > M:                       # fallback only — hot path carries padded M
        x2 = jnp.pad(x2, ((0, Mp - M), (0, 0)))

    wb = w if w.dtype == jnp.bfloat16 else w.astype(jnp.bfloat16)
    bb = b.astype(jnp.float32).reshape(1, N)

    args = [x2]
    in_specs = [pl.BlockSpec((tm, K), lambda i, j: (i, 0))]
    if has_ln:
        args += [ln_gamma.astype(jnp.float32).reshape(1, K),
                 ln_beta.astype(jnp.float32).reshape(1, K)]
        in_specs += [pl.BlockSpec((1, K), lambda i, j: (0, 0)),
                     pl.BlockSpec((1, K), lambda i, j: (0, 0))]
    args += [wb, bb]
    in_specs += [pl.BlockSpec((K, tn), lambda i, j: (0, j)),
                 pl.BlockSpec((1, tn), lambda i, j: (0, j))]
    if has_res:
        r2 = residual.reshape(-1, N).astype(jnp.float32)
        if Mp > M:
            r2 = jnp.pad(r2, ((0, Mp - M), (0, 0)))
        args.append(r2)
        in_specs.append(pl.BlockSpec((tm, tn), lambda i, j: (i, j)))

    out = pl.pallas_call(
        functools.partial(_linear_kernel, act=act, has_residual=has_res,
                          has_ln=has_ln),
        out_shape=jax.ShapeDtypeStruct((Mp, N), out_dtype),
        grid_spec=pltpu.PrefetchScalarGridSpec(
            num_scalar_prefetch=0,
            grid=(Mp // tm, N // tn),
            in_specs=in_specs,
            out_specs=pl.BlockSpec((tm, tn), lambda i, j: (i, j)),
        ),
        compiler_params=pltpu.CompilerParams(
            dimension_semantics=("parallel", "parallel"),
            vmem_limit_bytes=VMEM_LIMIT),
    )(*args)
    if Mp > M:
        out = out[:M]
    return out.reshape(*orig_shape[:-1], N)


# ===================== Pallas kernel: multi-head attention ===================
def _attn_kernel(q_ref, k_ref, v_ref, bias_ref, o_ref):
    # One (batch, head) per grid step; head is contiguous/full-extent in lanes.
    q = q_ref[0, 0]                     # (Sp, Dh) bf16 (scale pre-folded)
    k = k_ref[0, 0]                     # (Sp, Dh) bf16
    v = v_ref[0, 0]                     # (Sp, Dh) bf16
    s = jax.lax.dot_general(q, k, (((1,), (1,)), ((), ())),
                            preferred_element_type=jnp.float32)
    s = s + bias_ref[0]                 # key-padding bias (1, Sp)
    s = s - jnp.max(s, axis=-1, keepdims=True)
    p = jnp.exp(s)
    denom = jnp.sum(p, axis=-1, keepdims=True)
    p = p * pl.reciprocal(denom, approx=True)
    o_ref[0, 0] = jnp.dot(p.astype(v.dtype), v,
                          preferred_element_type=jnp.float32).astype(o_ref.dtype)


def pallas_attention(qkv, key_mask, num_heads):
    """qkv: (B, S, 3E) fused bf16 projections; key_mask: (B, S), 1=valid 0=pad.

    Q/K/V are re-arranged head-major in the wrapper ((B, H, S, Dh), contiguous
    per head) and the grid runs over (batch, head).
    """
    B, S, E3 = qkv.shape
    E = E3 // 3
    Dh = E // num_heads
    Sp = _round_up(S, 16)

    qkv_h = qkv.reshape(B, S, 3, num_heads, Dh).transpose(2, 0, 3, 1, 4)
    if Sp > S:                           # fallback only — hot path has S % 16 == 0
        qkv_h = jnp.pad(qkv_h, ((0, 0), (0, 0), (0, 0), (0, Sp - S), (0, 0)))
        key_mask = jnp.pad(key_mask, ((0, 0), (0, Sp - S)))
    q, k, v = qkv_h[0], qkv_h[1], qkv_h[2]        # each (B, H, Sp, Dh) bf16
    bias = jnp.where(key_mask > 0, 0.0, -1e9).astype(jnp.float32)
    bias = bias.reshape(B, 1, Sp)

    out = pl.pallas_call(
        _attn_kernel,
        out_shape=jax.ShapeDtypeStruct((B, num_heads, Sp, Dh), jnp.bfloat16),
        grid_spec=pltpu.PrefetchScalarGridSpec(
            num_scalar_prefetch=0,
            grid=(B, num_heads),
            in_specs=[
                pl.BlockSpec((1, 1, Sp, Dh), lambda b, h: (b, h, 0, 0)),
                pl.BlockSpec((1, 1, Sp, Dh), lambda b, h: (b, h, 0, 0)),
                pl.BlockSpec((1, 1, Sp, Dh), lambda b, h: (b, h, 0, 0)),
                pl.BlockSpec((1, 1, Sp), lambda b, h: (b, 0, 0)),
            ],
            out_specs=pl.BlockSpec((1, 1, Sp, Dh), lambda b, h: (b, h, 0, 0)),
        ),
        compiler_params=pltpu.CompilerParams(
            dimension_semantics=("parallel", "parallel"),
            vmem_limit_bytes=VMEM_LIMIT),
    )(q, k, v, bias)
    out = out.transpose(0, 2, 1, 3).reshape(B, Sp, E)
    return out[:, :S, :] if Sp > S else out


# ========================= plain-JAX glue (non-hot-path) =====================
def _hz_to_mel(f):
    return 2595.0 * jnp.log10(1.0 + f / 700.0)


def _mel_to_hz(m):
    return 700.0 * (10.0 ** (m / 2595.0) - 1.0)


def _mel_filterbank(num_mels, n_fft, sr, fmin, fmax):
    n_freqs = n_fft // 2 + 1
    freqs = jnp.linspace(0.0, sr / 2.0, n_freqs)
    mel_pts = jnp.linspace(_hz_to_mel(jnp.array(fmin)),
                           _hz_to_mel(jnp.array(fmax)), num_mels + 2)
    hz = _mel_to_hz(mel_pts)
    lower, center, upper = hz[:-2, None], hz[1:-1, None], hz[2:, None]
    up = (freqs[None, :] - lower) / (center - lower)
    down = (upper - freqs[None, :]) / (upper - center)
    return jnp.maximum(0.0, jnp.minimum(up, down)).astype(jnp.float32)


def mel_spectrogram_jax(wav, n_fft=N_FFTS, num_mels=NUM_MELS, sr=SAMPLING_RATE,
                        hop=HOP_LENGTH, win=WIN_LENGTH, fmin=0.0, fmax=8000.0):
    """wav: (B, T) -> log-mel spectrogram (B, num_mels, frames)."""
    # TODO(synk): reference `mel_spectrogram` was not provided; standard
    # log-mel STFT in plain JAX (FFT has no Pallas equivalent).
    pad = (n_fft - hop) // 2
    wav = jnp.pad(wav, ((0, 0), (pad, pad)), mode="reflect")
    n_frames = 1 + (wav.shape[1] - n_fft) // hop
    idx = jnp.arange(n_frames)[:, None] * hop + jnp.arange(n_fft)[None, :]
    frames = wav[:, idx]                                     # (B, F, n_fft)
    w = 0.5 - 0.5 * jnp.cos(2.0 * jnp.pi * jnp.arange(win) / win)
    w = jnp.pad(w, ((n_fft - win) // 2, (n_fft - win) // 2))
    spec = jnp.abs(jnp.fft.rfft(frames * w, axis=-1))        # (B, F, bins)
    fb = _mel_filterbank(num_mels, n_fft, sr, fmin, fmax)    # (num_mels, bins)
    mel = jnp.einsum("mf,btf->bmt", fb, spec)
    return jnp.log(jnp.clip(mel, 1e-5, None)).astype(jnp.float32)


def spectrogram_padding_jax(spec, num_mels=NUM_MELS):
    bsz, nm, seq_len = spec.shape
    pad = (16 - seq_len % 16) % 16
    new_len = seq_len + pad
    padded = jnp.pad(spec, ((0, 0), (0, 0), (0, pad)))
    vvc = math.ceil(seq_len / 16)
    wmask = jnp.concatenate(
        [jnp.ones((vvc,), jnp.float32),
         jnp.zeros((new_len // 16 - vvc,), jnp.float32)])
    padding_masks = jnp.broadcast_to(jnp.tile(wmask, num_mels // 16),
                                     (bsz, (num_mels // 16) * (new_len // 16)))
    full_mask = jnp.concatenate(
        [jnp.ones((bsz, nm, seq_len), jnp.float32),
         jnp.zeros((bsz, nm, pad), jnp.float32)], axis=2)
    return {"input_values": padded, "padding_masks": padding_masks,
            "full_padding_masks": full_mask}


def sinusoidal_pe(seq_len, dim):
    pos = jnp.arange(seq_len, dtype=jnp.float32)[:, None]
    i = jnp.arange(dim // 2, dtype=jnp.float32)[None, :]
    angle = pos / jnp.power(10000.0, 2.0 * i / dim)
    pe = jnp.zeros((seq_len, dim), jnp.float32)
    pe = pe.at[:, 0::2].set(jnp.sin(angle))
    pe = pe.at[:, 1::2].set(jnp.cos(angle))
    return pe


# =========================== parameters =====================================
def _xavier(key, fan_in, fan_out):
    limit = math.sqrt(6.0 / (fan_in + fan_out))
    return jax.random.uniform(key, (fan_in, fan_out), jnp.float32, -limit, limit)


def init_params(key, embed_dim=EMBED_DIM, depth=DEPTH, mlp_ratio=MLP_RATIO):
    keys = iter(jax.random.split(key, 256))
    E = embed_dim
    p = {
        "patch_w": _xavier(next(keys), 256, E),   # conv (E,1,16,16) flattened
        "patch_b": jnp.zeros((E,), jnp.float32),
        "mask_token": 0.02 * jax.random.normal(next(keys), (1, 1, E), jnp.float32),
        "out_w": _xavier(next(keys), E, 16 * 16 * 1),
        "out_b": jnp.zeros((16 * 16,), jnp.float32),
    }

    def block():
        wq = _xavier(next(keys), E, E)
        wk = _xavier(next(keys), E, E)
        wv = _xavier(next(keys), E, E)
        return {
            "ln1_g": jnp.ones((E,), jnp.float32), "ln1_b": jnp.zeros((E,), jnp.float32),
            "wqkv": jnp.concatenate([wq, wk, wv], axis=1),    # (E, 3E) fused
            "bqkv": jnp.zeros((3 * E,), jnp.float32),
            "wo": _xavier(next(keys), E, E), "bo": jnp.zeros((E,), jnp.float32),
            "ln2_g": jnp.ones((E,), jnp.float32), "ln2_b": jnp.zeros((E,), jnp.float32),
            "w1": _xavier(next(keys), E, mlp_ratio * E),
            "b1": jnp.zeros((mlp_ratio * E,), jnp.float32),
            "w2": _xavier(next(keys), mlp_ratio * E, E),
            "b2": jnp.zeros((E,), jnp.float32),
        }

    p["encoder"] = [block() for _ in range(depth)]
    p["decoder"] = [block() for _ in range(depth)]
    return p


def prepare_params(p, num_heads=NUM_HEADS):
    """One-time prep (outside jit): pre-cast all matmul weights to bf16 and
    fold the 1/sqrt(Dh) attention scale into the Q columns of wqkv/bqkv."""
    E = p["patch_w"].shape[1]
    scale = 1.0 / math.sqrt(E // num_heads)

    def prep_block(bp):
        wqkv = jnp.concatenate([bp["wqkv"][:, :E] * scale, bp["wqkv"][:, E:]],
                               axis=1)
        bqkv = jnp.concatenate([bp["bqkv"][:E] * scale, bp["bqkv"][E:]], axis=0)
        out = dict(bp)
        out["wqkv"] = wqkv.astype(jnp.bfloat16)
        out["bqkv"] = bqkv.astype(jnp.float32)
        out["wo"] = bp["wo"].astype(jnp.bfloat16)
        out["w1"] = bp["w1"].astype(jnp.bfloat16)
        out["w2"] = bp["w2"].astype(jnp.bfloat16)
        return out

    new = dict(p)
    new["patch_w"] = p["patch_w"].astype(jnp.bfloat16)
    new["out_w"] = p["out_w"].astype(jnp.bfloat16)
    new["encoder"] = [prep_block(bp) for bp in p["encoder"]]
    new["decoder"] = [prep_block(bp) for bp in p["decoder"]]
    return new


# =========================== model forward ===================================
def transformer_block(x, key_mask, p, num_heads):
    # TODO(synk): TransformerBlock definition was not provided; standard
    # pre-LN MHA + GELU MLP block is used (dropout is a no-op, eval mode).
    # LN1 fused into the QKV projection, residuals fused into matmul epilogues.
    qkv = pallas_linear(x, p["wqkv"], p["bqkv"], ln_gamma=p["ln1_g"],
                        ln_beta=p["ln1_b"], out_dtype=jnp.bfloat16)
    o = pallas_attention(qkv, key_mask, num_heads)            # (B, S, E) bf16
    x = pallas_linear(o, p["wo"], p["bo"], residual=x, out_dtype=jnp.float32)

    # LN2 fused into the MLP first matmul.
    h = pallas_linear(x, p["w1"], p["b1"], ln_gamma=p["ln2_g"],
                      ln_beta=p["ln2_b"], act="gelu", out_dtype=jnp.bfloat16)
    x = pallas_linear(h, p["w2"], p["b2"], residual=x, out_dtype=jnp.float32)
    return x


def wave_mae_forward(params, waveform, mask_key,
                     spec_mean=SPEC_MEAN, spec_std=SPEC_STD,
                     masked_ratio=MASKED_RATIO, num_heads=NUM_HEADS):
    """waveform: (B, 1, T).  Returns (reconstructed spectrogram, stft_spec)."""
    B = waveform.shape[0]
    spec = mel_spectrogram_jax(waveform[:, 0, :])               # (B, 128, F)
    pr = spectrogram_padding_jax(spec)
    stft_spec = (pr["input_values"] - spec_mean) / spec_std     # (B, 128, W)
    bsz, height, width = stft_spec.shape

    # Patch embedding (Conv2d(1, E, 16, 16) == patchify + matmul), h-major,
    # matching `.flatten(2).transpose(1, 2)` of the reference.
    hp, wp = height // 16, width // 16
    patches = stft_spec.reshape(B, hp, 16, wp, 16).transpose(0, 1, 3, 2, 4)
    patches = patches.reshape(B, hp * wp, 256)
    hidden = pallas_linear(patches, params["patch_w"], params["patch_b"])
    S, E = hidden.shape[1], hidden.shape[2]
    pe = sinusoidal_pe(S, E)
    hidden = hidden + pe[None]

    # random masking (torch.randperm -> jax.random.permutation)
    token_order = jax.random.permutation(mask_key, S)
    keep = int(S - S * masked_ratio)
    shuffled = hidden[:, token_order, :][:, :keep, :]
    pmask = pr["padding_masks"]                                  # (B, S)
    masked_pmask = pmask[:, token_order][:, :keep]

    # pad the token dim ONCE and carry through the encoder (pad keys masked)
    keep_p = _round_up(keep, 16)
    if keep_p > keep:
        h = jnp.pad(shuffled, ((0, 0), (0, keep_p - keep), (0, 0)))
        enc_mask = jnp.pad(masked_pmask, ((0, 0), (0, keep_p - keep)))
    else:
        h, enc_mask = shuffled, masked_pmask
    for bp in params["encoder"]:
        h = transformer_block(h, enc_mask, bp, num_heads)
    h = h[:, :keep, :]

    # add mask tokens and unshuffle
    mask_tok = jnp.broadcast_to(params["mask_token"].astype(jnp.float32),
                                (B, S - keep, E))
    tokens = jnp.concatenate([h, mask_tok], axis=1)
    tokens = tokens[:, jnp.argsort(token_order), :]
    tokens = tokens + pe[None]

    # decoder (S is already a 16-multiple from the spectrogram padding here)
    S_p = _round_up(S, 16)
    if S_p > S:
        d = jnp.pad(tokens, ((0, 0), (0, S_p - S), (0, 0)))
        dec_mask = jnp.pad(pmask, ((0, 0), (0, S_p - S)))
    else:
        d, dec_mask = tokens, pmask
    for bp in params["decoder"]:
        d = transformer_block(d, dec_mask, bp, num_heads)
    d = d[:, :S, :]

    # embeddings -> patch values, reshape exactly like the reference, mask pads
    spect = pallas_linear(d, params["out_w"], params["out_b"])   # (B, S, 256)
    spect = spect.reshape(B, height, width)
    spect = jnp.where(pr["full_padding_masks"] == 0, 0.0, spect)
    return spect, stft_spec


# ================================ main =======================================
if __name__ == "__main__":
    key = jax.random.PRNGKey(0)
    k_param, k_wav, k_mask = jax.random.split(key, 3)

    B, T = 2, 5800            # -> 29 mel frames -> padded width 32 -> 16 tokens
    waveform = 0.1 * jax.random.normal(k_wav, (B, 1, T), dtype=jnp.float32)

    params = prepare_params(init_params(k_param))   # bf16 weights, scale folded
    fwd = jax.jit(wave_mae_forward)
    spectrograms, stft_spec = fwd(params, waveform, k_mask)
    jax.block_until_ready((spectrograms, stft_spec))

    assert spectrograms.shape == (B, NUM_MELS, 32)
    assert stft_spec.shape == (B, NUM_MELS, 32)
    assert bool(jnp.all(jnp.isfinite(spectrograms)))
    print("KERNEL_OK")
</pallas_src>

<mosaic_0001>
module attributes {stable_mosaic.version = 11 : i64} {
  func.func @_linear_kernel(%arg0: i32, %arg1: i32, %arg2: memref<32x256xf32, #tpu.memory_space<vmem>>, %arg3: memref<256x128xbf16, #tpu.memory_space<vmem>>, %arg4: memref<1x128xf32, #tpu.memory_space<vmem>>, %arg5: memref<32x128xf32, #tpu.memory_space<vmem>>) attributes {dimension_semantics = [#tpu.dimension_semantics<parallel>, #tpu.dimension_semantics<parallel>], iteration_bounds = array<i64: 1, 1>, scalar_prefetch = 0 : i64, scratch_operands = 0 : i64, tpu.core_type = #tpu.core_type<tc>, window_params = [{transform_indices = @transform_0, window_bounds = array<i64: 32, 256>}, {transform_indices = @transform_1, window_bounds = array<i64: 256, 128>}, {transform_indices = @transform_2, window_bounds = array<i64: 1, 128>}, {transform_indices = @transform_3, window_bounds = array<i64: 32, 128>}]} {
    %c0 = arith.constant 0 : index
    %c0_0 = arith.constant 0 : index
    %0 = vector.load %arg2[%c0, %c0_0] : memref<32x256xf32, #tpu.memory_space<vmem>>, vector<32x256xf32>
    %1 = arith.truncf %0 : vector<32x256xf32> to vector<32x256xbf16>
    %c0_1 = arith.constant 0 : index
    %c0_2 = arith.constant 0 : index
    %2 = vector.load %arg3[%c0_1, %c0_2] : memref<256x128xbf16, #tpu.memory_space<vmem>>, vector<256x128xbf16>
    %cst = arith.constant dense<0.000000e+00> : vector<32x128xf32>
    %3 = tpu.matmul %1, %2, %cst {dimension_numbers = #tpu.dot_dimension_numbers<[1], [0], [0], [1], [0, 0, 1, 1], [], []>} : vector<32x256xbf16>, vector<256x128xbf16>, vector<32x128xf32> -> vector<32x128xf32>
    %c0_3 = arith.constant 0 : index
    %c0_4 = arith.constant 0 : index
    %4 = vector.load %arg4[%c0_3, %c0_4] : memref<1x128xf32, #tpu.memory_space<vmem>>, vector<1x128xf32>
    %5 = vector.broadcast %4 : vector<1x128xf32> to vector<32x128xf32>
    %6 = arith.addf %3, %5 : vector<32x128xf32>
    %c0_5 = arith.constant 0 : index
    %c0_6 = arith.constant 0 : index
    %7 = vector.load %arg5[%c0_5, %c0_6] : memref<32x128xf32, #tpu.memory_space<vmem>>, vector<32x128xf32>
    tpu.vector_store %arg5[%c0_5, %c0_6], %6 {strides = array<i32>} : memref<32x128xf32, #tpu.memory_space<vmem>>, vector<32x128xf32>,
    return
  }
  func.func @transform_0(%arg0: i32, %arg1: i32) -> (i32, i32) {
    %c0_i32 = arith.constant 0 : i32
    %c0_i32_0 = arith.constant 0 : i32
    return %arg0, %c0_i32 : i32, i32
  }
  func.func @transform_1(%arg0: i32, %arg1: i32) -> (i32, i32) {
    %c0_i32 = arith.constant 0 : i32
    %c0_i32_0 = arith.constant 0 : i32
    return %c0_i32, %arg1 : i32, i32
  }
  func.func @transform_2(%arg0: i32, %arg1: i32) -> (i32, i32) {
    %c0_i32 = arith.constant 0 : i32
    %c0_i32_0 = arith.constant 0 : i32
    return %c0_i32, %arg1 : i32, i32
  }
  func.func @transform_3(%arg0: i32, %arg1: i32) -> (i32, i32) {
    %c0_i32 = arith.constant 0 : i32
    return %arg0, %arg1 : i32, i32
  }
}

module attributes {stable_mosaic.version = 11 : i64} {
  func.func @_linear_kernel(%arg0: i32, %arg1: i32, %arg2: memref<32x128xf32, #tpu.memory_space<vmem>>, %arg3: memref<1x128xf32, #tpu.memory_space<vmem>>, %arg4: memref<1x128xf32, #tpu.memory_space<vmem>>, %arg5: memref<128x128xbf16, #tpu.memory_space<vmem>>, %arg6: memref<1x128xf32, #tpu.memory_space<vmem>>, %arg7: memref<32x128xbf16, #tpu.memory_space<vmem>>) attributes {dimension_semantics = [#tpu.dimension_semantics<parallel>, #tpu.dimension_semantics<parallel>], iteration_bounds = array<i64: 1, 3>, scalar_prefetch = 0 : i64, scratch_operands = 0 : i64, tpu.core_type = #tpu.core_type<tc>, window_params = [{transform_indices = @transform_0, window_bounds = array<i64: 32, 128>}, {pipeline_mode = #tpu.pipeline_mode<synchronous>, transform_indices = @transform_1, window_bounds = array<i64: 1, 128>}, {pipeline_mode = #tpu.pipeline_mode<synchronous>, transform_indices = @transform_2, window_bounds = array<i64: 1, 128>}, {transform_indices = @transform_3, window_bounds = array<i64: 128, 128>}, {transform_indices = @transform_4, window_bounds = array<i64: 1, 128>}, {transform_indices = @transform_5, window_bounds = array<i64: 32, 128>}]} {
    %c0 = arith.constant 0 : index
    %c0_0 = arith.constant 0 : index
    %0 = vector.load %arg2[%c0, %c0_0] : memref<32x128xf32, #tpu.memory_space<vmem>>, vector<32x128xf32>
    %cst = arith.constant dense<0.000000e+00> : vector<32xf32>
    %1 = vector.multi_reduction <add>, %0, %cst [1] : vector<32x128xf32> to vector<32xf32>
    %2 = vector.shape_cast %1 : vector<32xf32> to vector<32x1xf32>
    %cst_1 = arith.constant 1.280000e+02 : f32
    %3 = vector.broadcast %cst_1 : f32 to vector<32x1xf32>
    %4 = arith.divf %2, %3 : vector<32x1xf32>
    %5 = vector.broadcast %4 : vector<32x1xf32> to vector<32x128xf32>
    %6 = arith.subf %0, %5 : vector<32x128xf32>
    %7 = arith.mulf %6, %6 : vector<32x128xf32>
    %cst_2 = arith.constant dense<0.000000e+00> : vector<32xf32>
    %8 = vector.multi_reduction <add>, %7, %cst_2 [1] : vector<32x128xf32> to vector<32xf32>
    %9 = vector.shape_cast %8 : vector<32xf32> to vector<32x1xf32>
    %cst_3 = arith.constant 1.280000e+02 : f32
    %10 = vector.broadcast %cst_3 : f32 to vector<32x1xf32>
    %11 = arith.divf %9, %10 : vector<32x1xf32>
    %12 = vector.broadcast %4 : vector<32x1xf32> to vector<32x128xf32>
    %13 = arith.subf %0, %12 : vector<32x128xf32>
    %cst_4 = arith.constant 9.99999974E-6 : f32
    %14 = vector.broadcast %cst_4 : f32 to vector<32x1xf32>
    %15 = arith.addf %11, %14 : vector<32x1xf32>
    %16 = math.rsqrt %15 : vector<32x1xf32>
    %17 = vector.broadcast %16 : vector<32x1xf32> to vector<32x128xf32>
    %18 = arith.mulf %13, %17 : vector<32x128xf32>
    %c0_5 = arith.constant 0 : index
    %c0_6 = arith.constant 0 : index
    %19 = vector.load %arg3[%c0_5, %c0_6] : memref<1x128xf32, #tpu.memory_space<vmem>>, vector<1x128xf32>
    %20 = vector.broadcast %19 : vector<1x128xf32> to vector<32x128xf32>
    %21 = arith.mulf %18, %20 : vector<32x128xf32>
    %c0_7 = arith.constant 0 : index
    %c0_8 = arith.constant 0 : index
    %22 = vector.load %arg4[%c0_7, %c0_8] : memref<1x128xf32, #tpu.memory_space<vmem>>, vector<1x128xf32>
    %23 = vector.broadcast %22 : vector<1x128xf32> to vector<32x128xf32>
    %24 = arith.addf %21, %23 : vector<32x128xf32>
    %25 = arith.truncf %24 : vector<32x128xf32> to vector<32x128xbf16>
    %c0_9 = arith.constant 0 : index
    %c0_10 = arith.constant 0 : index
    %26 = vector.load %arg5[%c0_9, %c0_10] : memref<128x128xbf16, #tpu.memory_space<vmem>>, vector<128x128xbf16>
    %cst_11 = arith.constant dense<0.000000e+00> : vector<32x128xf32>
    %27 = tpu.matmul %25, %26, %cst_11 {dimension_numbers = #tpu.dot_dimension_numbers<[1], [0], [0], [1], [0, 0, 1, 1], [], []>} : vector<32x128xbf16>, vector<128x128xbf16>, vector<32x128xf32> -> vector<32x128xf32>
    %c0_12 = arith.constant 0 : index
    %c0_13 = arith.constant 0 : index
    %28 = vector.load %arg6[%c0_12, %c0_13] : memref<1x128xf32, #tpu.memory_space<vmem>>, vector<1x128xf32>
    %29 = vector.broadcast %28 : vector<1x128xf32> to vector<32x128xf32>
    %30 = arith.addf %27, %29 : vector<32x128xf32>
    %31 = arith.truncf %30 : vector<32x128xf32> to vector<32x128xbf16>
    %c0_14 = arith.constant 0 : index
    %c0_15 = arith.constant 0 : index
    %32 = vector.load %arg7[%c0_14, %c0_15] : memref<32x128xbf16, #tpu.memory_space<vmem>>, vector<32x128xbf16>
    tpu.vector_store %arg7[%c0_14, %c0_15], %31 {strides = array<i32>} : memref<32x128xbf16, #tpu.memory_space<vmem>>, vector<32x128xbf16>,
    return
  }
  func.func @transform_0(%arg0: i32, %arg1: i32) -> (i32, i32) {
    %c0_i32 = arith.constant 0 : i32
    %c0_i32_0 = arith.constant 0 : i32
    return %arg0, %c0_i32 : i32, i32
  }
  func.func @transform_1(%arg0: i32, %arg1: i32) -> (i32, i32) {
    %c0_i32 = arith.constant 0 : i32
    %c0_i32_0 = arith.constant 0 : i32
    %c0_i32_1 = arith.constant 0 : i32
    return %c0_i32, %c0_i32_0 : i32, i32
  }
  func.func @transform_2(%arg0: i32, %arg1: i32) -> (i32, i32) {
    %c0_i32 = arith.constant 0 : i32
    %c0_i32_0 = arith.constant 0 : i32
    %c0_i32_1 = arith.constant 0 : i32
    return %c0_i32, %c0_i32_0 : i32, i32
  }
  func.func @transform_3(%arg0: i32, %arg1: i32) -> (i32, i32) {
    %c0_i32 = arith.constant 0 : i32
    %c0_i32_0 = arith.constant 0 : i32
    return %c0_i32, %arg1 : i32, i32
  }
  func.func @transform_4(%arg0: i32, %arg1: i32) -> (i32, i32) {
    %c0_i32 = arith.constant 0 : i32
    %c0_i32_0 = arith.constant 0 : i32
    return %c0_i32, %arg1 : i32, i32
  }
  func.func @transform_5(%arg0: i32, %arg1: i32) -> (i32, i32) {
    %c0_i32 = arith.constant 0 : i32
    return %arg0, %arg1 : i32, i32
  }
}

module attributes {stable_mosaic.version = 11 : i64} {
  func.func @_attn_kernel(%arg0: i32, %arg1: i32, %arg2: memref<1x1x16x32xbf16, #tpu.memory_space<vmem>>, %arg3: memref<1x1x16x32xbf16, #tpu.memory_space<vmem>>, %arg4: memref<1x1x16x32xbf16, #tpu.memory_space<vmem>>, %arg5: memref<1x1x16xf32, #tpu.memory_space<vmem>>, %arg6: memref<1x1x16x32xbf16, #tpu.memory_space<vmem>>) attributes {dimension_semantics = [#tpu.dimension_semantics<parallel>, #tpu.dimension_semantics<parallel>], iteration_bounds = array<i64: 2, 4>, scalar_prefetch = 0 : i64, scratch_operands = 0 : i64, tpu.core_type = #tpu.core_type<tc>, window_params = [{transform_indices = @transform_0, window_bounds = array<i64: 1, 1, 16, 32>}, {transform_indices = @transform_1, window_bounds = array<i64: 1, 1, 16, 32>}, {transform_indices = @transform_2, window_bounds = array<i64: 1, 1, 16, 32>}, {transform_indices = @transform_3, window_bounds = array<i64: 1, 1, 16>}, {transform_indices = @transform_4, window_bounds = array<i64: 1, 1, 16, 32>}]} {
    %c0 = arith.constant 0 : index
    %c0_0 = arith.constant 0 : index
    %c0_1 = arith.constant 0 : index
    %c0_2 = arith.constant 0 : index
    %0 = vector.load %arg2[%c0, %c0_0, %c0_1, %c0_2] : memref<1x1x16x32xbf16, #tpu.memory_space<vmem>>, vector<1x1x16x32xbf16>
    %1 = vector.shape_cast %0 : vector<1x1x16x32xbf16> to vector<16x32xbf16>
    %c0_3 = arith.constant 0 : index
    %c0_4 = arith.constant 0 : index
    %c0_5 = arith.constant 0 : index
    %c0_6 = arith.constant 0 : index
    %2 = vector.load %arg3[%c0_3, %c0_4, %c0_5, %c0_6] : memref<1x1x16x32xbf16, #tpu.memory_space<vmem>>, vector<1x1x16x32xbf16>
    %3 = vector.shape_cast %2 : vector<1x1x16x32xbf16> to vector<16x32xbf16>
    %c0_7 = arith.constant 0 : index
    %c0_8 = arith.constant 0 : index
    %c0_9 = arith.constant 0 : index
    %c0_10 = arith.constant 0 : index
    %4 = vector.load %arg4[%c0_7, %c0_8, %c0_9, %c0_10] : memref<1x1x16x32xbf16, #tpu.memory_space<vmem>>, vector<1x1x16x32xbf16>
    %5 = vector.shape_cast %4 : vector<1x1x16x32xbf16> to vector<16x32xbf16>
    %cst = arith.constant dense<0.000000e+00> : vector<16x16xf32>
    %6 = tpu.matmul %1, %3, %cst {dimension_numbers = #tpu.dot_dimension_numbers<[1], [1], [0], [0], [0, 0, 1, 0], [], []>} : vector<16x32xbf16>, vector<16x32xbf16>, vector<16x16xf32> -> vector<16x16xf32>
    %c0_11 = arith.constant 0 : index
    %c0_12 = arith.constant 0 : index
    %c0_13 = arith.constant 0 : index
    %7 = vector.load %arg5[%c0_11, %c0_12, %c0_13] : memref<1x1x16xf32, #tpu.memory_space<vmem>>, vector<1x1x16xf32>
    %8 = vector.shape_cast %7 : vector<1x1x16xf32> to vector<1x16xf32>
    %9 = vector.broadcast %8 : vector<1x16xf32> to vector<16x16xf32>
    %10 = arith.addf %6, %9 : vector<16x16xf32>
    %cst_14 = arith.constant dense<0xFF800000> : vector<16xf32>
    %11 = vector.multi_reduction <maximumf>, %10, %cst_14 [1] : vector<16x16xf32> to vector<16xf32>
    %12 = vector.shape_cast %11 : vector<16xf32> to vector<16x1xf32>
    %13 = vector.broadcast %12 : vector<16x1xf32> to vector<16x16xf32>
    %14 = arith.subf %10, %13 : vector<16x16xf32>
    %15 = math.exp %14 : vector<16x16xf32>
    %cst_15 = arith.constant dense<0.000000e+00> : vector<16xf32>
    %16 = vector.multi_reduction <add>, %15, %cst_15 [1] : vector<16x16xf32> to vector<16xf32>
    %17 = vector.shape_cast %16 : vector<16xf32> to vector<16x1xf32>
    %18 = tpu.reciprocal %17 {approx = true} : vector<16x1xf32> -> vector<16x1xf32>
    %19 = vector.broadcast %18 : vector<16x1xf32> to vector<16x16xf32>
    %20 = arith.mulf %15, %19 : vector<16x16xf32>
    %21 = arith.truncf %20 : vector<16x16xf32> to vector<16x16xbf16>
    %cst_16 = arith.constant dense<0.000000e+00> : vector<16x32xf32>
    %22 = tpu.matmul %21, %5, %cst_16 {dimension_numbers = #tpu.dot_dimension_numbers<[1], [0], [0], [1], [0, 0, 1, 1], [], []>} : vector<16x16xbf16>, vector<16x32xbf16>, vector<16x32xf32> -> vector<16x32xf32>
    %23 = arith.truncf %22 : vector<16x32xf32> to vector<16x32xbf16>
    %c0_17 = arith.constant 0 : index
    %c0_18 = arith.constant 0 : index
    %c0_19 = arith.constant 0 : index
    %c0_20 = arith.constant 0 : index
    %24 = vector.load %arg6[%c0_17, %c0_18, %c0_19, %c0_20] : memref<1x1x16x32xbf16, #tpu.memory_space<vmem>>, vector<1x1x16x32xbf16>
    %25 = vector.shape_cast %24 : vector<1x1x16x32xbf16> to vector<16x32xbf16>
    %26 = vector.shape_cast %23 : vector<16x32xbf16> to vector<1x1x16x32xbf16>
    tpu.vector_store %arg6[%c0_17, %c0_18, %c0_19, %c0_20], %26 {strides = array<i32>} : memref<1x1x16x32xbf16, #tpu.memory_space<vmem>>, vector<1x1x16x32xbf16>,
    return
  }
  func.func @transform_0(%arg0: i32, %arg1: i32) -> (i32, i32, i32, i32) {
    %c0_i32 = arith.constant 0 : i32
    %c0_i32_0 = arith.constant 0 : i32
    %c0_i32_1 = arith.constant 0 : i32
    return %arg0, %arg1, %c0_i32, %c0_i32_0 : i32, i32, i32, i32
  }
  func.func @transform_1(%arg0: i32, %arg1: i32) -> (i32, i32, i32, i32) {
    %c0_i32 = arith.constant 0 : i32
    %c0_i32_0 = arith.constant 0 : i32
    %c0_i32_1 = arith.constant 0 : i32
    return %arg0, %arg1, %c0_i32, %c0_i32_0 : i32, i32, i32, i32
  }
  func.func @transform_2(%arg0: i32, %arg1: i32) -> (i32, i32, i32, i32) {
    %c0_i32 = arith.constant 0 : i32
    %c0_i32_0 = arith.constant 0 : i32
    %c0_i32_1 = arith.constant 0 : i32
    return %arg0, %arg1, %c0_i32, %c0_i32_0 : i32, i32, i32, i32
  }
  func.func @transform_3(%arg0: i32, %arg1: i32) -> (i32, i32, i32) {
    %c0_i32 = arith.constant 0 : i32
    %c0_i32_0 = arith.constant 0 : i32
    %c0_i32_1 = arith.constant 0 : i32
    return %arg0, %c0_i32, %c0_i32_0 : i32, i32, i32
  }
  func.func @transform_4(%arg0: i32, %arg1: i32) -> (i32, i32, i32, i32) {
    %c0_i32 = arith.constant 0 : i32
    %c0_i32_0 = arith.constant 0 : i32
    %c0_i32_1 = arith.constant 0 : i32
    return %arg0, %arg1, %c0_i32, %c0_i32_0 : i32, i32, i32, i32
  }
}

module attributes {stable_mosaic.version = 11 : i64} {
  func.func @_linear_kernel(%arg0: i32, %arg1: i32, %arg2: memref<32x128xf32, #tpu.memory_space<vmem>>, %arg3: memref<1x128xf32, #tpu.memory_space<vmem>>, %arg4: memref<1x128xf32, #tpu.memory_space<vmem>>, %arg5: memref<128x128xbf16, #tpu.memory_space<vmem>>, %arg6: memref<1x128xf32, #tpu.memory_space<vmem>>, %arg7: memref<32x128xbf16, #tpu.memory_space<vmem>>) attributes {dimension_semantics = [#tpu.dimension_semantics<parallel>, #tpu.dimension_semantics<parallel>], iteration_bounds = array<i64: 1, 3>, scalar_prefetch = 0 : i64, scratch_operands = 0 : i64, tpu.core_type = #tpu.core_type<tc>, window_params = [{transform_indices = @transform_0, window_bounds = array<i64: 32, 128>}, {pipeline_mode = #tpu.pipeline_mode<synchronous>, transform_indices = @transform_1, window_bounds = array<i64: 1, 128>}, {pipeline_mode = #tpu.pipeline_mode<synchronous>, transform_indices = @transform_2, window_bounds = array<i64: 1, 128>}, {transform_indices = @transform_3, window_bounds = array<i64: 128, 128>}, {transform_indices = @transform_4, window_bounds = array<i64: 1, 128>}, {transform_indices = @transform_5, window_bounds = array<i64: 32, 128>}]} {
    %c0 = arith.constant 0 : index
    %c0_0 = arith.constant 0 : index
    %0 = vector.load %arg2[%c0, %c0_0] : memref<32x128xf32, #tpu.memory_space<vmem>>, vector<32x128xf32>
    %cst = arith.constant dense<0.000000e+00> : vector<32xf32>
    %1 = vector.multi_reduction <add>, %0, %cst [1] : vector<32x128xf32> to vector<32xf32>
    %2 = vector.shape_cast %1 : vector<32xf32> to vector<32x1xf32>
    %cst_1 = arith.constant 1.280000e+02 : f32
    %3 = vector.broadcast %cst_1 : f32 to vector<32x1xf32>
    %4 = arith.divf %2, %3 : vector<32x1xf32>
    %5 = vector.broadcast %4 : vector<32x1xf32> to vector<32x128xf32>
    %6 = arith.subf %0, %5 : vector<32x128xf32>
    %7 = arith.mulf %6, %6 : vector<32x128xf32>
    %cst_2 = arith.constant dense<0.000000e+00> : vector<32xf32>
    %8 = vector.multi_reduction <add>, %7, %cst_2 [1] : vector<32x128xf32> to vector<32xf32>
    %9 = vector.shape_cast %8 : vector<32xf32> to vector<32x1xf32>
    %cst_3 = arith.constant 1.280000e+02 : f32
    %10 = vector.broadcast %cst_3 : f32 to vector<32x1xf32>
    %11 = arith.divf %9, %10 : vector<32x1xf32>
    %12 = vector.broadcast %4 : vector<32x1xf32> to vector<32x128xf32>
    %13 = arith.subf %0, %12 : vector<32x128xf32>
    %cst_4 = arith.constant 9.99999974E-6 : f32
    %14 = vector.broadcast %cst_4 : f32 to vector<32x1xf32>
    %15 = arith.addf %11, %14 : vector<32x1xf32>
    %16 = math.rsqrt %15 : vector<32x1xf32>
    %17 = vector.broadcast %16 : vector<32x1xf32> to vector<32x128xf32>
    %18 = arith.mulf %13, %17 : vector<32x128xf32>
    %c0_5 = arith.constant 0 : index
    %c0_6 = arith.constant 0 : index
    %19 = vector.load %arg3[%c0_5, %c0_6] : memref<1x128xf32, #tpu.memory_space<vmem>>, vector<1x128xf32>
    %20 = vector.broadcast %19 : vector<1x128xf32> to vector<32x128xf32>
    %21 = arith.mulf %18, %20 : vector<32x128xf32>
    %c0_7 = arith.constant 0 : index
    %c0_8 = arith.constant 0 : index
    %22 = vector.load %arg4[%c0_7, %c0_8] : memref<1x128xf32, #tpu.memory_space<vmem>>, vector<1x128xf32>
    %23 = vector.broadcast %22 : vector<1x128xf32> to vector<32x128xf32>
    %24 = arith.addf %21, %23 : vector<32x128xf32>
    %25 = arith.truncf %24 : vector<32x128xf32> to vector<32x128xbf16>
    %c0_9 = arith.constant 0 : index
    %c0_10 = arith.constant 0 : index
    %26 = vector.load %arg5[%c0_9, %c0_10] : memref<128x128xbf16, #tpu.memory_space<vmem>>, vector<128x128xbf16>
    %cst_11 = arith.constant dense<0.000000e+00> : vector<32x128xf32>
    %27 = tpu.matmul %25, %26, %cst_11 {dimension_numbers = #tpu.dot_dimension_numbers<[1], [0], [0], [1], [0, 0, 1, 1], [], []>} : vector<32x128xbf16>, vector<128x128xbf16>, vector<32x128xf32> -> vector<32x128xf32>
    %c0_12 = arith.constant 0 : index
    %c0_13 = arith.constant 0 : index
    %28 = vector.load %arg6[%c0_12, %c0_13] : memref<1x128xf32, #tpu.memory_space<vmem>>, vector<1x128xf32>
    %29 = vector.broadcast %28 : vector<1x128xf32> to vector<32x128xf32>
    %30 = arith.addf %27, %29 : vector<32x128xf32>
    %31 = arith.truncf %30 : vector<32x128xf32> to vector<32x128xbf16>
    %c0_14 = arith.constant 0 : index
    %c0_15 = arith.constant 0 : index
    %32 = vector.load %arg7[%c0_14, %c0_15] : memref<32x128xbf16, #tpu.memory_space<vmem>>, vector<32x128xbf16>
    tpu.vector_store %arg7[%c0_14, %c0_15], %31 {strides = array<i32>} : memref<32x128xbf16, #tpu.memory_space<vmem>>, vector<32x128xbf16>,
    return
  }
  func.func @transform_0(%arg0: i32, %arg1: i32) -> (i32, i32) {
    %c0_i32 = arith.constant 0 : i32
    %c0_i32_0 = arith.constant 0 : i32
    return %arg0, %c0_i32 : i32, i32
  }
  func.func @transform_1(%arg0: i32, %arg1: i32) -> (i32, i32) {
    %c0_i32 = arith.constant 0 : i32
    %c0_i32_0 = arith.constant 0 : i32
    %c0_i32_1 = arith.constant 0 : i32
    return %c0_i32, %c0_i32_0 : i32, i32
  }
  func.func @transform_2(%arg0: i32, %arg1: i32) -> (i32, i32) {
    %c0_i32 = arith.constant 0 : i32
    %c0_i32_0 = arith.constant 0 : i32
    %c0_i32_1 = arith.constant 0 : i32
    return %c0_i32, %c0_i32_0 : i32, i32
  }
  func.func @transform_3(%arg0: i32, %arg1: i32) -> (i32, i32) {
    %c0_i32 = arith.constant 0 : i32
    %c0_i32_0 = arith.constant 0 : i32
    return %c0_i32, %arg1 : i32, i32
  }
  func.func @transform_4(%arg0: i32, %arg1: i32) -> (i32, i32) {
    %c0_i32 = arith.constant 0 : i32
    %c0_i32_0 = arith.constant 0 : i32
    return %c0_i32, %arg1 : i32, i32
  }
  func.func @transform_5(%arg0: i32, %arg1: i32) -> (i32, i32) {
    %c0_i32 = arith.constant 0 : i32
    return %arg0, %arg1 : i32, i32
  }
}

module attributes {stable_mosaic.version = 11 : i64} {
  func.func @_linear_kernel(%arg0: i32, %arg1: i32, %arg2: memref<32x128xbf16, #tpu.memory_space<vmem>>, %arg3: memref<128x128xbf16, #tpu.memory_space<vmem>>, %arg4: memref<1x128xf32, #tpu.memory_space<vmem>>, %arg5: memref<32x128xf32, #tpu.memory_space<vmem>>, %arg6: memref<32x128xf32, #tpu.memory_space<vmem>>) attributes {dimension_semantics = [#tpu.dimension_semantics<parallel>, #tpu.dimension_semantics<parallel>], iteration_bounds = array<i64: 1, 1>, scalar_prefetch = 0 : i64, scratch_operands = 0 : i64, tpu.core_type = #tpu.core_type<tc>, window_params = [{transform_indices = @transform_0, window_bounds = array<i64: 32, 128>}, {transform_indices = @transform_1, window_bounds = array<i64: 128, 128>}, {transform_indices = @transform_2, window_bounds = array<i64: 1, 128>}, {transform_indices = @transform_3, window_bounds = array<i64: 32, 128>}, {transform_indices = @transform_4, window_bounds = array<i64: 32, 128>}]} {
    %c0 = arith.constant 0 : index
    %c0_0 = arith.constant 0 : index
    %0 = vector.load %arg2[%c0, %c0_0] : memref<32x128xbf16, #tpu.memory_space<vmem>>, vector<32x128xbf16>
    %c0_1 = arith.constant 0 : index
    %c0_2 = arith.constant 0 : index
    %1 = vector.load %arg3[%c0_1, %c0_2] : memref<128x128xbf16, #tpu.memory_space<vmem>>, vector<128x128xbf16>
    %cst = arith.constant dense<0.000000e+00> : vector<32x128xf32>
    %2 = tpu.matmul %0, %1, %cst {dimension_numbers = #tpu.dot_dimension_numbers<[1], [0], [0], [1], [0, 0, 1, 1], [], []>} : vector<32x128xbf16>, vector<128x128xbf16>, vector<32x128xf32> -> vector<32x128xf32>
    %c0_3 = arith.constant 0 : index
    %c0_4 = arith.constant 0 : index
    %3 = vector.load %arg4[%c0_3, %c0_4] : memref<1x128xf32, #tpu.memory_space<vmem>>, vector<1x128xf32>
    %4 = vector.broadcast %3 : vector<1x128xf32> to vector<32x128xf32>
    %5 = arith.addf %2, %4 : vector<32x128xf32>
    %c0_5 = arith.constant 0 : index
    %c0_6 = arith.constant 0 : index
    %6 = vector.load %arg5[%c0_5, %c0_6] : memref<32x128xf32, #tpu.memory_space<vmem>>, vector<32x128xf32>
    %7 = arith.addf %5, %6 : vector<32x128xf32>
    %c0_7 = arith.constant 0 : index
    %c0_8 = arith.constant 0 : index
    %8 = vector.load %arg6[%c0_7, %c0_8] : memref<32x128xf32, #tpu.memory_space<vmem>>, vector<32x128xf32>
    tpu.vector_store %arg6[%c0_7, %c0_8], %7 {strides = array<i32>} : memref<32x128xf32, #tpu.memory_space<vmem>>, vector<32x128xf32>,
    return
  }
  func.func @transform_0(%arg0: i32, %arg1: i32) -> (i32, i32) {
    %c0_i32 = arith.constant 0 : i32
    %c0_i32_0 = arith.constant 0 : i32
    return %arg0, %c0_i32 : i32, i32
  }
  func.func @transform_1(%arg0: i32, %arg1: i32) -> (i32, i32) {
    %c0_i32 = arith.constant 0 : i32
    %c0_i32_0 = arith.constant 0 : i32
    return %c0_i32, %arg1 : i32, i32
  }
  func.func @transform_2(%arg0: i32, %arg1: i32) -> (i32, i32) {
    %c0_i32 = arith.constant 0 : i32
    %c0_i32_0 = arith.constant 0 : i32
    return %c0_i32, %arg1 : i32, i32
  }
  func.func @transform_3(%arg0: i32, %arg1: i32) -> (i32, i32) {
    %c0_i32 = arith.constant 0 : i32
    return %arg0, %arg1 : i32, i32
  }
  func.func @transform_4(%arg0: i32, %arg1: i32) -> (i32, i32) {
    %c0_i32 = arith.constant 0 : i32
    return %arg0, %arg1 : i32, i32
  }
}

module attributes {stable_mosaic.version = 11 : i64} {
  func.func @_linear_kernel(%arg0: i32, %arg1: i32, %arg2: memref<32x512xbf16, #tpu.memory_space<vmem>>, %arg3: memref<512x128xbf16, #tpu.memory_space<vmem>>, %arg4: memref<1x128xf32, #tpu.memory_space<vmem>>, %arg5: memref<32x128xf32, #tpu.memory_space<vmem>>, %arg6: memref<32x128xf32, #tpu.memory_space<vmem>>) attributes {dimension_semantics = [#tpu.dimension_semantics<parallel>, #tpu.dimension_semantics<parallel>], iteration_bounds = array<i64: 1, 1>, scalar_prefetch = 0 : i64, scratch_operands = 0 : i64, tpu.core_type = #tpu.core_type<tc>, window_params = [{transform_indices = @transform_0, window_bounds = array<i64: 32, 512>}, {transform_indices = @transform_1, window_bounds = array<i64: 512, 128>}, {transform_indices = @transform_2, window_bounds = array<i64: 1, 128>}, {transform_indices = @transform_3, window_bounds = array<i64: 32, 128>}, {transform_indices = @transform_4, window_bounds = array<i64: 32, 128>}]} {
    %c0 = arith.constant 0 : index
    %c0_0 = arith.constant 0 : index
    %0 = vector.load %arg2[%c0, %c0_0] : memref<32x512xbf16, #tpu.memory_space<vmem>>, vector<32x512xbf16>
    %c0_1 = arith.constant 0 : index
    %c0_2 = arith.constant 0 : index
    %1 = vector.load %arg3[%c0_1, %c0_2] : memref<512x128xbf16, #tpu.memory_space<vmem>>, vector<512x128xbf16>
    %cst = arith.constant dense<0.000000e+00> : vector<32x128xf32>
    %2 = tpu.matmul %0, %1, %cst {dimension_numbers = #tpu.dot_dimension_numbers<[1], [0], [0], [1], [0, 0, 1, 1], [], []>} : vector<32x512xbf16>, vector<512x128xbf16>, vector<32x128xf32> -> vector<32x128xf32>
    %c0_3 = arith.constant 0 : index
    %c0_4 = arith.constant 0 : index
    %3 = vector.load %arg4[%c0_3, %c0_4] : memref<1x128xf32, #tpu.memory_space<vmem>>, vector<1x128xf32>
    %4 = vector.broadcast %3 : vector<1x128xf32> to vector<32x128xf32>
    %5 = arith.addf %2, %4 : vector<32x128xf32>
    %c0_5 = arith.constant 0 : index
    %c0_6 = arith.constant 0 : index
    %6 = vector.load %arg5[%c0_5, %c0_6] : memref<32x128xf32, #tpu.memory_space<vmem>>, vector<32x128xf32>
    %7 = arith.addf %5, %6 : vector<32x128xf32>
    %c0_7 = arith.constant 0 : index
    %c0_8 = arith.constant 0 : index
    %8 = vector.load %arg6[%c0_7, %c0_8] : memref<32x128xf32, #tpu.memory_space<vmem>>, vector<32x128xf32>
    tpu.vector_store %arg6[%c0_7, %c0_8], %7 {strides = array<i32>} : memref<32x128xf32, #tpu.memory_space<vmem>>, vector<32x128xf32>,
    return
  }
  func.func @transform_0(%arg0: i32, %arg1: i32) -> (i32, i32) {
    %c0_i32 = arith.constant 0 : i32
    %c0_i32_0 = arith.constant 0 : i32
    return %arg0, %c0_i32 : i32, i32
  }
  func.func @transform_1(%arg0: i32, %arg1: i32) -> (i32, i32) {
    %c0_i32 = arith.constant 0 : i32
    %c0_i32_0 = arith.constant 0 : i32
    return %c0_i32, %arg1 : i32, i32
  }
  func.func @transform_2(%arg0: i32, %arg1: i32) -> (i32, i32) {
    %c0_i32 = arith.constant 0 : i32
    %c0_i32_0 = arith.constant 0 : i32
    return %c0_i32, %arg1 : i32, i32
  }
  func.func @transform_3(%arg0: i32, %arg1: i32) -> (i32, i32) {
    %c0_i32 = arith.constant 0 : i32
    return %arg0, %arg1 : i32, i32
  }
  func.func @transform_4(%arg0: i32, %arg1: i32) -> (i32, i32) {
    %c0_i32 = arith.constant 0 : i32
    return %arg0, %arg1 : i32, i32
  }
}

module attributes {stable_mosaic.version = 11 : i64} {
  func.func @_linear_kernel(%arg0: i32, %arg1: i32, %arg2: memref<32x128xf32, #tpu.memory_space<vmem>>, %arg3: memref<1x128xf32, #tpu.memory_space<vmem>>, %arg4: memref<1x128xf32, #tpu.memory_space<vmem>>, %arg5: memref<128x256xbf16, #tpu.memory_space<vmem>>, %arg6: memref<1x256xf32, #tpu.memory_space<vmem>>, %arg7: memref<32x256xbf16, #tpu.memory_space<vmem>>) attributes {dimension_semantics = [#tpu.dimension_semantics<parallel>, #tpu.dimension_semantics<parallel>], iteration_bounds = array<i64: 1, 2>, scalar_prefetch = 0 : i64, scratch_operands = 0 : i64, tpu.core_type = #tpu.core_type<tc>, window_params = [{transform_indices = @transform_0, window_bounds = array<i64: 32, 128>}, {pipeline_mode = #tpu.pipeline_mode<synchronous>, transform_indices = @transform_1, window_bounds = array<i64: 1, 128>}, {pipeline_mode = #tpu.pipeline_mode<synchronous>, transform_indices = @transform_2, window_bounds = array<i64: 1, 128>}, {transform_indices = @transform_3, window_bounds = array<i64: 128, 256>}, {transform_indices = @transform_4, window_bounds = array<i64: 1, 256>}, {transform_indices = @transform_5, window_bounds = array<i64: 32, 256>}]} {
    %c0 = arith.constant 0 : index
    %c0_0 = arith.constant 0 : index
    %0 = vector.load %arg2[%c0, %c0_0] : memref<32x128xf32, #tpu.memory_space<vmem>>, vector<32x128xf32>
    %cst = arith.constant dense<0.000000e+00> : vector<32xf32>
    %1 = vector.multi_reduction <add>, %0, %cst [1] : vector<32x128xf32> to vector<32xf32>
    %2 = vector.shape_cast %1 : vector<32xf32> to vector<32x1xf32>
    %cst_1 = arith.constant 1.280000e+02 : f32
    %3 = vector.broadcast %cst_1 : f32 to vector<32x1xf32>
    %4 = arith.divf %2, %3 : vector<32x1xf32>
    %5 = vector.broadcast %4 : vector<32x1xf32> to vector<32x128xf32>
    %6 = arith.subf %0, %5 : vector<32x128xf32>
    %7 = arith.mulf %6, %6 : vector<32x128xf32>
    %cst_2 = arith.constant dense<0.000000e+00> : vector<32xf32>
    %8 = vector.multi_reduction <add>, %7, %cst_2 [1] : vector<32x128xf32> to vector<32xf32>
    %9 = vector.shape_cast %8 : vector<32xf32> to vector<32x1xf32>
    %cst_3 = arith.constant 1.280000e+02 : f32
    %10 = vector.broadcast %cst_3 : f32 to vector<32x1xf32>
    %11 = arith.divf %9, %10 : vector<32x1xf32>
    %12 = vector.broadcast %4 : vector<32x1xf32> to vector<32x128xf32>
    %13 = arith.subf %0, %12 : vector<32x128xf32>
    %cst_4 = arith.constant 9.99999974E-6 : f32
    %14 = vector.broadcast %cst_4 : f32 to vector<32x1xf32>
    %15 = arith.addf %11, %14 : vector<32x1xf32>
    %16 = math.rsqrt %15 : vector<32x1xf32>
    %17 = vector.broadcast %16 : vector<32x1xf32> to vector<32x128xf32>
    %18 = arith.mulf %13, %17 : vector<32x128xf32>
    %c0_5 = arith.constant 0 : index
    %c0_6 = arith.constant 0 : index
    %19 = vector.load %arg3[%c0_5, %c0_6] : memref<1x128xf32, #tpu.memory_space<vmem>>, vector<1x128xf32>
    %20 = vector.broadcast %19 : vector<1x128xf32> to vector<32x128xf32>
    %21 = arith.mulf %18, %20 : vector<32x128xf32>
    %c0_7 = arith.constant 0 : index
    %c0_8 = arith.constant 0 : index
    %22 = vector.load %arg4[%c0_7, %c0_8] : memref<1x128xf32, #tpu.memory_space<vmem>>, vector<1x128xf32>
    %23 = vector.broadcast %22 : vector<1x128xf32> to vector<32x128xf32>
    %24 = arith.addf %21, %23 : vector<32x128xf32>
    %25 = arith.truncf %24 : vector<32x128xf32> to vector<32x128xbf16>
    %c0_9 = arith.constant 0 : index
    %c0_10 = arith.constant 0 : index
    %26 = vector.load %arg5[%c0_9, %c0_10] : memref<128x256xbf16, #tpu.memory_space<vmem>>, vector<128x256xbf16>
    %cst_11 = arith.constant dense<0.000000e+00> : vector<32x256xf32>
    %27 = tpu.matmul %25, %26, %cst_11 {dimension_numbers = #tpu.dot_dimension_numbers<[1], [0], [0], [1], [0, 0, 1, 1], [], []>} : vector<32x128xbf16>, vector<128x256xbf16>, vector<32x256xf32> -> vector<32x256xf32>
    %c0_12 = arith.constant 0 : index
    %c0_13 = arith.constant 0 : index
    %28 = vector.load %arg6[%c0_12, %c0_13] : memref<1x256xf32, #tpu.memory_space<vmem>>, vector<1x256xf32>
    %29 = vector.broadcast %28 : vector<1x256xf32> to vector<32x256xf32>
    %30 = arith.addf %27, %29 : vector<32x256xf32>
    %31 = arith.mulf %30, %30 : vector<32x256xf32>
    %32 = arith.mulf %30, %31 : vector<32x256xf32>
    %cst_14 = arith.constant 4.471500e-02 : f32
    %33 = vector.broadcast %cst_14 : f32 to vector<32x256xf32>
    %34 = arith.mulf %33, %32 : vector<32x256xf32>
    %35 = arith.addf %30, %34 : vector<32x256xf32>
    %cst_15 = arith.constant 0.797884583 : f32
    %36 = vector.broadcast %cst_15 : f32 to vector<32x256xf32>
    %37 = arith.mulf %36, %35 : vector<32x256xf32>
    %38 = math.tanh %37 : vector<32x256xf32>
    %cst_16 = arith.constant 1.000000e+00 : f32
    %39 = vector.broadcast %cst_16 : f32 to vector<32x256xf32>
    %40 = arith.addf %39, %38 : vector<32x256xf32>
    %cst_17 = arith.constant 5.000000e-01 : f32
    %41 = vector.broadcast %cst_17 : f32 to vector<32x256xf32>
    %42 = arith.mulf %41, %40 : vector<32x256xf32>
    %43 = arith.mulf %30, %42 : vector<32x256xf32>
    %44 = arith.truncf %43 : vector<32x256xf32> to vector<32x256xbf16>
    %c0_18 = arith.constant 0 : index
    %c0_19 = arith.constant 0 : index
    %45 = vector.load %arg7[%c0_18, %c0_19] : memref<32x256xbf16, #tpu.memory_space<vmem>>, vector<32x256xbf16>
    tpu.vector_store %arg7[%c0_18, %c0_19], %44 {strides = array<i32>} : memref<32x256xbf16, #tpu.memory_space<vmem>>, vector<32x256xbf16>,
    return
  }
  func.func @transform_0(%arg0: i32, %arg1: i32) -> (i32, i32) {
    %c0_i32 = arith.constant 0 : i32
    %c0_i32_0 = arith.constant 0 : i32
    return %arg0, %c0_i32 : i32, i32
  }
  func.func @transform_1(%arg0: i32, %arg1: i32) -> (i32, i32) {
    %c0_i32 = arith.constant 0 : i32
    %c0_i32_0 = arith.constant 0 : i32
    %c0_i32_1 = arith.constant 0 : i32
    return %c0_i32, %c0_i32_0 : i32, i32
  }
  func.func @transform_2(%arg0: i32, %arg1: i32) -> (i32, i32) {
    %c0_i32 = arith.constant 0 : i32
    %c0_i32_0 = arith.constant 0 : i32
    %c0_i32_1 = arith.constant 0 : i32
    return %c0_i32, %c0_i32_0 : i32, i32
  }
  func.func @transform_3(%arg0: i32, %arg1: i32) -> (i32, i32) {
    %c0_i32 = arith.constant 0 : i32
    %c0_i32_0 = arith.constant 0 : i32
    return %c0_i32, %arg1 : i32, i32
  }
  func.func @transform_4(%arg0: i32, %arg1: i32) -> (i32, i32) {
    %c0_i32 = arith.constant 0 : i32
    %c0_i32_0 = arith.constant 0 : i32
    return %c0_i32, %arg1 : i32, i32
  }
  func.func @transform_5(%arg0: i32, %arg1: i32) -> (i32, i32) {
    %c0_i32 = arith.constant 0 : i32
    return %arg0, %arg1 : i32, i32
  }
}

module attributes {stable_mosaic.version = 11 : i64} {
  func.func @_linear_kernel(%arg0: i32, %arg1: i32, %arg2: memref<32x128xbf16, #tpu.memory_space<vmem>>, %arg3: memref<128x128xbf16, #tpu.memory_space<vmem>>, %arg4: memref<1x128xf32, #tpu.memory_space<vmem>>, %arg5: memref<32x128xf32, #tpu.memory_space<vmem>>, %arg6: memref<32x128xf32, #tpu.memory_space<vmem>>) attributes {dimension_semantics = [#tpu.dimension_semantics<parallel>, #tpu.dimension_semantics<parallel>], iteration_bounds = array<i64: 1, 1>, scalar_prefetch = 0 : i64, scratch_operands = 0 : i64, tpu.core_type = #tpu.core_type<tc>, window_params = [{transform_indices = @transform_0, window_bounds = array<i64: 32, 128>}, {transform_indices = @transform_1, window_bounds = array<i64: 128, 128>}, {transform_indices = @transform_2, window_bounds = array<i64: 1, 128>}, {transform_indices = @transform_3, window_bounds = array<i64: 32, 128>}, {transform_indices = @transform_4, window_bounds = array<i64: 32, 128>}]} {
    %c0 = arith.constant 0 : index
    %c0_0 = arith.constant 0 : index
    %0 = vector.load %arg2[%c0, %c0_0] : memref<32x128xbf16, #tpu.memory_space<vmem>>, vector<32x128xbf16>
    %c0_1 = arith.constant 0 : index
    %c0_2 = arith.constant 0 : index
    %1 = vector.load %arg3[%c0_1, %c0_2] : memref<128x128xbf16, #tpu.memory_space<vmem>>, vector<128x128xbf16>
    %cst = arith.constant dense<0.000000e+00> : vector<32x128xf32>
    %2 = tpu.matmul %0, %1, %cst {dimension_numbers = #tpu.dot_dimension_numbers<[1], [0], [0], [1], [0, 0, 1, 1], [], []>} : vector<32x128xbf16>, vector<128x128xbf16>, vector<32x128xf32> -> vector<32x128xf32>
    %c0_3 = arith.constant 0 : index
    %c0_4 = arith.constant 0 : index
    %3 = vector.load %arg4[%c0_3, %c0_4] : memref<1x128xf32, #tpu.memory_space<vmem>>, vector<1x128xf32>
    %4 = vector.broadcast %3 : vector<1x128xf32> to vector<32x128xf32>
    %5 = arith.addf %2, %4 : vector<32x128xf32>
    %c0_5 = arith.constant 0 : index
    %c0_6 = arith.constant 0 : index
    %6 = vector.load %arg5[%c0_5, %c0_6] : memref<32x128xf32, #tpu.memory_space<vmem>>, vector<32x128xf32>
    %7 = arith.addf %5, %6 : vector<32x128xf32>
    %c0_7 = arith.constant 0 : index
    %c0_8 = arith.constant 0 : index
    %8 = vector.load %arg6[%c0_7, %c0_8] : memref<32x128xf32, #tpu.memory_space<vmem>>, vector<32x128xf32>
    tpu.vector_store %arg6[%c0_7, %c0_8], %7 {strides = array<i32>} : memref<32x128xf32, #tpu.memory_space<vmem>>, vector<32x128xf32>,
    return
  }
  func.func @transform_0(%arg0: i32, %arg1: i32) -> (i32, i32) {
    %c0_i32 = arith.constant 0 : i32
    %c0_i32_0 = arith.constant 0 : i32
    return %arg0, %c0_i32 : i32, i32
  }
  func.func @transform_1(%arg0: i32, %arg1: i32) -> (i32, i32) {
    %c0_i32 = arith.constant 0 : i32
    %c0_i32_0 = arith.constant 0 : i32
    return %c0_i32, %arg1 : i32, i32
  }
  func.func @transform_2(%arg0: i32, %arg1: i32) -> (i32, i32) {
    %c0_i32 = arith.constant 0 : i32
    %c0_i32_0 = arith.constant 0 : i32
    return %c0_i32, %arg1 : i32, i32
  }
  func.func @transform_3(%arg0: i32, %arg1: i32) -> (i32, i32) {
    %c0_i32 = arith.constant 0 : i32
    return %arg0, %arg1 : i32, i32
  }
  func.func @transform_4(%arg0: i32, %arg1: i32) -> (i32, i32) {
    %c0_i32 = arith.constant 0 : i32
    return %arg0, %arg1 : i32, i32
  }
}

module attributes {stable_mosaic.version = 11 : i64} {
  func.func @_linear_kernel(%arg0: i32, %arg1: i32, %arg2: memref<32x128xf32, #tpu.memory_space<vmem>>, %arg3: memref<1x128xf32, #tpu.memory_space<vmem>>, %arg4: memref<1x128xf32, #tpu.memory_space<vmem>>, %arg5: memref<128x256xbf16, #tpu.memory_space<vmem>>, %arg6: memref<1x256xf32, #tpu.memory_space<vmem>>, %arg7: memref<32x256xbf16, #tpu.memory_space<vmem>>) attributes {dimension_semantics = [#tpu.dimension_semantics<parallel>, #tpu.dimension_semantics<parallel>], iteration_bounds = array<i64: 1, 2>, scalar_prefetch = 0 : i64, scratch_operands = 0 : i64, tpu.core_type = #tpu.core_type<tc>, window_params = [{transform_indices = @transform_0, window_bounds = array<i64: 32, 128>}, {pipeline_mode = #tpu.pipeline_mode<synchronous>, transform_indices = @transform_1, window_bounds = array<i64: 1, 128>}, {pipeline_mode = #tpu.pipeline_mode<synchronous>, transform_indices = @transform_2, window_bounds = array<i64: 1, 128>}, {transform_indices = @transform_3, window_bounds = array<i64: 128, 256>}, {transform_indices = @transform_4, window_bounds = array<i64: 1, 256>}, {transform_indices = @transform_5, window_bounds = array<i64: 32, 256>}]} {
    %c0 = arith.constant 0 : index
    %c0_0 = arith.constant 0 : index
    %0 = vector.load %arg2[%c0, %c0_0] : memref<32x128xf32, #tpu.memory_space<vmem>>, vector<32x128xf32>
    %cst = arith.constant dense<0.000000e+00> : vector<32xf32>
    %1 = vector.multi_reduction <add>, %0, %cst [1] : vector<32x128xf32> to vector<32xf32>
    %2 = vector.shape_cast %1 : vector<32xf32> to vector<32x1xf32>
    %cst_1 = arith.constant 1.280000e+02 : f32
    %3 = vector.broadcast %cst_1 : f32 to vector<32x1xf32>
    %4 = arith.divf %2, %3 : vector<32x1xf32>
    %5 = vector.broadcast %4 : vector<32x1xf32> to vector<32x128xf32>
    %6 = arith.subf %0, %5 : vector<32x128xf32>
    %7 = arith.mulf %6, %6 : vector<32x128xf32>
    %cst_2 = arith.constant dense<0.000000e+00> : vector<32xf32>
    %8 = vector.multi_reduction <add>, %7, %cst_2 [1] : vector<32x128xf32> to vector<32xf32>
    %9 = vector.shape_cast %8 : vector<32xf32> to vector<32x1xf32>
    %cst_3 = arith.constant 1.280000e+02 : f32
    %10 = vector.broadcast %cst_3 : f32 to vector<32x1xf32>
    %11 = arith.divf %9, %10 : vector<32x1xf32>
    %12 = vector.broadcast %4 : vector<32x1xf32> to vector<32x128xf32>
    %13 = arith.subf %0, %12 : vector<32x128xf32>
    %cst_4 = arith.constant 9.99999974E-6 : f32
    %14 = vector.broadcast %cst_4 : f32 to vector<32x1xf32>
    %15 = arith.addf %11, %14 : vector<32x1xf32>
    %16 = math.rsqrt %15 : vector<32x1xf32>
    %17 = vector.broadcast %16 : vector<32x1xf32> to vector<32x128xf32>
    %18 = arith.mulf %13, %17 : vector<32x128xf32>
    %c0_5 = arith.constant 0 : index
    %c0_6 = arith.constant 0 : index
    %19 = vector.load %arg3[%c0_5, %c0_6] : memref<1x128xf32, #tpu.memory_space<vmem>>, vector<1x128xf32>
    %20 = vector.broadcast %19 : vector<1x128xf32> to vector<32x128xf32>
    %21 = arith.mulf %18, %20 : vector<32x128xf32>
    %c0_7 = arith.constant 0 : index
    %c0_8 = arith.constant 0 : index
    %22 = vector.load %arg4[%c0_7, %c0_8] : memref<1x128xf32, #tpu.memory_space<vmem>>, vector<1x128xf32>
    %23 = vector.broadcast %22 : vector<1x128xf32> to vector<32x128xf32>
    %24 = arith.addf %21, %23 : vector<32x128xf32>
    %25 = arith.truncf %24 : vector<32x128xf32> to vector<32x128xbf16>
    %c0_9 = arith.constant 0 : index
    %c0_10 = arith.constant 0 : index
    %26 = vector.load %arg5[%c0_9, %c0_10] : memref<128x256xbf16, #tpu.memory_space<vmem>>, vector<128x256xbf16>
    %cst_11 = arith.constant dense<0.000000e+00> : vector<32x256xf32>
    %27 = tpu.matmul %25, %26, %cst_11 {dimension_numbers = #tpu.dot_dimension_numbers<[1], [0], [0], [1], [0, 0, 1, 1], [], []>} : vector<32x128xbf16>, vector<128x256xbf16>, vector<32x256xf32> -> vector<32x256xf32>
    %c0_12 = arith.constant 0 : index
    %c0_13 = arith.constant 0 : index
    %28 = vector.load %arg6[%c0_12, %c0_13] : memref<1x256xf32, #tpu.memory_space<vmem>>, vector<1x256xf32>
    %29 = vector.broadcast %28 : vector<1x256xf32> to vector<32x256xf32>
    %30 = arith.addf %27, %29 : vector<32x256xf32>
    %31 = arith.mulf %30, %30 : vector<32x256xf32>
    %32 = arith.mulf %30, %31 : vector<32x256xf32>
    %cst_14 = arith.constant 4.471500e-02 : f32
    %33 = vector.broadcast %cst_14 : f32 to vector<32x256xf32>
    %34 = arith.mulf %33, %32 : vector<32x256xf32>
    %35 = arith.addf %30, %34 : vector<32x256xf32>
    %cst_15 = arith.constant 0.797884583 : f32
    %36 = vector.broadcast %cst_15 : f32 to vector<32x256xf32>
    %37 = arith.mulf %36, %35 : vector<32x256xf32>
    %38 = math.tanh %37 : vector<32x256xf32>
    %cst_16 = arith.constant 1.000000e+00 : f32
    %39 = vector.broadcast %cst_16 : f32 to vector<32x256xf32>
    %40 = arith.addf %39, %38 : vector<32x256xf32>
    %cst_17 = arith.constant 5.000000e-01 : f32
    %41 = vector.broadcast %cst_17 : f32 to vector<32x256xf32>
    %42 = arith.mulf %41, %40 : vector<32x256xf32>
    %43 = arith.mulf %30, %42 : vector<32x256xf32>
    %44 = arith.truncf %43 : vector<32x256xf32> to vector<32x256xbf16>
    %c0_18 = arith.constant 0 : index
    %c0_19 = arith.constant 0 : index
    %45 = vector.load %arg7[%c0_18, %c0_19] : memref<32x256xbf16, #tpu.memory_space<vmem>>, vector<32x256xbf16>
    tpu.vector_store %arg7[%c0_18, %c0_19], %44 {strides = array<i32>} : memref<32x256xbf16, #tpu.memory_space<vmem>>, vector<32x256xbf16>,
    return
  }
  func.func @transform_0(%arg0: i32, %arg1: i32) -> (i32, i32) {
    %c0_i32 = arith.constant 0 : i32
    %c0_i32_0 = arith.constant 0 : i32
    return %arg0, %c0_i32 : i32, i32
  }
  func.func @transform_1(%arg0: i32, %arg1: i32) -> (i32, i32) {
    %c0_i32 = arith.constant 0 : i32
    %c0_i32_0 = arith.constant 0 : i32
    %c0_i32_1 = arith.constant 0 : i32
    return %c0_i32, %c0_i32_0 : i32, i32
  }
  func.func @transform_2(%arg0: i32, %arg1: i32) -> (i32, i32) {
    %c0_i32 = arith.constant 0 : i32
    %c0_i32_0 = arith.constant 0 : i32
    %c0_i32_1 = arith.constant 0 : i32
    return %c0_i32, %c0_i32_0 : i32, i32
  }
  func.func @transform_3(%arg0: i32, %arg1: i32) -> (i32, i32) {
    %c0_i32 = arith.constant 0 : i32
    %c0_i32_0 = arith.constant 0 : i32
    return %c0_i32, %arg1 : i32, i32
  }
  func.func @transform_4(%arg0: i32, %arg1: i32) -> (i32, i32) {
    %c0_i32 = arith.constant 0 : i32
    %c0_i32_0 = arith.constant 0 : i32
    return %c0_i32, %arg1 : i32, i32
  }
  func.func @transform_5(%arg0: i32, %arg1: i32) -> (i32, i32) {
    %c0_i32 = arith.constant 0 : i32
    return %arg0, %arg1 : i32, i32
  }
}

module attributes {stable_mosaic.version = 11 : i64} {
  func.func @_linear_kernel(%arg0: i32, %arg1: i32, %arg2: memref<32x128xf32, #tpu.memory_space<vmem>>, %arg3: memref<128x256xbf16, #tpu.memory_space<vmem>>, %arg4: memref<1x256xf32, #tpu.memory_space<vmem>>, %arg5: memref<32x256xf32, #tpu.memory_space<vmem>>) attributes {dimension_semantics = [#tpu.dimension_semantics<parallel>, #tpu.dimension_semantics<parallel>], iteration_bounds = array<i64: 1, 1>, scalar_prefetch = 0 : i64, scratch_operands = 0 : i64, tpu.core_type = #tpu.core_type<tc>, window_params = [{transform_indices = @transform_0, window_bounds = array<i64: 32, 128>}, {transform_indices = @transform_1, window_bounds = array<i64: 128, 256>}, {transform_indices = @transform_2, window_bounds = array<i64: 1, 256>}, {transform_indices = @transform_3, window_bounds = array<i64: 32, 256>}]} {
    %c0 = arith.constant 0 : index
    %c0_0 = arith.constant 0 : index
    %0 = vector.load %arg2[%c0, %c0_0] : memref<32x128xf32, #tpu.memory_space<vmem>>, vector<32x128xf32>
    %1 = arith.truncf %0 : vector<32x128xf32> to vector<32x128xbf16>
    %c0_1 = arith.constant 0 : index
    %c0_2 = arith.constant 0 : index
    %2 = vector.load %arg3[%c0_1, %c0_2] : memref<128x256xbf16, #tpu.memory_space<vmem>>, vector<128x256xbf16>
    %cst = arith.constant dense<0.000000e+00> : vector<32x256xf32>
    %3 = tpu.matmul %1, %2, %cst {dimension_numbers = #tpu.dot_dimension_numbers<[1], [0], [0], [1], [0, 0, 1, 1], [], []>} : vector<32x128xbf16>, vector<128x256xbf16>, vector<32x256xf32> -> vector<32x256xf32>
    %c0_3 = arith.constant 0 : index
    %c0_4 = arith.constant 0 : index
    %4 = vector.load %arg4[%c0_3, %c0_4] : memref<1x256xf32, #tpu.memory_space<vmem>>, vector<1x256xf32>
    %5 = vector.broadcast %4 : vector<1x256xf32> to vector<32x256xf32>
    %6 = arith.addf %3, %5 : vector<32x256xf32>
    %c0_5 = arith.constant 0 : index
    %c0_6 = arith.constant 0 : index
    %7 = vector.load %arg5[%c0_5, %c0_6] : memref<32x256xf32, #tpu.memory_space<vmem>>, vector<32x256xf32>
    tpu.vector_store %arg5[%c0_5, %c0_6], %6 {strides = array<i32>} : memref<32x256xf32, #tpu.memory_space<vmem>>, vector<32x256xf32>,
    return
  }
  func.func @transform_0(%arg0: i32, %arg1: i32) -> (i32, i32) {
    %c0_i32 = arith.constant 0 : i32
    %c0_i32_0 = arith.constant 0 : i32
    return %arg0, %c0_i32 : i32, i32
  }
  func.func @transform_1(%arg0: i32, %arg1: i32) -> (i32, i32) {
    %c0_i32 = arith.constant 0 : i32
    %c0_i32_0 = arith.constant 0 : i32
    return %c0_i32, %arg1 : i32, i32
  }
  func.func @transform_2(%arg0: i32, %arg1: i32) -> (i32, i32) {
    %c0_i32 = arith.constant 0 : i32
    %c0_i32_0 = arith.constant 0 : i32
    return %c0_i32, %arg1 : i32, i32
  }
  func.func @transform_3(%arg0: i32, %arg1: i32) -> (i32, i32) {
    %c0_i32 = arith.constant 0 : i32
    return %arg0, %arg1 : i32, i32
  }
}

</mosaic_0001>

<llo_original>
// kernel: reverse
$region0: #{reverse}
  %s0 = inlined_call_operand.vmem [shape: f32[2,512], index: 0, kind: input, shape index: {}]
  %s1 = inlined_call_operand.vmem [shape: f32[2,512], index: 1, kind: output, shape index: {}]
  %v2 = vlaneseq
  %v3 = vsub.s32 127, %v2
  %4 = vset.pattern.permute.xlu0 %v3
  $region1: #{reverse} parent=0
    #allocation0 [shape = 'u8[4096]{0}', space=vmem, size = 0x1000, scoped, tag = 'operand span for operand 0']
    #allocation1 [shape = 'u8[2048]{0}', space=vmem, size = 0x800, scoped, tag = 'packed  for operand 0']
    #allocation2 [shape = 'u8[4096]{0}', space=vmem, size = 0x1000, scoped, tag = 'operand span for operand 1']
    #allocation3 [shape = 'u8[2048]{0}', space=vmem, size = 0x800, scoped, tag = 'packed  for operand 1']
    loop: start=0, step=1, limit=6
    $region2: #{reverse} parent=1 // loop_pre_header
      _
    $region3: #{reverse} parent=1 // loop_header
      %s6 = sphi 0, %s10
      %p7 = scmp.ge.s32.totalorder %s6, 6
      %s13 = sphi 0, %s25
      %s14 = sphi 0, %s21
      %s15 = sphi 0, %s13
      %s16 = sphi 0, %s14
      %s17 = sphi 0, %s15
      %s18 = sphi 0, %s16
    $region4: #{reverse} parent=1 // loop_header_branch
      %9 = sbr.rel (%p7) target = $region8
    $region5: #{reverse} parent=1 // loop_body
      %s11 = ssub.s32 %s6, 1
      %s12 = ssub.s32 %s6, 2
      %s19 = sadd.s32 1, %s14
      %p20 = scmp.ge.s32.totalorder %s19, 4
      %s21 = scalar_select %p20, 0, %s19
      %s22 = sadd.s32 1, %s13
      %s23 = scalar_select %p20, %s22, %s13
      %p24 = scmp.ge.s32.totalorder %s23, 1
      %s25 = scalar_select %p24, 0, %s23
      %p26 = scmp.le.s32.totalorder 1, %s6
      %p27 = scmp.lt.s32.totalorder %s6, 5
      %p28 = pnand %p26, %p27
      %p29 = pneg %p28
      // Predicated region
      $region9: #{reverse} parent=5 // pred_check
        _
      $region10: #{reverse} parent=5 // pred_check_branch
        %31 = sbr.rel (%p28) target = $region12
      $region11: #{reverse} parent=5 // pred_region
        %s32 = ssub.s32 %s6, 1
      $region12: #{reverse} parent=5 // pred_fallthru
        _
      %p33 = scmp.lt.s32.totalorder %s6, 4
      // Predicated region
      $region13: #{reverse} parent=5 // pred_check
        %p34 = pneg %p33
      $region14: #{reverse} parent=5 // pred_check_branch
        %36 = sbr.rel (%p34) target = $region16
      $region15: #{reverse} parent=5 // pred_region
        %s37 = sand.u32 %s6, 1
        %s38 = sand.u32 %s6, 1
        %s39 = smul.addr %s38, 2
        %s40 = scalar_lea.vmem [#allocation1], %s39
        %s41 = ssub.s32 3, %s14
        %s42 = smul.addr %s13, 4
        %s43 = sadd.s32 %s41, %s42
        %s44 = smul.addr %s43, 2
        %s45 = scalar_lea.vmem %s0, %s44
        // Predicated region
        $region17: #{reverse} parent=15 // pred_check
          _
        $region18: #{reverse} parent=15 // pred_check_branch
          %47 = sbr.rel (0) target = $region20
        $region19: #{reverse} parent=15 // pred_region
          // Predicated region
          $region21: #{reverse} parent=19 // pred_check
            _
          $region22: #{reverse} parent=19 // pred_check_branch
            %49 = sbr.rel target = $region24
          $region23: #{reverse} parent=19 // pred_region
            // Predicated region
            $region36: #{reverse} parent=23 // pred_check
              _
            $region37: #{reverse} parent=23 // pred_check_branch
              %65 = sbr.rel (0) target = $region39
            $region38: #{reverse} parent=23 // pred_region
              %s67 = ssub.s32 4, 1
              loop: start=0, step=1, limit=1
              $region40: #{reverse} parent=38 // loop_pre_header
                _
              $region41: #{reverse} parent=38 // loop_header
                %s69 = sphi 0, %s73
                %p70 = scmp.ge.s32.totalorder %s69, 1
                %s74 = sphi %s45, %s45
                %s75 = sphi %s40, %s40
              $region42: #{reverse} parent=38 // loop_header_branch
                %72 = sbr.rel (%p70) target = $region46
              $region43: #{reverse} parent=38 // loop_body
                %v76 = vld [vmem:[%s74] sm:%s67]
                %77 = vst [vmem:[%s75] sm:%s67] %v76
              $region44: #{reverse} parent=38 // loop_footer
                %s73 = sadd.s32 1, %s69
              $region45: #{reverse} parent=38 // loop_footer_branch
                %68 = sbr.rel target = $region41
              $region46: #{reverse} parent=38 // loop_exit
                _
            $region39: #{reverse} parent=23 // pred_fallthru
              _
          $region24: #{reverse} parent=19 // pred_fallthru
            _
          // Predicated region
          $region25: #{reverse} parent=19 // pred_check
            _
          $region26: #{reverse} parent=19 // pred_check_branch
            %51 = sbr.rel (0) target = $region28
          $region27: #{reverse} parent=19 // pred_region
            %s53 = ssub.s32 4, 1
            loop: start=0, step=1, limit=1
            $region29: #{reverse} parent=27 // loop_pre_header
              _
            $region30: #{reverse} parent=27 // loop_header
              %s55 = sphi 0, %s59
              %p56 = scmp.ge.s32.totalorder %s55, 1
              %s60 = sphi %s45, %s45
              %s61 = sphi %s40, %s40
            $region31: #{reverse} parent=27 // loop_header_branch
              %58 = sbr.rel (%p56) target = $region35
            $region32: #{reverse} parent=27 // loop_body
              %v62 = vld [vmem:[%s60] sm:%s53]
              %63 = vst [vmem:[%s61] sm:%s53] %v62
            $region33: #{reverse} parent=27 // loop_footer
              %s59 = sadd.s32 1, %s55
            $region34: #{reverse} parent=27 // loop_footer_branch
              %54 = sbr.rel target = $region30
            $region35: #{reverse} parent=27 // loop_exit
              _
          $region28: #{reverse} parent=19 // pred_fallthru
            _
        $region20: #{reverse} parent=15 // pred_fallthru
          _
        %78 = vnop
      $region16: #{reverse} parent=5 // pred_fallthru
        _
      %p79 = scmp.le.s32.totalorder 1, %s6
      %p80 = scmp.lt.s32.totalorder %s6, 5
      %p81 = pnand %p79, %p80
      %p82 = pneg %p81
      // Predicated region
      $region47: #{reverse} parent=5 // pred_check
        _
      $region48: #{reverse} parent=5 // pred_check_branch
        %84 = sbr.rel (%p81) target = $region50
      $region49: #{reverse} parent=5 // pred_region
        %s85 = ssub.s32 %s6, 1
        %s86 = sand.u32 %s11, 1
        %s87 = sand.u32 %s11, 1
        %s88 = smul.addr %s87, 2
        %s89 = scalar_lea.vmem [#allocation1], %s88
        %s90 = sand.u32 %s11, 1
        %s91 = sand.u32 %s11, 1
        %s92 = smul.addr %s91, 2
        %s93 = scalar_lea.vmem [#allocation1], %s92
        %s94 = sand.u32 %s11, 1
        %s95 = sand.u32 %s11, 1
        %s96 = smul.addr %s95, 2
        %s97 = scalar_lea.vmem [#allocation3], %s96
        %s99 = sshll.u32 1, 2
        %s100 = ssub.s32 %s99, 1
        %v101 = vld [vmem:[%s93] sm:%s100]
        %102 = vst [vmem:[#allocation0] sm:%s100] %v101
        %s103 = ssub.s32 3, %s16
        %v104 = vld [vmem:[#allocation0] sm:$0xff]
        %105 = vperm.xlu0 %4, %v104
        %v106 = vpop.permute.xlu0 %105
        %107 = vst [vmem:[#allocation2] sm:$0xff] %v106
        %s109 = sshll.u32 1, 2
        %s110 = ssub.s32 %s109, 1
        %v112 = vld [vmem:[#allocation2] sm:%s110]
        %s113 = sshll.u32 1, 2
        %s114 = ssub.s32 %s113, 1
        %115 = vst [vmem:[%s97] sm:%s114] %v112
        %s116 = sand.u32 %s11, 1
        %s117 = sand.u32 %s11, 1
        %s118 = smul.addr %s117, 2
        %s119 = scalar_lea.vmem [#allocation3], %s118
        %s120 = smul.addr %s15, 4
        %s121 = sadd.s32 %s16, %s120
        %s122 = smul.addr %s121, 2
        %s123 = scalar_lea.vmem %s1, %s122
        // Predicated region
        $region51: #{reverse} parent=49 // pred_check
          _
        $region52: #{reverse} parent=49 // pred_check_branch
          %125 = sbr.rel (0) target = $region54
        $region53: #{reverse} parent=49 // pred_region
          // Predicated region
          $region55: #{reverse} parent=53 // pred_check
            _
          $region56: #{reverse} parent=53 // pred_check_branch
            %127 = sbr.rel target = $region58
          $region57: #{reverse} parent=53 // pred_region
            // Predicated region
            $region70: #{reverse} parent=57 // pred_check
              _
            $region71: #{reverse} parent=57 // pred_check_branch
              %143 = sbr.rel (0) target = $region73
            $region72: #{reverse} parent=57 // pred_region
              %s145 = ssub.s32 4, 1
              loop: start=0, step=1, limit=1
              $region74: #{reverse} parent=72 // loop_pre_header
                _
              $region75: #{reverse} parent=72 // loop_header
                %s147 = sphi 0, %s151
                %p148 = scmp.ge.s32.totalorder %s147, 1
                %s152 = sphi %s119, %s119
                %s153 = sphi %s123, %s123
              $region76: #{reverse} parent=72 // loop_header_branch
                %150 = sbr.rel (%p148) target = $region80
              $region77: #{reverse} parent=72 // loop_body
                %v154 = vld [vmem:[%s152] sm:%s145]
                %155 = vst [vmem:[%s153] sm:%s145] %v154
              $region78: #{reverse} parent=72 // loop_footer
                %s151 = sadd.s32 1, %s147
              $region79: #{reverse} parent=72 // loop_footer_branch
                %146 = sbr.rel target = $region75
              $region80: #{reverse} parent=72 // loop_exit
                _
            $region73: #{reverse} parent=57 // pred_fallthru
              _
          $region58: #{reverse} parent=53 // pred_fallthru
            _
          // Predicated region
          $region59: #{reverse} parent=53 // pred_check
            _
          $region60: #{reverse} parent=53 // pred_check_branch
            %129 = sbr.rel (0) target = $region62
          $region61: #{reverse} parent=53 // pred_region
            %s131 = ssub.s32 4, 1
            loop: start=0, step=1, limit=1
            $region63: #{reverse} parent=61 // loop_pre_header
              _
            $region64: #{reverse} parent=61 // loop_header
              %s133 = sphi 0, %s137
              %p134 = scmp.ge.s32.totalorder %s133, 1
              %s138 = sphi %s119, %s119
              %s139 = sphi %s123, %s123
            $region65: #{reverse} parent=61 // loop_header_branch
              %136 = sbr.rel (%p134) target = $region69
            $region66: #{reverse} parent=61 // loop_body
              %v140 = vld [vmem:[%s138] sm:%s131]
              %141 = vst [vmem:[%s139] sm:%s131] %v140
            $region67: #{reverse} parent=61 // loop_footer
              %s137 = sadd.s32 1, %s133
            $region68: #{reverse} parent=61 // loop_footer_branch
              %132 = sbr.rel target = $region64
            $region69: #{reverse} parent=61 // loop_exit
              _
          $region62: #{reverse} parent=53 // pred_fallthru
            _
        $region54: #{reverse} parent=49 // pred_fallthru
          _
        %156 = vnop
      $region50: #{reverse} parent=5 // pred_fallthru
        _
      %p157 = scmp.le.s32.totalorder 2, %s6
      // Predicated region
      $region81: #{reverse} parent=5 // pred_check
        %p158 = pneg %p157
      $region82: #{reverse} parent=5 // pred_check_branch
        %160 = sbr.rel (%p158) target = $region84
      $region83: #{reverse} parent=5 // pred_region
        %s161 = ssub.s32 %s6, 2
        %s162 = sand.u32 %s12, 1
        %s163 = sand.u32 %s12, 1
        %s164 = smul.addr %s163, 2
        %s165 = scalar_lea.vmem [#allocation3], %s164
      $region84: #{reverse} parent=5 // pred_fallthru
        _
    $region6: #{reverse} parent=1 // loop_footer
      %s10 = sadd.s32 1, %s6
    $region7: #{reverse} parent=1 // loop_footer_branch
      %5 = sbr.rel target = $region3
    $region8: #{reverse} parent=1 // loop_exit
      _

// kernel: wave_mae_forward.22
$region0: #{wave_mae_forward.22}
  #allocation0 [shape = 'u32[]', space=smem, size = 0x4, offset = 0x4, fixed_abs, tag = 'smem constant byte address 0x4 - core index']
  #allocation1 [shape = 'u32[144,128]{1,0:T(1,128)}', space=vmem, size = 0x12000, scoped, tag = 'internal scratch']
  %s0 = inlined_call_operand.vmem [shape: f32[32,256], index: 0, kind: input, shape index: {}]
  %s1 = inlined_call_operand.vmem [shape: bf16[256,128], index: 1, kind: input, shape index: {}]
  %s2 = inlined_call_operand.vmem [shape: f32[1,128], index: 2, kind: input, shape index: {}]
  %s3 = inlined_call_operand.vmem [shape: f32[32,128], index: 3, kind: output, shape index: {}]
  %s4 = sld [smem:[#allocation0]]
  $region22: #{wave_mae_forward.22} parent=0
    _
  %s6 = ssub.s32 1, %s4
  %s7 = scalar_select 0, %s6, %s4
  // Predicated region
  $region2: #{wave_mae_forward.22} parent=0 // pred_check
    _
  $region3: #{wave_mae_forward.22} parent=0 // pred_check_branch
    %9 = sbr.rel (0) target = $region5
  $region4: #{wave_mae_forward.22} parent=0 // pred_region
    _
  $region5: #{wave_mae_forward.22} parent=0 // pred_fallthru
    _
  // Predicated region
  $region6: #{wave_mae_forward.22} parent=0 // pred_check
    _
  $region7: #{wave_mae_forward.22} parent=0 // pred_check_branch
    %11 = sbr.rel (0) target = $region9
  $region8: #{wave_mae_forward.22} parent=0 // pred_region
    _
  $region9: #{wave_mae_forward.22} parent=0 // pred_fallthru
    _
  // Predicated region
  $region10: #{wave_mae_forward.22} parent=0 // pred_check
    _
  $region11: #{wave_mae_forward.22} parent=0 // pred_check_branch
    %13 = sbr.rel (0) target = $region13
  $region12: #{wave_mae_forward.22} parent=0 // pred_region
    _
  $region13: #{wave_mae_forward.22} parent=0 // pred_fallthru
    _
  %v15 = vld [vmem:[%s0] sm:$0xff]
  %v16 = vld [vmem:[%s0 + $0x8] sm:$0xff]
  %v17 = vld [vmem:[%s0 + $0x10] sm:$0xff]
  %v18 = vld [vmem:[%s0 + $0x18] sm:$0xff]
  %v19 = vld [vmem:[%s0 + $0x20] sm:$0xff]
  %v20 = vld [vmem:[%s0 + $0x28] sm:$0xff]
  %v21 = vld [vmem:[%s0 + $0x30] sm:$0xff]
  %v22 = vld [vmem:[%s0 + $0x38] sm:$0xff]
  %v23 = vpack.c.bf16 %v17, %v15
  %v24 = vpack.c.bf16 %v18, %v16
  %v25 = vpack.c.bf16 %v21, %v19
  %v26 = vpack.c.bf16 %v22, %v20
  %v27 = vld [vmem:[%s1] sm:$0xf]
  %v28 = vld [vmem:[%s1 + $0x4] sm:$0xf]
  %v29 = vld [vmem:[%s1 + $0x8] sm:$0xf]
  %v30 = vld [vmem:[%s1 + $0xc] sm:$0xf]
  %v31 = vld [vmem:[%s1 + $0x10] sm:$0xf]
  %v32 = vld [vmem:[%s1 + $0x14] sm:$0xf]
  %v33 = vld [vmem:[%s1 + $0x18] sm:$0xf]
  %v34 = vld [vmem:[%s1 + $0x1c] sm:$0xf]
  %v35 = vld [vmem:[%s1 + $0x20] sm:$0xf]
  %v36 = vld [vmem:[%s1 + $0x24] sm:$0xf]
  %v37 = vld [vmem:[%s1 + $0x28] sm:$0xf]
  %v38 = vld [vmem:[%s1 + $0x2c] sm:$0xf]
  %v39 = vld [vmem:[%s1 + $0x30] sm:$0xf]
  %v40 = vld [vmem:[%s1 + $0x34] sm:$0xf]
  %v41 = vld [vmem:[%s1 + $0x38] sm:$0xf]
  %v42 = vld [vmem:[%s1 + $0x3c] sm:$0xf]
  %v43 = vld [vmem:[%s1 + $0x40] sm:$0xf]
  %v44 = vld [vmem:[%s1 + $0x44] sm:$0xf]
  %v45 = vld [vmem:[%s1 + $0x48] sm:$0xf]
  %v46 = vld [vmem:[%s1 + $0x4c] sm:$0xf]
  %v47 = vld [vmem:[%s1 + $0x50] sm:$0xf]
  %v48 = vld [vmem:[%s1 + $0x54] sm:$0xf]
  %v49 = vld [vmem:[%s1 + $0x58] sm:$0xf]
  %v50 = vld [vmem:[%s1 + $0x5c] sm:$0xf]
  %v51 = vld [vmem:[%s1 + $0x60] sm:$0xf]
  %v52 = vld [vmem:[%s1 + $0x64] sm:$0xf]
  %v53 = vld [vmem:[%s1 + $0x68] sm:$0xf]
  %v54 = vld [vmem:[%s1 + $0x6c] sm:$0xf]
  %v55 = vld [vmem:[%s1 + $0x70] sm:$0xf]
  %v56 = vld [vmem:[%s1 + $0x74] sm:$0xf]
  %v57 = vld [vmem:[%s1 + $0x78] sm:$0xf]
  %v58 = vld [vmem:[%s1 + $0x7c] sm:$0xf]
  %v59 = vld [vmem:[%s2] sm:$0x1]
  %v61 = vlaneseq
  %v62 = vshrl.u32 %v61, 7
  %v63 = vsub.s32 0, %v62
  %v64 = vrot.slane %v59, %v63
  %v98 = vunpack.c.l.b16 %v27
  %v99 = vunpack.c.l.b16 %v28
  %v100 = vunpack.c.l.b16 %v29
  %v101 = vunpack.c.l.b16 %v30
  %v102 = vunpack.c.l.b16 %v31
  %v103 = vunpack.c.l.b16 %v32
  %v104 = vunpack.c.l.b16 %v33
  %v105 = vunpack.c.l.b16 %v34
  %v106 = vunpack.c.l.b16 %v35
  %v107 = vunpack.c.l.b16 %v36
  %v108 = vunpack.c.l.b16 %v37
  %v109 = vunpack.c.l.b16 %v38
  %v110 = vunpack.c.l.b16 %v39
  %v111 = vunpack.c.l.b16 %v40
  %v112 = vunpack.c.l.b16 %v41
  %v113 = vunpack.c.l.b16 %v42
  %v114 = vunpack.c.l.b16 %v43
  %v115 = vunpack.c.l.b16 %v44
  %v116 = vunpack.c.l.b16 %v45
  %v117 = vunpack.c.l.b16 %v46
  %v118 = vunpack.c.l.b16 %v47
  %v119 = vunpack.c.l.b16 %v48
  %v120 = vunpack.c.l.b16 %v49
  %v121 = vunpack.c.l.b16 %v50
  %v122 = vunpack.c.l.b16 %v51
  %v123 = vunpack.c.l.b16 %v52
  %v124 = vunpack.c.l.b16 %v53
  %v125 = vunpack.c.l.b16 %v54
  %v126 = vunpack.c.l.b16 %v55
  %v127 = vunpack.c.l.b16 %v56
  %v128 = vunpack.c.l.b16 %v57
  %v129 = vunpack.c.l.b16 %v58
  %v130 = vpack.c.b16 %v99, %v98
  %v131 = vpack.c.b16 %v101, %v100
  %v132 = vpack.c.b16 %v103, %v102
  %v133 = vpack.c.b16 %v105, %v104
  %v134 = vpack.c.b16 %v107, %v106
  %v135 = vpack.c.b16 %v109, %v108
  %v136 = vpack.c.b16 %v111, %v110
  %v137 = vpack.c.b16 %v113, %v112
  %v138 = vpack.c.b16 %v115, %v114
  %v139 = vpack.c.b16 %v117, %v116
  %v140 = vpack.c.b16 %v119, %v118
  %v141 = vpack.c.b16 %v121, %v120
  %v142 = vpack.c.b16 %v123, %v122
  %v143 = vpack.c.b16 %v125, %v124
  %v144 = vpack.c.b16 %v127, %v126
  %v145 = vpack.c.b16 %v129, %v128
  %162 = vmatprep.subr.bf16.mxu0 0
  %163 = vmatpush1.bf16.msra.mxu0 %v137
  %164 = vmatprep.subr.bf16.mxu0 0
  %165 = vmatpush1.bf16.msra.mxu0 %v136
  %166 = vmatprep.subr.bf16.mxu0 0
  %167 = vmatpush1.bf16.msra.mxu0 %v135
  %168 = vmatprep.subr.bf16.mxu0 0
  %169 = vmatpush1.bf16.msra.mxu0 %v134
  %170 = vmatprep.subr.bf16.mxu0 0
  %171 = vmatpush1.bf16.msra.mxu0 %v133
  %172 = vmatprep.subr.bf16.mxu0 0
  %173 = vmatpush1.bf16.msra.mxu0 %v132
  %174 = vmatprep.subr.bf16.mxu0 0
  %175 = vmatpush1.bf16.msra.mxu0 %v131
  %176 = vmatprep.subr.bf16.mxu0 0
  %177 = vmatpush1.bf16.msra.mxu0 %v130
  %178 = vmatprep.subr.bf16.mxu0 0
  %179 = vmatpush2.bf16.msra.mxu0 %v145
  %180 = vmatprep.subr.bf16.mxu0 0
  %181 = vmatpush2.bf16.msra.mxu0 %v144
  %182 = vmatprep.subr.bf16.mxu0 0
  %183 = vmatpush2.bf16.msra.mxu0 %v143
  %184 = vmatprep.subr.bf16.mxu0 0
  %185 = vmatpush2.bf16.msra.mxu0 %v142
  %186 = vmatprep.subr.bf16.mxu0 0
  %187 = vmatpush2.bf16.msra.mxu0 %v141
  %188 = vmatprep.subr.bf16.mxu0 0
  %189 = vmatpush2.bf16.msra.mxu0 %v140
  %190 = vmatprep.subr.bf16.mxu0 0
  %191 = vmatpush2.bf16.msra.mxu0 %v139
  %192 = vmatprep.subr.bf16.mxu0 0
  %193 = vmatpush2.bf16.msra.mxu0 %v138
  %194 = vmatprep.mubr.bf16.mxu0 %v24
  %195 = vmatmul.mubr.bf16.gmra.mxu0 %v23
  %v196 = vpop.f32.mrf.mxu0
  %v197 = vadd.f32 %v64, %v196
  %v198 = vpop.f32.mrf.mxu0
  %v199 = vpop.f32.mrf.mxu0
  %v200 = vadd.f32 %v64, %v199
  %v201 = vpop.f32.mrf.mxu0
  %202 = vmatprep.mubr.bf16.mxu0 %v26
  %203 = vmatmul.mubr.bf16.gmra.mxu0 %v25
  %v204 = vpop.f32.mrf.mxu0
  %v205 = vadd.f32 %v64, %v204
  %v206 = vpop.f32.mrf.mxu0
  %v207 = vpop.f32.mrf.mxu0
  %v208 = vadd.f32 %v64, %v207
  %v209 = vpop.f32.mrf.mxu0
  %210 = vdwg.mxu0
  %211 = vst [vmem:[%s3] sm:$0xff] %v197
  %212 = vst [vmem:[%s3 + $0x8] sm:$0xff] %v200
  %213 = vst [vmem:[%s3 + $0x10] sm:$0xff] %v205
  %214 = vst [vmem:[%s3 + $0x18] sm:$0xff] %v208
  // Predicated region
  $region14: #{wave_mae_forward.22} parent=0 // pred_check
    _
  $region15: #{wave_mae_forward.22} parent=0 // pred_check_branch
    %216 = sbr.rel (0) target = $region17
  $region16: #{wave_mae_forward.22} parent=0 // pred_region
    _
  $region17: #{wave_mae_forward.22} parent=0 // pred_fallthru
    _
  // Predicated region
  $region18: #{wave_mae_forward.22} parent=0 // pred_check
    _
  $region19: #{wave_mae_forward.22} parent=0 // pred_check_branch
    %218 = sbr.rel (0) target = $region21
  $region20: #{wave_mae_forward.22} parent=0 // pred_region
    _
  $region21: #{wave_mae_forward.22} parent=0 // pred_fallthru
    _

// kernel: wave_mae_forward.23
$region0: #{wave_mae_forward.23}
  #allocation0 [shape = 'u32[]', space=smem, size = 0x4, offset = 0x4, fixed_abs, tag = 'smem constant byte address 0x4 - core index']
  #allocation1 [shape = 'u32[144,128]{1,0:T(1,128)}', space=vmem, size = 0x12000, scoped, tag = 'internal scratch']
  %s0 = inlined_call_operand.vmem [shape: f32[32,128], index: 0, kind: input, shape index: {}]
  %s1 = inlined_call_operand.vmem [shape: f32[1,128], index: 1, kind: input, shape index: {}]
  %s2 = inlined_call_operand.vmem [shape: f32[1,128], index: 2, kind: input, shape index: {}]
  %s3 = inlined_call_operand.vmem [shape: bf16[128,384], index: 3, kind: input, shape index: {}]
  %s4 = inlined_call_operand.vmem [shape: f32[1,384], index: 4, kind: input, shape index: {}]
  %s5 = inlined_call_operand.vmem [shape: bf16[32,384], index: 5, kind: output, shape index: {}]
  %s6 = sld [smem:[#allocation0]]
  $region131: #{wave_mae_forward.23} parent=0
    _
  %s8 = ssub.s32 1, %s6
  %s9 = scalar_select 0, %s8, %s6
  $region1: #{wave_mae_forward.23} parent=0
    #allocation2 [shape = 'u8[65536]{0}', space=vmem, size = 0x10000, scoped, tag = 'input window, operand 3']
    #allocation3 [shape = 'u8[16384]{0}', space=vmem, size = 0x4000, scoped, tag = 'output window, operand 0']
    loop: start=0, step=1, limit=5
    $region2: #{wave_mae_forward.23} parent=1 // loop_pre_header
      _
    $region3: #{wave_mae_forward.23} parent=1 // loop_header
      %s11 = sphi 0, %s15
      %p12 = scmp.ge.s32.totalorder %s11, 5
      %s18 = sphi 0, %s30
      %s19 = sphi 0, %s26
      %s20 = sphi 0, %s18
      %s21 = sphi 0, %s19
      %s22 = sphi 0, %s20
      %s23 = sphi 0, %s21
      %s33 = sphi 0, %s35
      %s36 = sphi 0, %s33
      %s37 = sphi 0, %s36
      %s53 = sphi 0, %s37
      %s57 = sphi 0, %s57
      %s59 = sphi 0, %s57
      %s60 = sphi 0, %s59
      %s74 = sphi 0, %s60
      %s78 = sphi 0, %s78
      %s80 = sphi 0, %s78
      %s81 = sphi 0, %s80
      %s95 = sphi 0, %s81
      %s101 = sphi 0, %s103
      %s104 = sphi 0, %s101
      %s105 = sphi 0, %s104
      %s121 = sphi 0, %s105
      %s127 = sphi 0, %s129
      %s130 = sphi 0, %s127
      %s131 = sphi 0, %s130
      %s147 = sphi 0, %s131
      %s155 = sphi 0, %s157
      %s158 = sphi 0, %s155
      %s159 = sphi 0, %s158
      %s175 = sphi 0, %s159
    $region4: #{wave_mae_forward.23} parent=1 // loop_header_branch
      %14 = sbr.rel (%p12) target = $region8
    $region5: #{wave_mae_forward.23} parent=1 // loop_body
      %s16 = ssub.s32 %s11, 1
      %s17 = ssub.s32 %s11, 2
      %s24 = sadd.s32 1, %s19
      %p25 = scmp.ge.s32.totalorder %s24, 3
      %s26 = scalar_select %p25, 0, %s24
      %s27 = sadd.s32 1, %s18
      %s28 = scalar_select %p25, %s27, %s18
      %p29 = scmp.ge.s32.totalorder %s28, 1
      %s30 = scalar_select %p29, 0, %s28
      %s31 = ssub.s32 %s18, %s30
      %p32 = scmp.eq.s32.totalorder %s31, 0
      %s34 = sadd.s32 %s33, 1
      %s35 = scalar_select %p32, %s33, %s34
      %p38 = pneg %p32
      %p39 = scmp.eq.s32.totalorder %s11, 2
      %p40 = por %p38, %p39
      %p41 = scmp.ne.s32.totalorder %s33, %s36
      %p42 = scmp.eq.s32.totalorder %s11, 0
      %p43 = por %p41, %p42
      %p44 = scmp.ne.s32.totalorder %s33, %s36
      %p45 = scmp.eq.s32.totalorder %s16, 2
      %p46 = por %p44, %p45
      %p47 = scmp.ne.s32.totalorder %s36, %s37
      %p48 = scmp.eq.s32.totalorder %s16, 0
      %p49 = por %p47, %p48
      %p50 = scmp.ne.s32.totalorder %s36, %s37
      %p51 = scmp.eq.s32.totalorder %s17, 2
      %p52 = por %p50, %p51
      %p54 = scmp.ne.s32.totalorder %s37, %s53
      %p55 = scmp.eq.s32.totalorder %s17, 0
      %p56 = por %p54, %p55
      %s58 = sadd.s32 %s57, 1
      %p61 = scmp.eq.s32.totalorder %s11, 2
      %p62 = scmp.ne.s32.totalorder %s57, %s59
      %p63 = scmp.eq.s32.totalorder %s11, 0
      %p64 = por %p62, %p63
      %p65 = scmp.ne.s32.totalorder %s57, %s59
      %p66 = scmp.eq.s32.totalorder %s16, 2
      %p67 = por %p65, %p66
      %p68 = scmp.ne.s32.totalorder %s59, %s60
      %p69 = scmp.eq.s32.totalorder %s16, 0
      %p70 = por %p68, %p69
      %p71 = scmp.ne.s32.totalorder %s59, %s60
      %p72 = scmp.eq.s32.totalorder %s17, 2
      %p73 = por %p71, %p72
      %p75 = scmp.ne.s32.totalorder %s60, %s74
      %p76 = scmp.eq.s32.totalorder %s17, 0
      %p77 = por %p75, %p76
      %s79 = sadd.s32 %s78, 1
      %p82 = scmp.eq.s32.totalorder %s11, 2
      %p83 = scmp.ne.s32.totalorder %s78, %s80
      %p84 = scmp.eq.s32.totalorder %s11, 0
      %p85 = por %p83, %p84
      %p86 = scmp.ne.s32.totalorder %s78, %s80
      %p87 = scmp.eq.s32.totalorder %s16, 2
      %p88 = por %p86, %p87
      %p89 = scmp.ne.s32.totalorder %s80, %s81
      %p90 = scmp.eq.s32.totalorder %s16, 0
      %p91 = por %p89, %p90
      %p92 = scmp.ne.s32.totalorder %s80, %s81
      %p93 = scmp.eq.s32.totalorder %s17, 2
      %p94 = por %p92, %p93
      %p96 = scmp.ne.s32.totalorder %s81, %s95
      %p97 = scmp.eq.s32.totalorder %s17, 0
      %p98 = por %p96, %p97
      %s99 = ssub.s32 %s19, %s26
      %p100 = scmp.eq.s32.totalorder %s99, 0
      %s102 = sadd.s32 %s101, 1
      %s103 = scalar_select %p100, %s101, %s102
      %p106 = pneg %p100
      %p107 = scmp.eq.s32.totalorder %s11, 2
      %p108 = por %p106, %p107
      %p109 = scmp.ne.s32.totalorder %s101, %s104
      %p110 = scmp.eq.s32.totalorder %s11, 0
      %p111 = por %p109, %p110
      %p112 = scmp.ne.s32.totalorder %s101, %s104
      %p113 = scmp.eq.s32.totalorder %s16, 2
      %p114 = por %p112, %p113
      %p115 = scmp.ne.s32.totalorder %s104, %s105
      %p116 = scmp.eq.s32.totalorder %s16, 0
      %p117 = por %p115, %p116
      %p118 = scmp.ne.s32.totalorder %s104, %s105
      %p119 = scmp.eq.s32.totalorder %s17, 2
      %p120 = por %p118, %p119
      %p122 = scmp.ne.s32.totalorder %s105, %s121
      %p123 = scmp.eq.s32.totalorder %s17, 0
      %p124 = por %p122, %p123
      %s125 = ssub.s32 %s19, %s26
      %p126 = scmp.eq.s32.totalorder %s125, 0
      %s128 = sadd.s32 %s127, 1
      %s129 = scalar_select %p126, %s127, %s128
      %p132 = pneg %p126
      %p133 = scmp.eq.s32.totalorder %s11, 2
      %p134 = por %p132, %p133
      %p135 = scmp.ne.s32.totalorder %s127, %s130
      %p136 = scmp.eq.s32.totalorder %s11, 0
      %p137 = por %p135, %p136
      %p138 = scmp.ne.s32.totalorder %s127, %s130
      %p139 = scmp.eq.s32.totalorder %s16, 2
      %p140 = por %p138, %p139
      %p141 = scmp.ne.s32.totalorder %s130, %s131
      %p142 = scmp.eq.s32.totalorder %s16, 0
      %p143 = por %p141, %p142
      %p144 = scmp.ne.s32.totalorder %s130, %s131
      %p145 = scmp.eq.s32.totalorder %s17, 2
      %p146 = por %p144, %p145
      %p148 = scmp.ne.s32.totalorder %s131, %s147
      %p149 = scmp.eq.s32.totalorder %s17, 0
      %p150 = por %p148, %p149
      %s151 = ssub.s32 %s18, %s30
      %s152 = ssub.s32 %s19, %s26
      %s153 = sor.u32 %s151, %s152
      %p154 = scmp.eq.s32.totalorder %s153, 0
      %s156 = sadd.s32 %s155, 1
      %s157 = scalar_select %p154, %s155, %s156
      %p160 = pneg %p154
      %p161 = scmp.eq.s32.totalorder %s11, 2
      %p162 = por %p160, %p161
      %p163 = scmp.ne.s32.totalorder %s155, %s158
      %p164 = scmp.eq.s32.totalorder %s11, 0
      %p165 = por %p163, %p164
      %p166 = scmp.ne.s32.totalorder %s155, %s158
      %p167 = scmp.eq.s32.totalorder %s16, 2
      %p168 = por %p166, %p167
      %p169 = scmp.ne.s32.totalorder %s158, %s159
      %p170 = scmp.eq.s32.totalorder %s16, 0
      %p171 = por %p169, %p170
      %p172 = scmp.ne.s32.totalorder %s158, %s159
      %p173 = scmp.eq.s32.totalorder %s17, 2
      %p174 = por %p172, %p173
      %p176 = scmp.ne.s32.totalorder %s159, %s175
      %p177 = scmp.eq.s32.totalorder %s17, 0
      %p178 = por %p176, %p177
      %p179 = scmp.le.s32.totalorder 1, %s11
      %p180 = scmp.lt.s32.totalorder %s11, 4
      %p181 = pnand %p179, %p180
      %p182 = pneg %p181
      // Predicated region
      $region9: #{wave_mae_forward.23} parent=5 // pred_check
        _
      $region10: #{wave_mae_forward.23} parent=5 // pred_check_branch
        %184 = sbr.rel (%p181) target = $region12
      $region11: #{wave_mae_forward.23} parent=5 // pred_region
        %s185 = ssub.s32 %s11, 1
        // Predicated region
        $region13: #{wave_mae_forward.23} parent=11 // pred_check
          %p186 = pneg %p49
        $region14: #{wave_mae_forward.23} parent=11 // pred_check_branch
          %188 = sbr.rel (%p186) target = $region16
        $region15: #{wave_mae_forward.23} parent=11 // pred_region
          %s189 = smul.u32 4, %s20
          %p190 = scmp.lt.s32.totalorder %s189, 3
          %s191 = scalar_select %p190, %s189, 3
          %s192 = smul.addr %s191, 8
          %s193 = scalar_lea.vmem %s0, %s192
          %s194 = smul.u32 4, %s20
        $region16: #{wave_mae_forward.23} parent=11 // pred_fallthru
          _
        // Predicated region
        $region17: #{wave_mae_forward.23} parent=11 // pred_check
          %p195 = pneg %p70
        $region18: #{wave_mae_forward.23} parent=11 // pred_check_branch
          %197 = sbr.rel (%p195) target = $region20
        $region19: #{wave_mae_forward.23} parent=11 // pred_region
          _
        $region20: #{wave_mae_forward.23} parent=11 // pred_fallthru
          _
        // Predicated region
        $region21: #{wave_mae_forward.23} parent=11 // pred_check
          %p198 = pneg %p91
        $region22: #{wave_mae_forward.23} parent=11 // pred_check_branch
          %200 = sbr.rel (%p198) target = $region24
        $region23: #{wave_mae_forward.23} parent=11 // pred_region
          _
        $region24: #{wave_mae_forward.23} parent=11 // pred_fallthru
          _
      $region12: #{wave_mae_forward.23} parent=5 // pred_fallthru
        _
      %p201 = scmp.lt.s32.totalorder %s11, 3
      // Predicated region
      $region25: #{wave_mae_forward.23} parent=5 // pred_check
        %p202 = pneg %p201
      $region26: #{wave_mae_forward.23} parent=5 // pred_check_branch
        %204 = sbr.rel (%p202) target = $region28
      $region27: #{wave_mae_forward.23} parent=5 // pred_region
        // Predicated region
        $region29: #{wave_mae_forward.23} parent=27 // pred_check
          %p205 = pneg %p111
        $region30: #{wave_mae_forward.23} parent=27 // pred_check_branch
          %207 = sbr.rel (%p205) target = $region32
        $region31: #{wave_mae_forward.23} parent=27 // pred_region
          %s208 = sand.u32 %s101, 1
          %s209 = sand.u32 %s101, 1
          %s210 = smul.addr %s209, 64
          %s211 = scalar_lea.vmem [#allocation2], %s210
          %s212 = smul.addr %s19, 4
          %s213 = scalar_lea.vmem %s3, %s212
          // Predicated region
          $region33: #{wave_mae_forward.23} parent=31 // pred_check
            _
          $region34: #{wave_mae_forward.23} parent=31 // pred_check_branch
            %215 = sbr.rel (0) target = $region36
          $region35: #{wave_mae_forward.23} parent=31 // pred_region
            // Predicated region
            $region37: #{wave_mae_forward.23} parent=35 // pred_check
              _
            $region38: #{wave_mae_forward.23} parent=35 // pred_check_branch
              %217 = sbr.rel target = $region40
            $region39: #{wave_mae_forward.23} parent=35 // pred_region
              // Predicated region
              $region52: #{wave_mae_forward.23} parent=39 // pred_check
                _
              $region53: #{wave_mae_forward.23} parent=39 // pred_check_branch
                %263 = sbr.rel (0) target = $region55
              $region54: #{wave_mae_forward.23} parent=39 // pred_region
                loop: start=0, step=1, limit=1
                $region56: #{wave_mae_forward.23} parent=54 // loop_pre_header
                  _
                $region57: #{wave_mae_forward.23} parent=54 // loop_header
                  %s265 = sphi 0, %s269
                  %p266 = scmp.ge.s32.totalorder %s265, 1
                  %s270 = sphi %s213, %s213
                  %s271 = sphi %s211, %s211
                $region58: #{wave_mae_forward.23} parent=54 // loop_header_branch
                  %268 = sbr.rel (%p266) target = $region62
                $region59: #{wave_mae_forward.23} parent=54 // loop_body
                  _
                $region60: #{wave_mae_forward.23} parent=54 // loop_footer
                  %s269 = sadd.s32 1, %s265
                $region61: #{wave_mae_forward.23} parent=54 // loop_footer_branch
                  %264 = sbr.rel target = $region57
                $region62: #{wave_mae_forward.23} parent=54 // loop_exit
                  _
                %s273 = ssub.s32 16, 1
                loop: start=0, step=1, limit=1
                $region63: #{wave_mae_forward.23} parent=54 // loop_pre_header
                  _
                $region64: #{wave_mae_forward.23} parent=54 // loop_header
                  %s275 = sphi 0, %s279
                  %p276 = scmp.ge.s32.totalorder %s275, 1
                  %s280 = sphi %s213, %s213
                  %s281 = sphi %s211, %s211
                $region65: #{wave_mae_forward.23} parent=54 // loop_header_branch
                  %278 = sbr.rel (%p276) target = $region69
                $region66: #{wave_mae_forward.23} parent=54 // loop_body
                  %v282 = vld [vmem:[%s280] sm:%s273]
                  %283 = vst [vmem:[%s281] sm:%s273] %v282
                  %v284 = vld [vmem:[%s280 + $0xc] sm:%s273]
                  %285 = vst [vmem:[%s281 + $0x4] sm:%s273] %v284
                  %v286 = vld [vmem:[%s280 + $0x18] sm:%s273]
                  %287 = vst [vmem:[%s281 + $0x8] sm:%s273] %v286
                  %v288 = vld [vmem:[%s280 + $0x24] sm:%s273]
                  %289 = vst [vmem:[%s281 + $0xc] sm:%s273] %v288
                  %v290 = vld [vmem:[%s280 + $0x30] sm:%s273]
                  %291 = vst [vmem:[%s281 + $0x10] sm:%s273] %v290
                  %v292 = vld [vmem:[%s280 + $0x3c] sm:%s273]
                  %293 = vst [vmem:[%s281 + $0x14] sm:%s273] %v292
                  %v294 = vld [vmem:[%s280 + $0x48] sm:%s273]
                  %295 = vst [vmem:[%s281 + $0x18] sm:%s273] %v294
                  %v296 = vld [vmem:[%s280 + $0x54] sm:%s273]
                  %297 = vst [vmem:[%s281 + $0x1c] sm:%s273] %v296
                  %v298 = vld [vmem:[%s280 + $0x60] sm:%s273]
                  %299 = vst [vmem:[%s281 + $0x20] sm:%s273] %v298
                  %v300 = vld [vmem:[%s280 + $0x6c] sm:%s273]
                  %301 = vst [vmem:[%s281 + $0x24] sm:%s273] %v300
                  %v302 = vld [vmem:[%s280 + $0x78] sm:%s273]
                  %303 = vst [vmem:[%s281 + $0x28] sm:%s273] %v302
                  %v304 = vld [vmem:[%s280 + $0x84] sm:%s273]
                  %305 = vst [vmem:[%s281 + $0x2c] sm:%s273] %v304
                  %v306 = vld [vmem:[%s280 + $0x90] sm:%s273]
                  %307 = vst [vmem:[%s281 + $0x30] sm:%s273] %v306
                  %v308 = vld [vmem:[%s280 + $0x9c] sm:%s273]
                  %309 = vst [vmem:[%s281 + $0x34] sm:%s273] %v308
                  %v310 = vld [vmem:[%s280 + $0xa8] sm:%s273]
                  %311 = vst [vmem:[%s281 + $0x38] sm:%s273] %v310
                  %v312 = vld [vmem:[%s280 + $0xb4] sm:%s273]
                  %313 = vst [vmem:[%s281 + $0x3c] sm:%s273] %v312
                $region67: #{wave_mae_forward.23} parent=54 // loop_footer
                  %s279 = sadd.s32 1, %s275
                $region68: #{wave_mae_forward.23} parent=54 // loop_footer_branch
                  %274 = sbr.rel target = $region64
                $region69: #{wave_mae_forward.23} parent=54 // loop_exit
                  _
              $region55: #{wave_mae_forward.23} parent=39 // pred_fallthru
                _
            $region40: #{wave_mae_forward.23} parent=35 // pred_fallthru
              _
            // Predicated region
            $region41: #{wave_mae_forward.23} parent=35 // pred_check
              _
            $region42: #{wave_mae_forward.23} parent=35 // pred_check_branch
              %219 = sbr.rel (0) target = $region44
            $region43: #{wave_mae_forward.23} parent=35 // pred_region
              %s221 = ssub.s32 16, 1
              loop: start=0, step=1, limit=1
              $region45: #{wave_mae_forward.23} parent=43 // loop_pre_header
                _
              $region46: #{wave_mae_forward.23} parent=43 // loop_header
                %s223 = sphi 0, %s227
                %p224 = scmp.ge.s32.totalorder %s223, 1
                %s228 = sphi %s213, %s213
                %s229 = sphi %s211, %s211
              $region47: #{wave_mae_forward.23} parent=43 // loop_header_branch
                %226 = sbr.rel (%p224) target = $region51
              $region48: #{wave_mae_forward.23} parent=43 // loop_body
                %v230 = vld [vmem:[%s228] sm:%s221]
                %231 = vst [vmem:[%s229] sm:%s221] %v230
                %v232 = vld [vmem:[%s228 + $0xc] sm:%s221]
                %233 = vst [vmem:[%s229 + $0x4] sm:%s221] %v232
                %v234 = vld [vmem:[%s228 + $0x18] sm:%s221]
                %235 = vst [vmem:[%s229 + $0x8] sm:%s221] %v234
                %v236 = vld [vmem:[%s228 + $0x24] sm:%s221]
                %237 = vst [vmem:[%s229 + $0xc] sm:%s221] %v236
                %v238 = vld [vmem:[%s228 + $0x30] sm:%s221]
                %239 = vst [vmem:[%s229 + $0x10] sm:%s221] %v238
                %v240 = vld [vmem:[%s228 + $0x3c] sm:%s221]
                %241 = vst [vmem:[%s229 + $0x14] sm:%s221] %v240
                %v242 = vld [vmem:[%s228 + $0x48] sm:%s221]
                %243 = vst [vmem:[%s229 + $0x18] sm:%s221] %v242
                %v244 = vld [vmem:[%s228 + $0x54] sm:%s221]
                %245 = vst [vmem:[%s229 + $0x1c] sm:%s221] %v244
                %v246 = vld [vmem:[%s228 + $0x60] sm:%s221]
                %247 = vst [vmem:[%s229 + $0x20] sm:%s221] %v246
                %v248 = vld [vmem:[%s228 + $0x6c] sm:%s221]
                %249 = vst [vmem:[%s229 + $0x24] sm:%s221] %v248
                %v250 = vld [vmem:[%s228 + $0x78] sm:%s221]
                %251 = vst [vmem:[%s229 + $0x28] sm:%s221] %v250
                %v252 = vld [vmem:[%s228 + $0x84] sm:%s221]
                %253 = vst [vmem:[%s229 + $0x2c] sm:%s221] %v252
                %v254 = vld [vmem:[%s228 + $0x90] sm:%s221]
                %255 = vst [vmem:[%s229 + $0x30] sm:%s221] %v254
                %v256 = vld [vmem:[%s228 + $0x9c] sm:%s221]
                %257 = vst [vmem:[%s229 + $0x34] sm:%s221] %v256
                %v258 = vld [vmem:[%s228 + $0xa8] sm:%s221]
                %259 = vst [vmem:[%s229 + $0x38] sm:%s221] %v258
                %v260 = vld [vmem:[%s228 + $0xb4] sm:%s221]
                %261 = vst [vmem:[%s229 + $0x3c] sm:%s221] %v260
              $region49: #{wave_mae_forward.23} parent=43 // loop_footer
                %s227 = sadd.s32 1, %s223
              $region50: #{wave_mae_forward.23} parent=43 // loop_footer_branch
                %222 = sbr.rel target = $region46
              $region51: #{wave_mae_forward.23} parent=43 // loop_exit
                _
            $region44: #{wave_mae_forward.23} parent=35 // pred_fallthru
              _
          $region36: #{wave_mae_forward.23} parent=31 // pred_fallthru
            _
          %314 = vnop
        $region32: #{wave_mae_forward.23} parent=27 // pred_fallthru
          _
        // Predicated region
        $region70: #{wave_mae_forward.23} parent=27 // pred_check
          %p315 = pneg %p137
        $region71: #{wave_mae_forward.23} parent=27 // pred_check_branch
          %317 = sbr.rel (%p315) target = $region73
        $region72: #{wave_mae_forward.23} parent=27 // pred_region
          %p318 = scmp.lt.s32.totalorder %s19, 2
          %s319 = scalar_select %p318, %s19, 2
          %s320 = scalar_lea.vmem %s4, %s319
        $region73: #{wave_mae_forward.23} parent=27 // pred_fallthru
          _
      $region28: #{wave_mae_forward.23} parent=5 // pred_fallthru
        _
      %p321 = scmp.le.s32.totalorder 1, %s11
      %p322 = scmp.lt.s32.totalorder %s11, 4
      %p323 = pnand %p321, %p322
      %p324 = pneg %p323
      // Predicated region
      $region74: #{wave_mae_forward.23} parent=5 // pred_check
        _
      $region75: #{wave_mae_forward.23} parent=5 // pred_check_branch
        %326 = sbr.rel (%p323) target = $region77
      $region76: #{wave_mae_forward.23} parent=5 // pred_region
        %s327 = ssub.s32 %s11, 1
        %s328 = sand.u32 %s104, 1
        %s329 = sand.u32 %s104, 1
        %s330 = smul.addr %s329, 64
        %s331 = scalar_lea.vmem [#allocation2], %s330
        // Predicated region
        $region78: #{wave_mae_forward.23} parent=76 // pred_check
          %p332 = pneg %p117
        $region79: #{wave_mae_forward.23} parent=76 // pred_check_branch
          %334 = sbr.rel (%p332) target = $region81
        $region80: #{wave_mae_forward.23} parent=76 // pred_region
          _
        $region81: #{wave_mae_forward.23} parent=76 // pred_fallthru
          _
        %s335 = smul.u32 4, %s20
        %p336 = scmp.lt.s32.totalorder %s335, 3
        %s337 = scalar_select %p336, %s335, 3
        %s338 = smul.addr %s337, 8
        %s339 = scalar_lea.vmem %s0, %s338
        %p340 = pneg %p49
        %p341 = pneg %p46
        %p342 = pneg %p70
        %p343 = pneg %p67
        %p344 = pneg %p91
        %p345 = pneg %p88
        %s346 = sand.u32 %s104, 1
        %s347 = sand.u32 %s104, 1
        %s348 = smul.addr %s347, 64
        %s349 = scalar_lea.vmem [#allocation2], %s348
        %p350 = pneg %p117
        %p351 = pneg %p114
        %p352 = scmp.lt.s32.totalorder %s21, 2
        %s353 = scalar_select %p352, %s21, 2
        %s354 = scalar_lea.vmem %s4, %s353
        %p355 = pneg %p143
        %p356 = pneg %p140
        %p357 = pneg %p171
        %p358 = pneg %p168
        %s359 = sand.u32 %s158, 1
        %s360 = sand.u32 %s158, 1
        %s361 = smul.addr %s360, 16
        %s362 = scalar_lea.vmem [#allocation3], %s361
        %s363 = smul.u32 4, %s20
        %p364 = scmp.lt.s32.totalorder %s363, 3
        %s365 = scalar_select %p364, %s363, 3
        %s366 = smul.addr %s365, 8
        %s367 = scalar_lea.vmem %s0, %s366
        %s368 = smul.u32 4, %s20
        %p369 = scmp.lt.s32.totalorder %s21, 2
        %s370 = scalar_select %p369, %s21, 2
        %s371 = scalar_lea.vmem %s4, %s370
        %s372 = smul.u32 4, %s20
        %v374 = vld [vmem:[%s367] sm:$0xff]
        %v375 = vld [vmem:[%s367 + $0x8] sm:$0xff]
        %v376 = vld [vmem:[%s367 + $0x10] sm:$0xff]
        %v377 = vld [vmem:[%s367 + $0x18] sm:$0xff]
        %378 = vadd.xlane.f32.xlu0 %v374
        %v379 = vpop.xlane.xlu0 %378
        %380 = vadd.xlane.f32.xlu0 %v375
        %v381 = vpop.xlane.xlu0 %380
        %382 = vadd.xlane.f32.xlu0 %v376
        %v383 = vpop.xlane.xlu0 %382
        %384 = vadd.xlane.f32.xlu0 %v377
        %v385 = vpop.xlane.xlu0 %384
        %v386 = vrcp.pop 128.0
        %v387 = vmul.f32 %v379, %v386
        %v388 = vmul.f32 %v381, %v386
        %v389 = vmul.f32 %v383, %v386
        %v390 = vmul.f32 %v385, %v386
        %v391 = vsub.f32 %v374, %v387
        %v392 = vsub.f32 %v375, %v388
        %v393 = vsub.f32 %v376, %v389
        %v394 = vsub.f32 %v377, %v390
        %v395 = vmul.f32 %v391, %v391
        %v396 = vmul.f32 %v392, %v392
        %v397 = vmul.f32 %v393, %v393
        %v398 = vmul.f32 %v394, %v394
        %399 = vadd.xlane.f32.xlu0 %v395
        %v400 = vpop.xlane.xlu0 %399
        %401 = vadd.xlane.f32.xlu0 %v396
        %v402 = vpop.xlane.xlu0 %401
        %403 = vadd.xlane.f32.xlu0 %v397
        %v404 = vpop.xlane.xlu0 %403
        %405 = vadd.xlane.f32.xlu0 %v398
        %v406 = vpop.xlane.xlu0 %405
        %v407 = vmul.f32 %v400, %v386
        %v408 = vmul.f32 %v402, %v386
        %v409 = vmul.f32 %v404, %v386
        %v410 = vmul.f32 %v406, %v386
        %v411 = vadd.f32 %v407, 1e-05
        %v412 = vadd.f32 %v408, 1e-05
        %v413 = vadd.f32 %v409, 1e-05
        %v414 = vadd.f32 %v410, 1e-05
        %v415 = vrsqrt.pop %v411
        %v416 = vrsqrt.pop %v412
        %v417 = vrsqrt.pop %v413
        %v418 = vrsqrt.pop %v414
        %v419 = vmul.f32 %v391, %v415
        %v420 = vmul.f32 %v392, %v416
        %v421 = vmul.f32 %v393, %v417
        %v422 = vmul.f32 %v394, %v418
        %v423 = vld [vmem:[%s1] sm:$0x1]
        %v425 = vlaneseq
        %v426 = vshrl.u32 %v425, 7
        %v427 = vsub.s32 0, %v426
        %v428 = vrot.slane %v423, %v427
        %v430 = vmul.f32 %v419, %v428
        %v431 = vmul.f32 %v420, %v428
        %v432 = vmul.f32 %v421, %v428
        %v433 = vmul.f32 %v422, %v428
        %v434 = vld [vmem:[%s2] sm:$0x1]
        %v436 = vlaneseq
        %v437 = vshrl.u32 %v436, 7
        %v438 = vsub.s32 0, %v437
        %v439 = vrot.slane %v434, %v438
        %v441 = vadd.f32 %v430, %v439
        %v442 = vadd.f32 %v431, %v439
        %v443 = vadd.f32 %v432, %v439
        %v444 = vadd.f32 %v433, %v439
        %v445 = vpack.c.bf16 %v442, %v441
        %v446 = vpack.c.bf16 %v444, %v443
        %v447 = vld [vmem:[%s331] sm:$0xf]
        %v448 = vld [vmem:[%s331 + $0x4] sm:$0xf]
        %v449 = vld [vmem:[%s331 + $0x8] sm:$0xf]
        %v450 = vld [vmem:[%s331 + $0xc] sm:$0xf]
        %v451 = vld [vmem:[%s331 + $0x10] sm:$0xf]
        %v452 = vld [vmem:[%s331 + $0x14] sm:$0xf]
        %v453 = vld [vmem:[%s331 + $0x18] sm:$0xf]
        %v454 = vld [vmem:[%s331 + $0x1c] sm:$0xf]
        %v455 = vld [vmem:[%s331 + $0x20] sm:$0xf]
        %v456 = vld [vmem:[%s331 + $0x24] sm:$0xf]
        %v457 = vld [vmem:[%s331 + $0x28] sm:$0xf]
        %v458 = vld [vmem:[%s331 + $0x2c] sm:$0xf]
        %v459 = vld [vmem:[%s331 + $0x30] sm:$0xf]
        %v460 = vld [vmem:[%s331 + $0x34] sm:$0xf]
        %v461 = vld [vmem:[%s331 + $0x38] sm:$0xf]
        %v462 = vld [vmem:[%s331 + $0x3c] sm:$0xf]
        %v463 = vld [vmem:[%s371] sm:$0x1]
        %v465 = vlaneseq
        %v466 = vshrl.u32 %v465, 7
        %v467 = vsub.s32 0, %v466
        %v468 = vrot.slane %v463, %v467
        %v486 = vunpack.c.l.b16 %v447
        %v487 = vunpack.c.l.b16 %v448
        %v488 = vunpack.c.l.b16 %v449
        %v489 = vunpack.c.l.b16 %v450
        %v490 = vunpack.c.l.b16 %v451
        %v491 = vunpack.c.l.b16 %v452
        %v492 = vunpack.c.l.b16 %v453
        %v493 = vunpack.c.l.b16 %v454
        %v494 = vunpack.c.l.b16 %v455
        %v495 = vunpack.c.l.b16 %v456
        %v496 = vunpack.c.l.b16 %v457
        %v497 = vunpack.c.l.b16 %v458
        %v498 = vunpack.c.l.b16 %v459
        %v499 = vunpack.c.l.b16 %v460
        %v500 = vunpack.c.l.b16 %v461
        %v501 = vunpack.c.l.b16 %v462
        %v502 = vpack.c.b16 %v487, %v486
        %v503 = vpack.c.b16 %v489, %v488
        %v504 = vpack.c.b16 %v491, %v490
        %v505 = vpack.c.b16 %v493, %v492
        %v506 = vpack.c.b16 %v495, %v494
        %v507 = vpack.c.b16 %v497, %v496
        %v508 = vpack.c.b16 %v499, %v498
        %v509 = vpack.c.b16 %v501, %v500
        %518 = vmatprep.subr.bf16.mxu0 0
        %519 = vmatpush1.bf16.msra.mxu0 %v509
        %520 = vmatprep.subr.bf16.mxu0 0
        %521 = vmatpush1.bf16.msra.mxu0 %v508
        %522 = vmatprep.subr.bf16.mxu0 0
        %523 = vmatpush1.bf16.msra.mxu0 %v507
        %524 = vmatprep.subr.bf16.mxu0 0
        %525 = vmatpush1.bf16.msra.mxu0 %v506
        %526 = vmatprep.subr.bf16.mxu0 0
        %527 = vmatpush1.bf16.msra.mxu0 %v505
        %528 = vmatprep.subr.bf16.mxu0 0
        %529 = vmatpush1.bf16.msra.mxu0 %v504
        %530 = vmatprep.subr.bf16.mxu0 0
        %531 = vmatpush1.bf16.msra.mxu0 %v503
        %532 = vmatprep.subr.bf16.mxu0 0
        %533 = vmatpush1.bf16.msra.mxu0 %v502
        %534 = vmatprep.subr.bf16.mxu0 0
        %535 = vmatpush2.bf16.msra.mxu0 0
        %536 = vmatprep.subr.bf16.mxu0 0
        %537 = vmatpush2.bf16.msra.mxu0 0
        %538 = vmatprep.subr.bf16.mxu0 0
        %539 = vmatpush2.bf16.msra.mxu0 0
        %540 = vmatprep.subr.bf16.mxu0 0
        %541 = vmatpush2.bf16.msra.mxu0 0
        %542 = vmatprep.subr.bf16.mxu0 0
        %543 = vmatpush2.bf16.msra.mxu0 0
        %544 = vmatprep.subr.bf16.mxu0 0
        %545 = vmatpush2.bf16.msra.mxu0 0
        %546 = vmatprep.subr.bf16.mxu0 0
        %547 = vmatpush2.bf16.msra.mxu0 0
        %548 = vmatprep.subr.bf16.mxu0 0
        %549 = vmatpush2.bf16.msra.mxu0 0
        %550 = vmatprep.mubr.bf16.mxu0 0
        %551 = vmatmul.mubr.bf16.gmra.mxu0 %v445
        %v552 = vpop.f32.mrf.mxu0
        %v553 = vadd.f32 %v468, %v552
        %v554 = vpop.f32.mrf.mxu0
        %v555 = vpop.f32.mrf.mxu0
        %v556 = vadd.f32 %v468, %v555
        %v557 = vpop.f32.mrf.mxu0
        %558 = vmatprep.mubr.bf16.mxu0 0
        %559 = vmatmul.mubr.bf16.gmra.mxu0 %v446
        %v560 = vpop.f32.mrf.mxu0
        %v561 = vadd.f32 %v468, %v560
        %v562 = vpop.f32.mrf.mxu0
        %v563 = vpop.f32.mrf.mxu0
        %v564 = vadd.f32 %v468, %v563
        %v565 = vpop.f32.mrf.mxu0
        %566 = vdwg.mxu0
        %v567 = vpack.c.bf16 %v556, %v553
        %v568 = vpack.c.bf16 %v564, %v561
        %v571 = vunpack.c.l.b16 %v567
        %v572 = vunpack.c.h.b16 %v567
        %v573 = vunpack.c.l.b16 %v568
        %v574 = vunpack.c.h.b16 %v568
        %v575 = vpack.c.b16 %v571, %v571
        %v576 = vpack.c.b16 %v572, %v572
        %v577 = vpack.c.b16 %v573, %v573
        %v578 = vpack.c.b16 %v574, %v574
        %583 = vst [vmem:[%s362] sm:$0xf] %v575
        %584 = vst [vmem:[%s362 + $0x4] sm:$0xf] %v576
        %585 = vst [vmem:[%s362 + $0x8] sm:$0xf] %v577
        %586 = vst [vmem:[%s362 + $0xc] sm:$0xf] %v578
        %s587 = sand.u32 %s158, 1
        %s588 = sand.u32 %s158, 1
        %s589 = smul.addr %s588, 16
        %s590 = scalar_lea.vmem [#allocation3], %s589
        // Predicated region
        $region82: #{wave_mae_forward.23} parent=76 // pred_check
          %p591 = pneg %p168
        $region83: #{wave_mae_forward.23} parent=76 // pred_check_branch
          %593 = sbr.rel (%p591) target = $region85
        $region84: #{wave_mae_forward.23} parent=76 // pred_region
          %s594 = smul.u32 4, %s20
          %s595 = smul.addr %s594, 3
          %s596 = sadd.s32 %s21, %s595
          %s597 = smul.addr %s596, 4
          %s598 = scalar_lea.vmem %s5, %s597
          // Predicated region
          $region86: #{wave_mae_forward.23} parent=84 // pred_check
            _
          $region87: #{wave_mae_forward.23} parent=84 // pred_check_branch
            %600 = sbr.rel (0) target = $region89
          $region88: #{wave_mae_forward.23} parent=84 // pred_region
            // Predicated region
            $region90: #{wave_mae_forward.23} parent=88 // pred_check
              _
            $region91: #{wave_mae_forward.23} parent=88 // pred_check_branch
              %602 = sbr.rel target = $region93
            $region92: #{wave_mae_forward.23} parent=88 // pred_region
              // Predicated region
              $region105: #{wave_mae_forward.23} parent=92 // pred_check
                _
              $region106: #{wave_mae_forward.23} parent=92 // pred_check_branch
                %624 = sbr.rel (0) target = $region108
              $region107: #{wave_mae_forward.23} parent=92 // pred_region
                loop: start=0, step=1, limit=1
                $region109: #{wave_mae_forward.23} parent=107 // loop_pre_header
                  _
                $region110: #{wave_mae_forward.23} parent=107 // loop_header
                  %s626 = sphi 0, %s630
                  %p627 = scmp.ge.s32.totalorder %s626, 1
                  %s631 = sphi %s590, %s590
                  %s632 = sphi %s598, %s598
                $region111: #{wave_mae_forward.23} parent=107 // loop_header_branch
                  %629 = sbr.rel (%p627) target = $region115
                $region112: #{wave_mae_forward.23} parent=107 // loop_body
                  _
                $region113: #{wave_mae_forward.23} parent=107 // loop_footer
                  %s630 = sadd.s32 1, %s626
                $region114: #{wave_mae_forward.23} parent=107 // loop_footer_branch
                  %625 = sbr.rel target = $region110
                $region115: #{wave_mae_forward.23} parent=107 // loop_exit
                  _
                %s634 = ssub.s32 16, 1
                loop: start=0, step=1, limit=1
                $region116: #{wave_mae_forward.23} parent=107 // loop_pre_header
                  _
                $region117: #{wave_mae_forward.23} parent=107 // loop_header
                  %s636 = sphi 0, %s640
                  %p637 = scmp.ge.s32.totalorder %s636, 1
                  %s641 = sphi %s590, %s590
                  %s642 = sphi %s598, %s598
                $region118: #{wave_mae_forward.23} parent=107 // loop_header_branch
                  %639 = sbr.rel (%p637) target = $region122
                $region119: #{wave_mae_forward.23} parent=107 // loop_body
                  %v643 = vld [vmem:[%s641] sm:%s634]
                  %644 = vst [vmem:[%s642] sm:%s634] %v643
                  %v645 = vld [vmem:[%s641 + $0x4] sm:%s634]
                  %646 = vst [vmem:[%s642 + $0xc] sm:%s634] %v645
                  %v647 = vld [vmem:[%s641 + $0x8] sm:%s634]
                  %648 = vst [vmem:[%s642 + $0x18] sm:%s634] %v647
                  %v649 = vld [vmem:[%s641 + $0xc] sm:%s634]
                  %650 = vst [vmem:[%s642 + $0x24] sm:%s634] %v649
                $region120: #{wave_mae_forward.23} parent=107 // loop_footer
                  %s640 = sadd.s32 1, %s636
                $region121: #{wave_mae_forward.23} parent=107 // loop_footer_branch
                  %635 = sbr.rel target = $region117
                $region122: #{wave_mae_forward.23} parent=107 // loop_exit
                  _
              $region108: #{wave_mae_forward.23} parent=92 // pred_fallthru
                _
            $region93: #{wave_mae_forward.23} parent=88 // pred_fallthru
              _
            // Predicated region
            $region94: #{wave_mae_forward.23} parent=88 // pred_check
              _
            $region95: #{wave_mae_forward.23} parent=88 // pred_check_branch
              %604 = sbr.rel (0) target = $region97
            $region96: #{wave_mae_forward.23} parent=88 // pred_region
              %s606 = ssub.s32 16, 1
              loop: start=0, step=1, limit=1
              $region98: #{wave_mae_forward.23} parent=96 // loop_pre_header
                _
              $region99: #{wave_mae_forward.23} parent=96 // loop_header
                %s608 = sphi 0, %s612
                %p609 = scmp.ge.s32.totalorder %s608, 1
                %s613 = sphi %s590, %s590
                %s614 = sphi %s598, %s598
              $region100: #{wave_mae_forward.23} parent=96 // loop_header_branch
                %611 = sbr.rel (%p609) target = $region104
              $region101: #{wave_mae_forward.23} parent=96 // loop_body
                %v615 = vld [vmem:[%s613] sm:%s606]
                %616 = vst [vmem:[%s614] sm:%s606] %v615
                %v617 = vld [vmem:[%s613 + $0x4] sm:%s606]
                %618 = vst [vmem:[%s614 + $0xc] sm:%s606] %v617
                %v619 = vld [vmem:[%s613 + $0x8] sm:%s606]
                %620 = vst [vmem:[%s614 + $0x18] sm:%s606] %v619
                %v621 = vld [vmem:[%s613 + $0xc] sm:%s606]
                %622 = vst [vmem:[%s614 + $0x24] sm:%s606] %v621
              $region102: #{wave_mae_forward.23} parent=96 // loop_footer
                %s612 = sadd.s32 1, %s608
              $region103: #{wave_mae_forward.23} parent=96 // loop_footer_branch
                %607 = sbr.rel target = $region99
              $region104: #{wave_mae_forward.23} parent=96 // loop_exit
                _
            $region97: #{wave_mae_forward.23} parent=88 // pred_fallthru
              _
          $region89: #{wave_mae_forward.23} parent=84 // pred_fallthru
            _
          %651 = vnop
        $region85: #{wave_mae_forward.23} parent=76 // pred_fallthru
          _
      $region77: #{wave_mae_forward.23} parent=5 // pred_fallthru
        _
      %p652 = scmp.le.s32.totalorder 2, %s11
      // Predicated region
      $region123: #{wave_mae_forward.23} parent=5 // pred_check
        %p653 = pneg %p652
      $region124: #{wave_mae_forward.23} parent=5 // pred_check_branch
        %655 = sbr.rel (%p653) target = $region126
      $region125: #{wave_mae_forward.23} parent=5 // pred_region
        %s656 = ssub.s32 %s11, 2
        // Predicated region
        $region127: #{wave_mae_forward.23} parent=125 // pred_check
          %p657 = pneg %p174
        $region128: #{wave_mae_forward.23} parent=125 // pred_check_branch
          %659 = sbr.rel (%p657) target = $region130
        $region129: #{wave_mae_forward.23} parent=125 // pred_region
          %s660 = sand.u32 %s159, 1
          %s661 = sand.u32 %s159, 1
          %s662 = smul.addr %s661, 16
          %s663 = scalar_lea.vmem [#allocation3], %s662
        $region130: #{wave_mae_forward.23} parent=125 // pred_fallthru
          _
      $region126: #{wave_mae_forward.23} parent=5 // pred_fallthru
        _
    $region6: #{wave_mae_forward.23} parent=1 // loop_footer
      %s15 = sadd.s32 1, %s11
    $region7: #{wave_mae_forward.23} parent=1 // loop_footer_branch
      %10 = sbr.rel target = $region3
    $region8: #{wave_mae_forward.23} parent=1 // loop_exit
      _

// kernel: wave_mae_forward.24
$region0: #{wave_mae_forward.24}
  #allocation0 [shape = 'u32[]', space=smem, size = 0x4, offset = 0x4, fixed_abs, tag = 'smem constant byte address 0x4 - core index']
  #allocation1 [shape = 'u32[144,128]{1,0:T(1,128)}', space=vmem, size = 0x12000, scoped, tag = 'internal scratch']
  %s0 = inlined_call_operand.vmem [shape: bf16[2,4,16,32], index: 0, kind: input, shape index: {}]
  %s1 = inlined_call_operand.vmem [shape: bf16[2,4,16,32], index: 1, kind: input, shape index: {}]
  %s2 = inlined_call_operand.vmem [shape: bf16[2,4,16,32], index: 2, kind: input, shape index: {}]
  %s3 = inlined_call_operand.vmem [shape: f32[2,1,16], index: 3, kind: input, shape index: {}]
  %s4 = inlined_call_operand.vmem [shape: bf16[2,4,16,32], index: 4, kind: output, shape index: {}]
  %s5 = sld [smem:[#allocation0]]
  $region49: #{wave_mae_forward.24} parent=0
    _
  %s7 = ssub.s32 1, %s5
  %s8 = scalar_select 0, %s7, %s5
  loop: start=0, step=1, limit=10
  $region2: #{wave_mae_forward.24} parent=0 // loop_pre_header
    _
  $region3: #{wave_mae_forward.24} parent=0 // loop_header
    %s10 = sphi 0, %s14
    %p11 = scmp.ge.s32.totalorder %s10, 10
    %s17 = sphi 0, %s29
    %s18 = sphi 0, %s25
    %s19 = sphi 0, %s17
    %s20 = sphi 0, %s18
    %s21 = sphi 0, %s19
    %s22 = sphi 0, %s20
    %s34 = sphi 0, %s36
    %s37 = sphi 0, %s34
    %s38 = sphi 0, %s37
    %s54 = sphi 0, %s38
    %s62 = sphi 0, %s64
    %s65 = sphi 0, %s62
    %s66 = sphi 0, %s65
    %s82 = sphi 0, %s66
    %s90 = sphi 0, %s92
    %s93 = sphi 0, %s90
    %s94 = sphi 0, %s93
    %s110 = sphi 0, %s94
    %s116 = sphi 0, %s118
    %s119 = sphi 0, %s116
    %s120 = sphi 0, %s119
    %s136 = sphi 0, %s120
    %s144 = sphi 0, %s146
    %s147 = sphi 0, %s144
    %s148 = sphi 0, %s147
    %s164 = sphi 0, %s148
  $region4: #{wave_mae_forward.24} parent=0 // loop_header_branch
    %13 = sbr.rel (%p11) target = $region8
  $region5: #{wave_mae_forward.24} parent=0 // loop_body
    %s15 = ssub.s32 %s10, 1
    %s16 = ssub.s32 %s10, 2
    %s23 = sadd.s32 1, %s18
    %p24 = scmp.ge.s32.totalorder %s23, 4
    %s25 = scalar_select %p24, 0, %s23
    %s26 = sadd.s32 1, %s17
    %s27 = scalar_select %p24, %s26, %s17
    %p28 = scmp.ge.s32.totalorder %s27, 2
    %s29 = scalar_select %p28, 0, %s27
    %s30 = ssub.s32 %s17, %s29
    %s31 = ssub.s32 %s18, %s25
    %s32 = sor.u32 %s30, %s31
    %p33 = scmp.eq.s32.totalorder %s32, 0
    %s35 = sadd.s32 %s34, 1
    %s36 = scalar_select %p33, %s34, %s35
    %p39 = pneg %p33
    %p40 = scmp.eq.s32.totalorder %s10, 7
    %p41 = por %p39, %p40
    %p42 = scmp.ne.s32.totalorder %s34, %s37
    %p43 = scmp.eq.s32.totalorder %s10, 0
    %p44 = por %p42, %p43
    %p45 = scmp.ne.s32.totalorder %s34, %s37
    %p46 = scmp.eq.s32.totalorder %s15, 7
    %p47 = por %p45, %p46
    %p48 = scmp.ne.s32.totalorder %s37, %s38
    %p49 = scmp.eq.s32.totalorder %s15, 0
    %p50 = por %p48, %p49
    %p51 = scmp.ne.s32.totalorder %s37, %s38
    %p52 = scmp.eq.s32.totalorder %s16, 7
    %p53 = por %p51, %p52
    %p55 = scmp.ne.s32.totalorder %s38, %s54
    %p56 = scmp.eq.s32.totalorder %s16, 0
    %p57 = por %p55, %p56
    %s58 = ssub.s32 %s17, %s29
    %s59 = ssub.s32 %s18, %s25
    %s60 = sor.u32 %s58, %s59
    %p61 = scmp.eq.s32.totalorder %s60, 0
    %s63 = sadd.s32 %s62, 1
    %s64 = scalar_select %p61, %s62, %s63
    %p67 = pneg %p61
    %p68 = scmp.eq.s32.totalorder %s10, 7
    %p69 = por %p67, %p68
    %p70 = scmp.ne.s32.totalorder %s62, %s65
    %p71 = scmp.eq.s32.totalorder %s10, 0
    %p72 = por %p70, %p71
    %p73 = scmp.ne.s32.totalorder %s62, %s65
    %p74 = scmp.eq.s32.totalorder %s15, 7
    %p75 = por %p73, %p74
    %p76 = scmp.ne.s32.totalorder %s65, %s66
    %p77 = scmp.eq.s32.totalorder %s15, 0
    %p78 = por %p76, %p77
    %p79 = scmp.ne.s32.totalorder %s65, %s66
    %p80 = scmp.eq.s32.totalorder %s16, 7
    %p81 = por %p79, %p80
    %p83 = scmp.ne.s32.totalorder %s66, %s82
    %p84 = scmp.eq.s32.totalorder %s16, 0
    %p85 = por %p83, %p84
    %s86 = ssub.s32 %s17, %s29
    %s87 = ssub.s32 %s18, %s25
    %s88 = sor.u32 %s86, %s87
    %p89 = scmp.eq.s32.totalorder %s88, 0
    %s91 = sadd.s32 %s90, 1
    %s92 = scalar_select %p89, %s90, %s91
    %p95 = pneg %p89
    %p96 = scmp.eq.s32.totalorder %s10, 7
    %p97 = por %p95, %p96
    %p98 = scmp.ne.s32.totalorder %s90, %s93
    %p99 = scmp.eq.s32.totalorder %s10, 0
    %p100 = por %p98, %p99
    %p101 = scmp.ne.s32.totalorder %s90, %s93
    %p102 = scmp.eq.s32.totalorder %s15, 7
    %p103 = por %p101, %p102
    %p104 = scmp.ne.s32.totalorder %s93, %s94
    %p105 = scmp.eq.s32.totalorder %s15, 0
    %p106 = por %p104, %p105
    %p107 = scmp.ne.s32.totalorder %s93, %s94
    %p108 = scmp.eq.s32.totalorder %s16, 7
    %p109 = por %p107, %p108
    %p111 = scmp.ne.s32.totalorder %s94, %s110
    %p112 = scmp.eq.s32.totalorder %s16, 0
    %p113 = por %p111, %p112
    %s114 = ssub.s32 %s17, %s29
    %p115 = scmp.eq.s32.totalorder %s114, 0
    %s117 = sadd.s32 %s116, 1
    %s118 = scalar_select %p115, %s116, %s117
    %p121 = pneg %p115
    %p122 = scmp.eq.s32.totalorder %s10, 7
    %p123 = por %p121, %p122
    %p124 = scmp.ne.s32.totalorder %s116, %s119
    %p125 = scmp.eq.s32.totalorder %s10, 0
    %p126 = por %p124, %p125
    %p127 = scmp.ne.s32.totalorder %s116, %s119
    %p128 = scmp.eq.s32.totalorder %s15, 7
    %p129 = por %p127, %p128
    %p130 = scmp.ne.s32.totalorder %s119, %s120
    %p131 = scmp.eq.s32.totalorder %s15, 0
    %p132 = por %p130, %p131
    %p133 = scmp.ne.s32.totalorder %s119, %s120
    %p134 = scmp.eq.s32.totalorder %s16, 7
    %p135 = por %p133, %p134
    %p137 = scmp.ne.s32.totalorder %s120, %s136
    %p138 = scmp.eq.s32.totalorder %s16, 0
    %p139 = por %p137, %p138
    %s140 = ssub.s32 %s17, %s29
    %s141 = ssub.s32 %s18, %s25
    %s142 = sor.u32 %s140, %s141
    %p143 = scmp.eq.s32.totalorder %s142, 0
    %s145 = sadd.s32 %s144, 1
    %s146 = scalar_select %p143, %s144, %s145
    %p149 = pneg %p143
    %p150 = scmp.eq.s32.totalorder %s10, 7
    %p151 = por %p149, %p150
    %p152 = scmp.ne.s32.totalorder %s144, %s147
    %p153 = scmp.eq.s32.totalorder %s10, 0
    %p154 = por %p152, %p153
    %p155 = scmp.ne.s32.totalorder %s144, %s147
    %p156 = scmp.eq.s32.totalorder %s15, 7
    %p157 = por %p155, %p156
    %p158 = scmp.ne.s32.totalorder %s147, %s148
    %p159 = scmp.eq.s32.totalorder %s15, 0
    %p160 = por %p158, %p159
    %p161 = scmp.ne.s32.totalorder %s147, %s148
    %p162 = scmp.eq.s32.totalorder %s16, 7
    %p163 = por %p161, %p162
    %p165 = scmp.ne.s32.totalorder %s148, %s164
    %p166 = scmp.eq.s32.totalorder %s16, 0
    %p167 = por %p165, %p166
    %p168 = scmp.le.s32.totalorder 1, %s10
    %p169 = scmp.lt.s32.totalorder %s10, 9
    %p170 = pnand %p168, %p169
    %p171 = pneg %p170
    // Predicated region
    $region9: #{wave_mae_forward.24} parent=5 // pred_check
      _
    $region10: #{wave_mae_forward.24} parent=5 // pred_check_branch
      %173 = sbr.rel (%p170) target = $region12
    $region11: #{wave_mae_forward.24} parent=5 // pred_region
      %s174 = ssub.s32 %s10, 1
    $region12: #{wave_mae_forward.24} parent=5 // pred_fallthru
      _
    %p175 = scmp.lt.s32.totalorder %s10, 8
    // Predicated region
    $region13: #{wave_mae_forward.24} parent=5 // pred_check
      %p176 = pneg %p175
    $region14: #{wave_mae_forward.24} parent=5 // pred_check_branch
      %178 = sbr.rel (%p176) target = $region16
    $region15: #{wave_mae_forward.24} parent=5 // pred_region
      // Predicated region
      $region17: #{wave_mae_forward.24} parent=15 // pred_check
        %p179 = pneg %p44
      $region18: #{wave_mae_forward.24} parent=15 // pred_check_branch
        %181 = sbr.rel (%p179) target = $region20
      $region19: #{wave_mae_forward.24} parent=15 // pred_region
        %p182 = scmp.lt.s32.totalorder %s17, 1
        %s183 = scalar_select %p182, %s17, 1
        %p184 = scmp.lt.s32.totalorder %s18, 3
        %s185 = scalar_select %p184, %s18, 3
        %s186 = smul.addr %s185, 2
        %s187 = smul.addr %s183, 8
        %s188 = sadd.s32 %s186, %s187
        %s189 = smul.addr %s188, 4
        %s190 = scalar_lea.vmem %s0, %s189
      $region20: #{wave_mae_forward.24} parent=15 // pred_fallthru
        _
      // Predicated region
      $region21: #{wave_mae_forward.24} parent=15 // pred_check
        %p191 = pneg %p72
      $region22: #{wave_mae_forward.24} parent=15 // pred_check_branch
        %193 = sbr.rel (%p191) target = $region24
      $region23: #{wave_mae_forward.24} parent=15 // pred_region
        %p194 = scmp.lt.s32.totalorder %s17, 1
        %s195 = scalar_select %p194, %s17, 1
        %p196 = scmp.lt.s32.totalorder %s18, 3
        %s197 = scalar_select %p196, %s18, 3
        %s198 = smul.addr %s197, 2
        %s199 = smul.addr %s195, 8
        %s200 = sadd.s32 %s198, %s199
        %s201 = smul.addr %s200, 4
        %s202 = scalar_lea.vmem %s1, %s201
      $region24: #{wave_mae_forward.24} parent=15 // pred_fallthru
        _
      // Predicated region
      $region25: #{wave_mae_forward.24} parent=15 // pred_check
        %p203 = pneg %p100
      $region26: #{wave_mae_forward.24} parent=15 // pred_check_branch
        %205 = sbr.rel (%p203) target = $region28
      $region27: #{wave_mae_forward.24} parent=15 // pred_region
        %p206 = scmp.lt.s32.totalorder %s17, 1
        %s207 = scalar_select %p206, %s17, 1
        %p208 = scmp.lt.s32.totalorder %s18, 3
        %s209 = scalar_select %p208, %s18, 3
        %s210 = smul.addr %s209, 2
        %s211 = smul.addr %s207, 8
        %s212 = sadd.s32 %s210, %s211
        %s213 = smul.addr %s212, 4
        %s214 = scalar_lea.vmem %s2, %s213
      $region28: #{wave_mae_forward.24} parent=15 // pred_fallthru
        _
      // Predicated region
      $region29: #{wave_mae_forward.24} parent=15 // pred_check
        %p215 = pneg %p126
      $region30: #{wave_mae_forward.24} parent=15 // pred_check_branch
        %217 = sbr.rel (%p215) target = $region32
      $region31: #{wave_mae_forward.24} parent=15 // pred_region
        %p218 = scmp.lt.s32.totalorder %s17, 1
        %s219 = scalar_select %p218, %s17, 1
        %s220 = scalar_lea.vmem %s3, %s219
      $region32: #{wave_mae_forward.24} parent=15 // pred_fallthru
        _
    $region16: #{wave_mae_forward.24} parent=5 // pred_fallthru
      _
    %p221 = scmp.le.s32.totalorder 1, %s10
    %p222 = scmp.lt.s32.totalorder %s10, 9
    %p223 = pnand %p221, %p222
    %p224 = pneg %p223
    // Predicated region
    $region33: #{wave_mae_forward.24} parent=5 // pred_check
      _
    $region34: #{wave_mae_forward.24} parent=5 // pred_check_branch
      %226 = sbr.rel (%p223) target = $region36
    $region35: #{wave_mae_forward.24} parent=5 // pred_region
      %s227 = ssub.s32 %s10, 1
      %p228 = scmp.lt.s32.totalorder %s19, 1
      %s229 = scalar_select %p228, %s19, 1
      %p230 = scmp.lt.s32.totalorder %s20, 3
      %s231 = scalar_select %p230, %s20, 3
      %s232 = smul.addr %s231, 2
      %s233 = smul.addr %s229, 8
      %s234 = sadd.s32 %s232, %s233
      %s235 = smul.addr %s234, 4
      %s236 = scalar_lea.vmem %s0, %s235
      %p237 = pneg %p50
      %p238 = pneg %p47
      %p239 = scmp.lt.s32.totalorder %s19, 1
      %s240 = scalar_select %p239, %s19, 1
      %p241 = scmp.lt.s32.totalorder %s20, 3
      %s242 = scalar_select %p241, %s20, 3
      %s243 = smul.addr %s242, 2
      %s244 = smul.addr %s240, 8
      %s245 = sadd.s32 %s243, %s244
      %s246 = smul.addr %s245, 4
      %s247 = scalar_lea.vmem %s1, %s246
      %p248 = pneg %p78
      %p249 = pneg %p75
      %p250 = scmp.lt.s32.totalorder %s19, 1
      %s251 = scalar_select %p250, %s19, 1
      %p252 = scmp.lt.s32.totalorder %s20, 3
      %s253 = scalar_select %p252, %s20, 3
      %s254 = smul.addr %s253, 2
      %s255 = smul.addr %s251, 8
      %s256 = sadd.s32 %s254, %s255
      %s257 = smul.addr %s256, 4
      %s258 = scalar_lea.vmem %s2, %s257
      %p259 = pneg %p106
      %p260 = pneg %p103
      %p261 = scmp.lt.s32.totalorder %s19, 1
      %s262 = scalar_select %p261, %s19, 1
      %s263 = scalar_lea.vmem %s3, %s262
      %p264 = pneg %p132
      %p265 = pneg %p129
      %p266 = pneg %p160
      %p267 = pneg %p157
      %p268 = scmp.lt.s32.totalorder %s19, 1
      %s269 = scalar_select %p268, %s19, 1
      %p270 = scmp.lt.s32.totalorder %s20, 3
      %s271 = scalar_select %p270, %s20, 3
      %s272 = smul.addr %s271, 2
      %s273 = smul.addr %s269, 8
      %s274 = sadd.s32 %s272, %s273
      %s275 = smul.addr %s274, 4
      %s276 = scalar_lea.vmem %s4, %s275
      %p277 = scmp.lt.s32.totalorder %s19, 1
      %s278 = scalar_select %p277, %s19, 1
      %p279 = scmp.lt.s32.totalorder %s20, 3
      %s280 = scalar_select %p279, %s20, 3
      %s281 = smul.addr %s280, 2
      %s282 = smul.addr %s278, 8
      %s283 = sadd.s32 %s281, %s282
      %s284 = smul.addr %s283, 4
      %s285 = scalar_lea.vmem %s0, %s284
      %p286 = scmp.lt.s32.totalorder %s19, 1
      %s287 = scalar_select %p286, %s19, 1
      %p288 = scmp.lt.s32.totalorder %s20, 3
      %s289 = scalar_select %p288, %s20, 3
      %s290 = smul.addr %s289, 2
      %s291 = smul.addr %s287, 8
      %s292 = sadd.s32 %s290, %s291
      %s293 = smul.addr %s292, 4
      %s294 = scalar_lea.vmem %s1, %s293
      %p295 = scmp.lt.s32.totalorder %s19, 1
      %s296 = scalar_select %p295, %s19, 1
      %p297 = scmp.lt.s32.totalorder %s20, 3
      %s298 = scalar_select %p297, %s20, 3
      %s299 = smul.addr %s298, 2
      %s300 = smul.addr %s296, 8
      %s301 = sadd.s32 %s299, %s300
      %s302 = smul.addr %s301, 4
      %s303 = scalar_lea.vmem %s2, %s302
      %p304 = scmp.lt.s32.totalorder %s19, 1
      %s305 = scalar_select %p304, %s19, 1
      %s306 = scalar_lea.vmem %s3, %s305
      %p307 = scmp.lt.s32.totalorder %s19, 1
      %s308 = scalar_select %p307, %s19, 1
      %p309 = scmp.lt.s32.totalorder %s20, 3
      %s310 = scalar_select %p309, %s20, 3
      %s311 = smul.addr %s310, 2
      %s312 = smul.addr %s308, 8
      %s313 = sadd.s32 %s311, %s312
      %s314 = smul.addr %s313, 4
      %s315 = scalar_lea.vmem %s4, %s314
      %v317 = vld [vmem:[%s285] sm:$0xf]
      %v318 = vld [vmem:[%s285 + $0x4] sm:$0xf]
      %v319 = vld [vmem:[%s294] sm:$0xf]
      %v320 = vld [vmem:[%s294 + $0x4] sm:$0xf]
      %v321 = vld [vmem:[%s303] sm:$0xf]
      %v322 = vld [vmem:[%s303 + $0x4] sm:$0xf]
      %v323 = vld [vmem:[%s306] sm:$0x1]
      %v325 = vlaneseq
      %v326 = vshrl.u32 %v325, 7
      %v327 = vsub.s32 0, %v326
      %v328 = vrot.slane %v323, %v327
      %v332 = vunpack.c.l.b16 %v317
      %v333 = vunpack.c.l.b16 %v318
      %v334 = vpack.c.b16 %v333, %v332
      %v337 = vunpack.c.l.b16 %v319
      %v338 = vunpack.c.l.b16 %v320
      %v339 = vpack.c.b16 %v338, %v337
      %vm340 = vcmask 261120
      %v342 = vsel %vm340, %v334, 0
      %v345 = vsel %vm340, %v339, 0
      %347 = vmatprep.subr.bf16.mxu0 0
      %348 = vmatpush1.bf16.xpose.msra.mxu0 0
      %349 = vmatprep.subr.bf16.mxu0 0
      %350 = vmatpush1.bf16.xpose.msra.mxu0 0
      %351 = vmatprep.subr.bf16.mxu0 0
      %352 = vmatpush1.bf16.xpose.msra.mxu0 0
      %353 = vmatprep.subr.bf16.mxu0 0
      %354 = vmatpush1.bf16.xpose.msra.mxu0 0
      %355 = vmatprep.subr.bf16.mxu0 0
      %356 = vmatpush1.bf16.xpose.msra.mxu0 0
      %357 = vmatprep.subr.bf16.mxu0 0
      %358 = vmatpush1.bf16.xpose.msra.mxu0 0
      %359 = vmatprep.subr.bf16.mxu0 0
      %360 = vmatpush1.bf16.xpose.msra.mxu0 0
      %361 = vmatprep.subr.bf16.mxu0 0
      %362 = vmatpush1.bf16.xpose.msra.mxu0 %v345
      %363 = vmatprep.subr.bf16.mxu0 0
      %364 = vmatpush2.bf16.xpose.msra.mxu0 0
      %365 = vmatprep.subr.bf16.mxu0 0
      %366 = vmatpush2.bf16.xpose.msra.mxu0 0
      %367 = vmatprep.subr.bf16.mxu0 0
      %368 = vmatpush2.bf16.xpose.msra.mxu0 0
      %369 = vmatprep.subr.bf16.mxu0 0
      %370 = vmatpush2.bf16.xpose.msra.mxu0 0
      %371 = vmatprep.subr.bf16.mxu0 0
      %372 = vmatpush2.bf16.xpose.msra.mxu0 0
      %373 = vmatprep.subr.bf16.mxu0 0
      %374 = vmatpush2.bf16.xpose.msra.mxu0 0
      %375 = vmatprep.subr.bf16.mxu0 0
      %376 = vmatpush2.bf16.xpose.msra.mxu0 0
      %377 = vmatprep.subr.bf16.mxu0 0
      %378 = vmatpush2.bf16.xpose.msra.mxu0 0
      %379 = vmatprep.mubr.bf16.mxu0 0
      %380 = vmatmul.mubr.bf16.gmra.mxu0 %v342
      %v381 = vpop.f32.mrf.mxu0
      %v382 = vadd.f32 %v328, %v381
      %v383 = vpop.f32.mrf.mxu0
      %v384 = vpop.f32.mrf.mxu0
      %v385 = vadd.f32 %v328, %v384
      %v386 = vpop.f32.mrf.mxu0
      %387 = vdwg.mxu0
      %vm388 = vcmask 130048
      %v389 = vsel %vm388, %v382, -inf
      %390 = vmax.xlane.f32.xlu0 %v389
      %v391 = vpop.xlane.xlu0 %390
      %v392 = vsel %vm388, %v385, -inf
      %393 = vmax.xlane.f32.xlu0 %v392
      %v394 = vpop.xlane.xlu0 %393
      %v395 = vsub.f32 %v382, %v391
      %v396 = vsub.f32 %v385, %v394
      %v397 = vmul.f32 %v395, 1.442695
      %v398 = vpow.pop %v397
      %v399 = vmul.f32 %v396, 1.442695
      %v400 = vpow.pop %v399
      %v401 = vsel %vm388, %v398, 0.0
      %402 = vadd.xlane.f32.xlu0 %v401
      %v403 = vpop.xlane.xlu0 %402
      %v404 = vsel %vm388, %v400, 0.0
      %405 = vadd.xlane.f32.xlu0 %v404
      %v406 = vpop.xlane.xlu0 %405
      %v407 = vrcp.pop %v403
      %v408 = vrcp.pop %v406
      %v409 = vmul.f32 %v398, %v407
      %v410 = vmul.f32 %v400, %v408
      %v411 = vpack.c.bf16 %v410, %v409
      %v414 = vunpack.c.l.b16 %v321
      %v415 = vunpack.c.l.b16 %v322
      %v416 = vpack.c.b16 %v415, %v414
      %v419 = vsel %vm388, %v411, 0
      %421 = vmatprep.subr.bf16.mxu0 0
      %422 = vmatpush1.bf16.msra.mxu0 0
      %423 = vmatprep.subr.bf16.mxu0 0
      %424 = vmatpush1.bf16.msra.mxu0 0
      %425 = vmatprep.subr.bf16.mxu0 0
      %426 = vmatpush1.bf16.msra.mxu0 0
      %427 = vmatprep.subr.bf16.mxu0 0
      %428 = vmatpush1.bf16.msra.mxu0 0
      %429 = vmatprep.subr.bf16.mxu0 0
      %430 = vmatpush1.bf16.msra.mxu0 0
      %431 = vmatprep.subr.bf16.mxu0 0
      %432 = vmatpush1.bf16.msra.mxu0 0
      %433 = vmatprep.subr.bf16.mxu0 0
      %434 = vmatpush1.bf16.msra.mxu0 0
      %435 = vmatprep.subr.bf16.mxu0 0
      %436 = vmatpush1.bf16.msra.mxu0 %v416
      %437 = vmatprep.subr.bf16.mxu0 0
      %438 = vmatpush2.bf16.msra.mxu0 0
      %439 = vmatprep.subr.bf16.mxu0 0
      %440 = vmatpush2.bf16.msra.mxu0 0
      %441 = vmatprep.subr.bf16.mxu0 0
      %442 = vmatpush2.bf16.msra.mxu0 0
      %443 = vmatprep.subr.bf16.mxu0 0
      %444 = vmatpush2.bf16.msra.mxu0 0
      %445 = vmatprep.subr.bf16.mxu0 0
      %446 = vmatpush2.bf16.msra.mxu0 0
      %447 = vmatprep.subr.bf16.mxu0 0
      %448 = vmatpush2.bf16.msra.mxu0 0
      %449 = vmatprep.subr.bf16.mxu0 0
      %450 = vmatpush2.bf16.msra.mxu0 0
      %451 = vmatprep.subr.bf16.mxu0 0
      %452 = vmatpush2.bf16.msra.mxu0 0
      %453 = vmatprep.mubr.bf16.mxu0 0
      %454 = vmatmul.mubr.bf16.gmra.mxu0 %v419
      %v455 = vpop.f32.mrf.mxu0
      %v456 = vadd.f32 0.0, %v455
      %v457 = vpop.f32.mrf.mxu0
      %v458 = vpop.f32.mrf.mxu0
      %v459 = vadd.f32 0.0, %v458
      %v460 = vpop.f32.mrf.mxu0
      %461 = vdwg.mxu0
      %v462 = vpack.c.bf16 %v459, %v456
      %v464 = vunpack.c.l.b16 %v462
      %v465 = vunpack.c.h.b16 %v462
      %v466 = vpack.c.b16 %v464, %v464
      %v467 = vpack.c.b16 %v465, %v465
      %vm470 = vcmask 257024
      %471 = vst.msk [vmem:[%s315] sm:$0xf] %vm470, %v466
      %472 = vst.msk [vmem:[%s315 + $0x4] sm:$0xf] %vm470, %v467
      %p473 = scmp.lt.s32.totalorder %s19, 1
      %s474 = scalar_select %p473, %s19, 1
      %p475 = scmp.lt.s32.totalorder %s20, 3
      %s476 = scalar_select %p475, %s20, 3
      %s477 = smul.addr %s476, 2
      %s478 = smul.addr %s474, 8
      %s479 = sadd.s32 %s477, %s478
      %s480 = smul.addr %s479, 4
      %s481 = scalar_lea.vmem %s4, %s480
      // Predicated region
      $region37: #{wave_mae_forward.24} parent=35 // pred_check
        %p482 = pneg %p157
      $region38: #{wave_mae_forward.24} parent=35 // pred_check_branch
        %484 = sbr.rel (%p482) target = $region40
      $region39: #{wave_mae_forward.24} parent=35 // pred_region
        _
      $region40: #{wave_mae_forward.24} parent=35 // pred_fallthru
        _
    $region36: #{wave_mae_forward.24} parent=5 // pred_fallthru
      _
    %p485 = scmp.le.s32.totalorder 2, %s10
    // Predicated region
    $region41: #{wave_mae_forward.24} parent=5 // pred_check
      %p486 = pneg %p485
    $region42: #{wave_mae_forward.24} parent=5 // pred_check_branch
      %488 = sbr.rel (%p486) target = $region44
    $region43: #{wave_mae_forward.24} parent=5 // pred_region
      %s489 = ssub.s32 %s10, 2
      // Predicated region
      $region45: #{wave_mae_forward.24} parent=43 // pred_check
        %p490 = pneg %p163
      $region46: #{wave_mae_forward.24} parent=43 // pred_check_branch
        %492 = sbr.rel (%p490) target = $region48
      $region47: #{wave_mae_forward.24} parent=43 // pred_region
        %p493 = scmp.lt.s32.totalorder %s21, 1
        %s494 = scalar_select %p493, %s21, 1
        %p495 = scmp.lt.s32.totalorder %s22, 3
        %s496 = scalar_select %p495, %s22, 3
        %s497 = smul.addr %s496, 2
        %s498 = smul.addr %s494, 8
        %s499 = sadd.s32 %s497, %s498
        %s500 = smul.addr %s499, 4
        %s501 = scalar_lea.vmem %s4, %s500
      $region48: #{wave_mae_forward.24} parent=43 // pred_fallthru
        _
    $region44: #{wave_mae_forward.24} parent=5 // pred_fallthru
      _
  $region6: #{wave_mae_forward.24} parent=0 // loop_footer
    %s14 = sadd.s32 1, %s10
  $region7: #{wave_mae_forward.24} parent=0 // loop_footer_branch
    %9 = sbr.rel target = $region3
  $region8: #{wave_mae_forward.24} parent=0 // loop_exit
    _

// kernel: wave_mae_forward.25
$region0: #{wave_mae_forward.25}
  #allocation0 [shape = 'u32[]', space=smem, size = 0x4, offset = 0x4, fixed_abs, tag = 'smem constant byte address 0x4 - core index']
  #allocation1 [shape = 'u32[144,128]{1,0:T(1,128)}', space=vmem, size = 0x12000, scoped, tag = 'internal scratch']
  %s0 = inlined_call_operand.vmem [shape: bf16[32,128], index: 0, kind: input, shape index: {}]
  %s1 = inlined_call_operand.vmem [shape: bf16[128,128], index: 1, kind: input, shape index: {}]
  %s2 = inlined_call_operand.vmem [shape: f32[1,128], index: 2, kind: input, shape index: {}]
  %s3 = inlined_call_operand.vmem [shape: f32[32,128], index: 3, kind: input, shape index: {}]
  %s4 = inlined_call_operand.vmem [shape: f32[32,128], index: 4, kind: output, shape index: {}]
  %s5 = sld [smem:[#allocation0]]
  $region26: #{wave_mae_forward.25} parent=0
    _
  %s7 = ssub.s32 1, %s5
  %s8 = scalar_select 0, %s7, %s5
  // Predicated region
  $region2: #{wave_mae_forward.25} parent=0 // pred_check
    _
  $region3: #{wave_mae_forward.25} parent=0 // pred_check_branch
    %10 = sbr.rel (0) target = $region5
  $region4: #{wave_mae_forward.25} parent=0 // pred_region
    _
  $region5: #{wave_mae_forward.25} parent=0 // pred_fallthru
    _
  // Predicated region
  $region6: #{wave_mae_forward.25} parent=0 // pred_check
    _
  $region7: #{wave_mae_forward.25} parent=0 // pred_check_branch
    %12 = sbr.rel (0) target = $region9
  $region8: #{wave_mae_forward.25} parent=0 // pred_region
    _
  $region9: #{wave_mae_forward.25} parent=0 // pred_fallthru
    _
  // Predicated region
  $region10: #{wave_mae_forward.25} parent=0 // pred_check
    _
  $region11: #{wave_mae_forward.25} parent=0 // pred_check_branch
    %14 = sbr.rel (0) target = $region13
  $region12: #{wave_mae_forward.25} parent=0 // pred_region
    _
  $region13: #{wave_mae_forward.25} parent=0 // pred_fallthru
    _
  // Predicated region
  $region14: #{wave_mae_forward.25} parent=0 // pred_check
    _
  $region15: #{wave_mae_forward.25} parent=0 // pred_check_branch
    %16 = sbr.rel (0) target = $region17
  $region16: #{wave_mae_forward.25} parent=0 // pred_region
    _
  $region17: #{wave_mae_forward.25} parent=0 // pred_fallthru
    _
  %v18 = vld [vmem:[%s0] sm:$0xf]
  %v19 = vld [vmem:[%s0 + $0x4] sm:$0xf]
  %v20 = vld [vmem:[%s0 + $0x8] sm:$0xf]
  %v21 = vld [vmem:[%s0 + $0xc] sm:$0xf]
  %v22 = vld [vmem:[%s1] sm:$0xf]
  %v23 = vld [vmem:[%s1 + $0x4] sm:$0xf]
  %v24 = vld [vmem:[%s1 + $0x8] sm:$0xf]
  %v25 = vld [vmem:[%s1 + $0xc] sm:$0xf]
  %v26 = vld [vmem:[%s1 + $0x10] sm:$0xf]
  %v27 = vld [vmem:[%s1 + $0x14] sm:$0xf]
  %v28 = vld [vmem:[%s1 + $0x18] sm:$0xf]
  %v29 = vld [vmem:[%s1 + $0x1c] sm:$0xf]
  %v30 = vld [vmem:[%s1 + $0x20] sm:$0xf]
  %v31 = vld [vmem:[%s1 + $0x24] sm:$0xf]
  %v32 = vld [vmem:[%s1 + $0x28] sm:$0xf]
  %v33 = vld [vmem:[%s1 + $0x2c] sm:$0xf]
  %v34 = vld [vmem:[%s1 + $0x30] sm:$0xf]
  %v35 = vld [vmem:[%s1 + $0x34] sm:$0xf]
  %v36 = vld [vmem:[%s1 + $0x38] sm:$0xf]
  %v37 = vld [vmem:[%s1 + $0x3c] sm:$0xf]
  %v38 = vld [vmem:[%s2] sm:$0x1]
  %v40 = vlaneseq
  %v41 = vshrl.u32 %v40, 7
  %v42 = vsub.s32 0, %v41
  %v43 = vrot.slane %v38, %v42
  %v49 = vunpack.c.l.b16 %v18
  %v50 = vunpack.c.l.b16 %v19
  %v51 = vunpack.c.l.b16 %v20
  %v52 = vunpack.c.l.b16 %v21
  %v53 = vpack.c.b16 %v50, %v49
  %v54 = vpack.c.b16 %v52, %v51
  %v73 = vunpack.c.l.b16 %v22
  %v74 = vunpack.c.l.b16 %v23
  %v75 = vunpack.c.l.b16 %v24
  %v76 = vunpack.c.l.b16 %v25
  %v77 = vunpack.c.l.b16 %v26
  %v78 = vunpack.c.l.b16 %v27
  %v79 = vunpack.c.l.b16 %v28
  %v80 = vunpack.c.l.b16 %v29
  %v81 = vunpack.c.l.b16 %v30
  %v82 = vunpack.c.l.b16 %v31
  %v83 = vunpack.c.l.b16 %v32
  %v84 = vunpack.c.l.b16 %v33
  %v85 = vunpack.c.l.b16 %v34
  %v86 = vunpack.c.l.b16 %v35
  %v87 = vunpack.c.l.b16 %v36
  %v88 = vunpack.c.l.b16 %v37
  %v89 = vpack.c.b16 %v74, %v73
  %v90 = vpack.c.b16 %v76, %v75
  %v91 = vpack.c.b16 %v78, %v77
  %v92 = vpack.c.b16 %v80, %v79
  %v93 = vpack.c.b16 %v82, %v81
  %v94 = vpack.c.b16 %v84, %v83
  %v95 = vpack.c.b16 %v86, %v85
  %v96 = vpack.c.b16 %v88, %v87
  %105 = vmatprep.subr.bf16.mxu0 0
  %106 = vmatpush1.bf16.msra.mxu0 %v96
  %107 = vmatprep.subr.bf16.mxu0 0
  %108 = vmatpush1.bf16.msra.mxu0 %v95
  %109 = vmatprep.subr.bf16.mxu0 0
  %110 = vmatpush1.bf16.msra.mxu0 %v94
  %111 = vmatprep.subr.bf16.mxu0 0
  %112 = vmatpush1.bf16.msra.mxu0 %v93
  %113 = vmatprep.subr.bf16.mxu0 0
  %114 = vmatpush1.bf16.msra.mxu0 %v92
  %115 = vmatprep.subr.bf16.mxu0 0
  %116 = vmatpush1.bf16.msra.mxu0 %v91
  %117 = vmatprep.subr.bf16.mxu0 0
  %118 = vmatpush1.bf16.msra.mxu0 %v90
  %119 = vmatprep.subr.bf16.mxu0 0
  %120 = vmatpush1.bf16.msra.mxu0 %v89
  %121 = vmatprep.subr.bf16.mxu0 0
  %122 = vmatpush2.bf16.msra.mxu0 0
  %123 = vmatprep.subr.bf16.mxu0 0
  %124 = vmatpush2.bf16.msra.mxu0 0
  %125 = vmatprep.subr.bf16.mxu0 0
  %126 = vmatpush2.bf16.msra.mxu0 0
  %127 = vmatprep.subr.bf16.mxu0 0
  %128 = vmatpush2.bf16.msra.mxu0 0
  %129 = vmatprep.subr.bf16.mxu0 0
  %130 = vmatpush2.bf16.msra.mxu0 0
  %131 = vmatprep.subr.bf16.mxu0 0
  %132 = vmatpush2.bf16.msra.mxu0 0
  %133 = vmatprep.subr.bf16.mxu0 0
  %134 = vmatpush2.bf16.msra.mxu0 0
  %135 = vmatprep.subr.bf16.mxu0 0
  %136 = vmatpush2.bf16.msra.mxu0 0
  %137 = vmatprep.mubr.bf16.mxu0 0
  %138 = vmatmul.mubr.bf16.gmra.mxu0 %v53
  %v139 = vpop.f32.mrf.mxu0
  %v140 = vadd.f32 %v43, %v139
  %v141 = vpop.f32.mrf.mxu0
  %v142 = vpop.f32.mrf.mxu0
  %v143 = vadd.f32 %v43, %v142
  %v144 = vpop.f32.mrf.mxu0
  %145 = vmatprep.mubr.bf16.mxu0 0
  %146 = vmatmul.mubr.bf16.gmra.mxu0 %v54
  %v147 = vpop.f32.mrf.mxu0
  %v148 = vadd.f32 %v43, %v147
  %v149 = vpop.f32.mrf.mxu0
  %v150 = vpop.f32.mrf.mxu0
  %v151 = vadd.f32 %v43, %v150
  %v152 = vpop.f32.mrf.mxu0
  %153 = vdwg.mxu0
  %v154 = vld [vmem:[%s3] sm:$0xff]
  %v155 = vld [vmem:[%s3 + $0x8] sm:$0xff]
  %v156 = vld [vmem:[%s3 + $0x10] sm:$0xff]
  %v157 = vld [vmem:[%s3 + $0x18] sm:$0xff]
  %v158 = vadd.f32 %v140, %v154
  %v159 = vadd.f32 %v143, %v155
  %v160 = vadd.f32 %v148, %v156
  %v161 = vadd.f32 %v151, %v157
  %162 = vst [vmem:[%s4] sm:$0xff] %v158
  %163 = vst [vmem:[%s4 + $0x8] sm:$0xff] %v159
  %164 = vst [vmem:[%s4 + $0x10] sm:$0xff] %v160
  %165 = vst [vmem:[%s4 + $0x18] sm:$0xff] %v161
  // Predicated region
  $region18: #{wave_mae_forward.25} parent=0 // pred_check
    _
  $region19: #{wave_mae_forward.25} parent=0 // pred_check_branch
    %167 = sbr.rel (0) target = $region21
  $region20: #{wave_mae_forward.25} parent=0 // pred_region
    _
  $region21: #{wave_mae_forward.25} parent=0 // pred_fallthru
    _
  // Predicated region
  $region22: #{wave_mae_forward.25} parent=0 // pred_check
    _
  $region23: #{wave_mae_forward.25} parent=0 // pred_check_branch
    %169 = sbr.rel (0) target = $region25
  $region24: #{wave_mae_forward.25} parent=0 // pred_region
    _
  $region25: #{wave_mae_forward.25} parent=0 // pred_fallthru
    _

// kernel: wave_mae_forward.28
$region0: #{wave_mae_forward.28}
  #allocation0 [shape = 'u32[]', space=smem, size = 0x4, offset = 0x4, fixed_abs, tag = 'smem constant byte address 0x4 - core index']
  #allocation1 [shape = 'u32[144,128]{1,0:T(1,128)}', space=vmem, size = 0x12000, scoped, tag = 'internal scratch']
  %s0 = inlined_call_operand.vmem [shape: f32[32,128], index: 0, kind: input, shape index: {}]
  %s1 = inlined_call_operand.hbm [shape: f32[1,128], index: 1, kind: input, shape index: {}]
  %s2 = inlined_call_operand.hbm [shape: f32[1,128], index: 2, kind: input, shape index: {}]
  %s3 = inlined_call_operand.vmem [shape: bf16[128,384], index: 3, kind: input, shape index: {}]
  %s4 = inlined_call_operand.vmem [shape: f32[1,384], index: 4, kind: input, shape index: {}]
  %s5 = inlined_call_operand.vmem [shape: bf16[32,384], index: 5, kind: output, shape index: {}]
  %s6 = sld [smem:[#allocation0]]
  $region139: #{wave_mae_forward.28} parent=0
    _
  %s8 = ssub.s32 1, %s6
  %s9 = scalar_select 0, %s8, %s6
  $region1: #{wave_mae_forward.28} parent=0
    #allocation2 [shape = 'u8[512]{0}', space=vmem, size = 0x400, scoped, tag = 'input window, operand 1, single buffered']
    #allocation3 [shape = 's32[2]{0}', space=sflag, size = 0x8, scoped, tag = 'scoped memory for wave_mae_forward.28']
    #allocation4 [shape = 'u8[512]{0}', space=vmem, size = 0x400, scoped, tag = 'input window, operand 2, single buffered']
    #allocation5 [shape = 's32[1]{0}', space=sflag, size = 0x4, scoped, tag = 'scoped memory for wave_mae_forward.28']
    #allocation6 [shape = 'u8[65536]{0}', space=vmem, size = 0x10000, scoped, tag = 'input window, operand 3']
    #allocation7 [shape = 'u8[16384]{0}', space=vmem, size = 0x4000, scoped, tag = 'output window, operand 0']
    %10 = vsyncpa [#allocation3], 0
    %11 = vsyncpa [#allocation5], 0
    loop: start=0, step=1, limit=5
    $region2: #{wave_mae_forward.28} parent=1 // loop_pre_header
      _
    $region3: #{wave_mae_forward.28} parent=1 // loop_header
      %s13 = sphi 0, %s17
      %p14 = scmp.ge.s32.totalorder %s13, 5
      %s20 = sphi 0, %s32
      %s21 = sphi 0, %s28
      %s22 = sphi 0, %s20
      %s23 = sphi 0, %s21
      %s24 = sphi 0, %s22
      %s25 = sphi 0, %s23
      %s35 = sphi 0, %s37
      %s38 = sphi 0, %s35
      %s39 = sphi 0, %s38
      %s55 = sphi 0, %s39
      %s59 = sphi 0, %s59
      %s61 = sphi 0, %s59
      %s62 = sphi 0, %s61
      %s76 = sphi 0, %s62
      %s80 = sphi 0, %s80
      %s82 = sphi 0, %s80
      %s83 = sphi 0, %s82
      %s97 = sphi 0, %s83
      %s103 = sphi 0, %s105
      %s106 = sphi 0, %s103
      %s107 = sphi 0, %s106
      %s123 = sphi 0, %s107
      %s129 = sphi 0, %s131
      %s132 = sphi 0, %s129
      %s133 = sphi 0, %s132
      %s149 = sphi 0, %s133
      %s157 = sphi 0, %s159
      %s160 = sphi 0, %s157
      %s161 = sphi 0, %s160
      %s177 = sphi 0, %s161
    $region4: #{wave_mae_forward.28} parent=1 // loop_header_branch
      %16 = sbr.rel (%p14) target = $region8
    $region5: #{wave_mae_forward.28} parent=1 // loop_body
      %s18 = ssub.s32 %s13, 1
      %s19 = ssub.s32 %s13, 2
      %s26 = sadd.s32 1, %s21
      %p27 = scmp.ge.s32.totalorder %s26, 3
      %s28 = scalar_select %p27, 0, %s26
      %s29 = sadd.s32 1, %s20
      %s30 = scalar_select %p27, %s29, %s20
      %p31 = scmp.ge.s32.totalorder %s30, 1
      %s32 = scalar_select %p31, 0, %s30
      %s33 = ssub.s32 %s20, %s32
      %p34 = scmp.eq.s32.totalorder %s33, 0
      %s36 = sadd.s32 %s35, 1
      %s37 = scalar_select %p34, %s35, %s36
      %p40 = pneg %p34
      %p41 = scmp.eq.s32.totalorder %s13, 2
      %p42 = por %p40, %p41
      %p43 = scmp.ne.s32.totalorder %s35, %s38
      %p44 = scmp.eq.s32.totalorder %s13, 0
      %p45 = por %p43, %p44
      %p46 = scmp.ne.s32.totalorder %s35, %s38
      %p47 = scmp.eq.s32.totalorder %s18, 2
      %p48 = por %p46, %p47
      %p49 = scmp.ne.s32.totalorder %s38, %s39
      %p50 = scmp.eq.s32.totalorder %s18, 0
      %p51 = por %p49, %p50
      %p52 = scmp.ne.s32.totalorder %s38, %s39
      %p53 = scmp.eq.s32.totalorder %s19, 2
      %p54 = por %p52, %p53
      %p56 = scmp.ne.s32.totalorder %s39, %s55
      %p57 = scmp.eq.s32.totalorder %s19, 0
      %p58 = por %p56, %p57
      %s60 = sadd.s32 %s59, 1
      %p63 = scmp.eq.s32.totalorder %s13, 2
      %p64 = scmp.ne.s32.totalorder %s59, %s61
      %p65 = scmp.eq.s32.totalorder %s13, 0
      %p66 = por %p64, %p65
      %p67 = scmp.ne.s32.totalorder %s59, %s61
      %p68 = scmp.eq.s32.totalorder %s18, 2
      %p69 = por %p67, %p68
      %p70 = scmp.ne.s32.totalorder %s61, %s62
      %p71 = scmp.eq.s32.totalorder %s18, 0
      %p72 = por %p70, %p71
      %p73 = scmp.ne.s32.totalorder %s61, %s62
      %p74 = scmp.eq.s32.totalorder %s19, 2
      %p75 = por %p73, %p74
      %p77 = scmp.ne.s32.totalorder %s62, %s76
      %p78 = scmp.eq.s32.totalorder %s19, 0
      %p79 = por %p77, %p78
      %s81 = sadd.s32 %s80, 1
      %p84 = scmp.eq.s32.totalorder %s13, 2
      %p85 = scmp.ne.s32.totalorder %s80, %s82
      %p86 = scmp.eq.s32.totalorder %s13, 0
      %p87 = por %p85, %p86
      %p88 = scmp.ne.s32.totalorder %s80, %s82
      %p89 = scmp.eq.s32.totalorder %s18, 2
      %p90 = por %p88, %p89
      %p91 = scmp.ne.s32.totalorder %s82, %s83
      %p92 = scmp.eq.s32.totalorder %s18, 0
      %p93 = por %p91, %p92
      %p94 = scmp.ne.s32.totalorder %s82, %s83
      %p95 = scmp.eq.s32.totalorder %s19, 2
      %p96 = por %p94, %p95
      %p98 = scmp.ne.s32.totalorder %s83, %s97
      %p99 = scmp.eq.s32.totalorder %s19, 0
      %p100 = por %p98, %p99
      %s101 = ssub.s32 %s21, %s28
      %p102 = scmp.eq.s32.totalorder %s101, 0
      %s104 = sadd.s32 %s103, 1
      %s105 = scalar_select %p102, %s103, %s104
      %p108 = pneg %p102
      %p109 = scmp.eq.s32.totalorder %s13, 2
      %p110 = por %p108, %p109
      %p111 = scmp.ne.s32.totalorder %s103, %s106
      %p112 = scmp.eq.s32.totalorder %s13, 0
      %p113 = por %p111, %p112
      %p114 = scmp.ne.s32.totalorder %s103, %s106
      %p115 = scmp.eq.s32.totalorder %s18, 2
      %p116 = por %p114, %p115
      %p117 = scmp.ne.s32.totalorder %s106, %s107
      %p118 = scmp.eq.s32.totalorder %s18, 0
      %p119 = por %p117, %p118
      %p120 = scmp.ne.s32.totalorder %s106, %s107
      %p121 = scmp.eq.s32.totalorder %s19, 2
      %p122 = por %p120, %p121
      %p124 = scmp.ne.s32.totalorder %s107, %s123
      %p125 = scmp.eq.s32.totalorder %s19, 0
      %p126 = por %p124, %p125
      %s127 = ssub.s32 %s21, %s28
      %p128 = scmp.eq.s32.totalorder %s127, 0
      %s130 = sadd.s32 %s129, 1
      %s131 = scalar_select %p128, %s129, %s130
      %p134 = pneg %p128
      %p135 = scmp.eq.s32.totalorder %s13, 2
      %p136 = por %p134, %p135
      %p137 = scmp.ne.s32.totalorder %s129, %s132
      %p138 = scmp.eq.s32.totalorder %s13, 0
      %p139 = por %p137, %p138
      %p140 = scmp.ne.s32.totalorder %s129, %s132
      %p141 = scmp.eq.s32.totalorder %s18, 2
      %p142 = por %p140, %p141
      %p143 = scmp.ne.s32.totalorder %s132, %s133
      %p144 = scmp.eq.s32.totalorder %s18, 0
      %p145 = por %p143, %p144
      %p146 = scmp.ne.s32.totalorder %s132, %s133
      %p147 = scmp.eq.s32.totalorder %s19, 2
      %p148 = por %p146, %p147
      %p150 = scmp.ne.s32.totalorder %s133, %s149
      %p151 = scmp.eq.s32.totalorder %s19, 0
      %p152 = por %p150, %p151
      %s153 = ssub.s32 %s20, %s32
      %s154 = ssub.s32 %s21, %s28
      %s155 = sor.u32 %s153, %s154
      %p156 = scmp.eq.s32.totalorder %s155, 0
      %s158 = sadd.s32 %s157, 1
      %s159 = scalar_select %p156, %s157, %s158
      %p162 = pneg %p156
      %p163 = scmp.eq.s32.totalorder %s13, 2
      %p164 = por %p162, %p163
      %p165 = scmp.ne.s32.totalorder %s157, %s160
      %p166 = scmp.eq.s32.totalorder %s13, 0
      %p167 = por %p165, %p166
      %p168 = scmp.ne.s32.totalorder %s157, %s160
      %p169 = scmp.eq.s32.totalorder %s18, 2
      %p170 = por %p168, %p169
      %p171 = scmp.ne.s32.totalorder %s160, %s161
      %p172 = scmp.eq.s32.totalorder %s18, 0
      %p173 = por %p171, %p172
      %p174 = scmp.ne.s32.totalorder %s160, %s161
      %p175 = scmp.eq.s32.totalorder %s19, 2
      %p176 = por %p174, %p175
      %p178 = scmp.ne.s32.totalorder %s161, %s177
      %p179 = scmp.eq.s32.totalorder %s19, 0
      %p180 = por %p178, %p179
      %p181 = scmp.le.s32.totalorder 1, %s13
      %p182 = scmp.lt.s32.totalorder %s13, 4
      %p183 = pnand %p181, %p182
      %p184 = pneg %p183
      // Predicated region
      $region9: #{wave_mae_forward.28} parent=5 // pred_check
        _
      $region10: #{wave_mae_forward.28} parent=5 // pred_check_branch
        %186 = sbr.rel (%p183) target = $region12
      $region11: #{wave_mae_forward.28} parent=5 // pred_region
        %s187 = ssub.s32 %s13, 1
        // Predicated region
        $region13: #{wave_mae_forward.28} parent=11 // pred_check
          %p188 = pneg %p51
        $region14: #{wave_mae_forward.28} parent=11 // pred_check_branch
          %190 = sbr.rel (%p188) target = $region16
        $region15: #{wave_mae_forward.28} parent=11 // pred_region
          %s191 = smul.u32 4, %s22
          %p192 = scmp.lt.s32.totalorder %s191, 3
          %s193 = scalar_select %p192, %s191, 3
          %s194 = smul.addr %s193, 8
          %s195 = scalar_lea.vmem %s0, %s194
          %s196 = smul.u32 4, %s22
        $region16: #{wave_mae_forward.28} parent=11 // pred_fallthru
          _
        // Predicated region
        $region17: #{wave_mae_forward.28} parent=11 // pred_check
          %p197 = pneg %p72
        $region18: #{wave_mae_forward.28} parent=11 // pred_check_branch
          %199 = sbr.rel (%p197) target = $region20
        $region19: #{wave_mae_forward.28} parent=11 // pred_region
          %s201 = ssub.s32 16, 16
          %202 = vsyncadd [#allocation3], %s201
          %s204 = sshll.u32 [#allocation2], 4
          %s205 = int_to_ptr.vmem [resolvable:$true] %s204
          %207 = dma.hbm_to_vmem [thread:$0]  %s1, 16, %s205, [#allocation3]
        $region20: #{wave_mae_forward.28} parent=11 // pred_fallthru
          _
        // Predicated region
        $region21: #{wave_mae_forward.28} parent=11 // pred_check
          %p208 = pneg %p93
        $region22: #{wave_mae_forward.28} parent=11 // pred_check_branch
          %210 = sbr.rel (%p208) target = $region24
        $region23: #{wave_mae_forward.28} parent=11 // pred_region
          %s212 = ssub.s32 16, 16
          %213 = vsyncadd [#allocation5], %s212
          %s215 = sshll.u32 [#allocation4], 4
          %s216 = int_to_ptr.vmem [resolvable:$true] %s215
          %218 = dma.hbm_to_vmem [thread:$0]  %s2, 16, %s216, [#allocation5]
        $region24: #{wave_mae_forward.28} parent=11 // pred_fallthru
          _
      $region12: #{wave_mae_forward.28} parent=5 // pred_fallthru
        _
      %p219 = scmp.lt.s32.totalorder %s13, 3
      // Predicated region
      $region25: #{wave_mae_forward.28} parent=5 // pred_check
        %p220 = pneg %p219
      $region26: #{wave_mae_forward.28} parent=5 // pred_check_branch
        %222 = sbr.rel (%p220) target = $region28
      $region27: #{wave_mae_forward.28} parent=5 // pred_region
        // Predicated region
        $region29: #{wave_mae_forward.28} parent=27 // pred_check
          %p223 = pneg %p113
        $region30: #{wave_mae_forward.28} parent=27 // pred_check_branch
          %225 = sbr.rel (%p223) target = $region32
        $region31: #{wave_mae_forward.28} parent=27 // pred_region
          %s226 = sand.u32 %s103, 1
          %s227 = sand.u32 %s103, 1
          %s228 = smul.addr %s227, 64
          %s229 = scalar_lea.vmem [#allocation6], %s228
          %s230 = smul.addr %s21, 4
          %s231 = scalar_lea.vmem %s3, %s230
          // Predicated region
          $region33: #{wave_mae_forward.28} parent=31 // pred_check
            _
          $region34: #{wave_mae_forward.28} parent=31 // pred_check_branch
            %233 = sbr.rel (0) target = $region36
          $region35: #{wave_mae_forward.28} parent=31 // pred_region
            // Predicated region
            $region37: #{wave_mae_forward.28} parent=35 // pred_check
              _
            $region38: #{wave_mae_forward.28} parent=35 // pred_check_branch
              %235 = sbr.rel target = $region40
            $region39: #{wave_mae_forward.28} parent=35 // pred_region
              // Predicated region
              $region52: #{wave_mae_forward.28} parent=39 // pred_check
                _
              $region53: #{wave_mae_forward.28} parent=39 // pred_check_branch
                %281 = sbr.rel (0) target = $region55
              $region54: #{wave_mae_forward.28} parent=39 // pred_region
                loop: start=0, step=1, limit=1
                $region56: #{wave_mae_forward.28} parent=54 // loop_pre_header
                  _
                $region57: #{wave_mae_forward.28} parent=54 // loop_header
                  %s283 = sphi 0, %s287
                  %p284 = scmp.ge.s32.totalorder %s283, 1
                  %s288 = sphi %s231, %s231
                  %s289 = sphi %s229, %s229
                $region58: #{wave_mae_forward.28} parent=54 // loop_header_branch
                  %286 = sbr.rel (%p284) target = $region62
                $region59: #{wave_mae_forward.28} parent=54 // loop_body
                  _
                $region60: #{wave_mae_forward.28} parent=54 // loop_footer
                  %s287 = sadd.s32 1, %s283
                $region61: #{wave_mae_forward.28} parent=54 // loop_footer_branch
                  %282 = sbr.rel target = $region57
                $region62: #{wave_mae_forward.28} parent=54 // loop_exit
                  _
                %s291 = ssub.s32 16, 1
                loop: start=0, step=1, limit=1
                $region63: #{wave_mae_forward.28} parent=54 // loop_pre_header
                  _
                $region64: #{wave_mae_forward.28} parent=54 // loop_header
                  %s293 = sphi 0, %s297
                  %p294 = scmp.ge.s32.totalorder %s293, 1
                  %s298 = sphi %s231, %s231
                  %s299 = sphi %s229, %s229
                $region65: #{wave_mae_forward.28} parent=54 // loop_header_branch
                  %296 = sbr.rel (%p294) target = $region69
                $region66: #{wave_mae_forward.28} parent=54 // loop_body
                  %v300 = vld [vmem:[%s298] sm:%s291]
                  %301 = vst [vmem:[%s299] sm:%s291] %v300
                  %v302 = vld [vmem:[%s298 + $0xc] sm:%s291]
                  %303 = vst [vmem:[%s299 + $0x4] sm:%s291] %v302
                  %v304 = vld [vmem:[%s298 + $0x18] sm:%s291]
                  %305 = vst [vmem:[%s299 + $0x8] sm:%s291] %v304
                  %v306 = vld [vmem:[%s298 + $0x24] sm:%s291]
                  %307 = vst [vmem:[%s299 + $0xc] sm:%s291] %v306
                  %v308 = vld [vmem:[%s298 + $0x30] sm:%s291]
                  %309 = vst [vmem:[%s299 + $0x10] sm:%s291] %v308
                  %v310 = vld [vmem:[%s298 + $0x3c] sm:%s291]
                  %311 = vst [vmem:[%s299 + $0x14] sm:%s291] %v310
                  %v312 = vld [vmem:[%s298 + $0x48] sm:%s291]
                  %313 = vst [vmem:[%s299 + $0x18] sm:%s291] %v312
                  %v314 = vld [vmem:[%s298 + $0x54] sm:%s291]
                  %315 = vst [vmem:[%s299 + $0x1c] sm:%s291] %v314
                  %v316 = vld [vmem:[%s298 + $0x60] sm:%s291]
                  %317 = vst [vmem:[%s299 + $0x20] sm:%s291] %v316
                  %v318 = vld [vmem:[%s298 + $0x6c] sm:%s291]
                  %319 = vst [vmem:[%s299 + $0x24] sm:%s291] %v318
                  %v320 = vld [vmem:[%s298 + $0x78] sm:%s291]
                  %321 = vst [vmem:[%s299 + $0x28] sm:%s291] %v320
                  %v322 = vld [vmem:[%s298 + $0x84] sm:%s291]
                  %323 = vst [vmem:[%s299 + $0x2c] sm:%s291] %v322
                  %v324 = vld [vmem:[%s298 + $0x90] sm:%s291]
                  %325 = vst [vmem:[%s299 + $0x30] sm:%s291] %v324
                  %v326 = vld [vmem:[%s298 + $0x9c] sm:%s291]
                  %327 = vst [vmem:[%s299 + $0x34] sm:%s291] %v326
                  %v328 = vld [vmem:[%s298 + $0xa8] sm:%s291]
                  %329 = vst [vmem:[%s299 + $0x38] sm:%s291] %v328
                  %v330 = vld [vmem:[%s298 + $0xb4] sm:%s291]
                  %331 = vst [vmem:[%s299 + $0x3c] sm:%s291] %v330
                $region67: #{wave_mae_forward.28} parent=54 // loop_footer
                  %s297 = sadd.s32 1, %s293
                $region68: #{wave_mae_forward.28} parent=54 // loop_footer_branch
                  %292 = sbr.rel target = $region64
                $region69: #{wave_mae_forward.28} parent=54 // loop_exit
                  _
              $region55: #{wave_mae_forward.28} parent=39 // pred_fallthru
                _
            $region40: #{wave_mae_forward.28} parent=35 // pred_fallthru
              _
            // Predicated region
            $region41: #{wave_mae_forward.28} parent=35 // pred_check
              _
            $region42: #{wave_mae_forward.28} parent=35 // pred_check_branch
              %237 = sbr.rel (0) target = $region44
            $region43: #{wave_mae_forward.28} parent=35 // pred_region
              %s239 = ssub.s32 16, 1
              loop: start=0, step=1, limit=1
              $region45: #{wave_mae_forward.28} parent=43 // loop_pre_header
                _
              $region46: #{wave_mae_forward.28} parent=43 // loop_header
                %s241 = sphi 0, %s245
                %p242 = scmp.ge.s32.totalorder %s241, 1
                %s246 = sphi %s231, %s231
                %s247 = sphi %s229, %s229
              $region47: #{wave_mae_forward.28} parent=43 // loop_header_branch
                %244 = sbr.rel (%p242) target = $region51
              $region48: #{wave_mae_forward.28} parent=43 // loop_body
                %v248 = vld [vmem:[%s246] sm:%s239]
                %249 = vst [vmem:[%s247] sm:%s239] %v248
                %v250 = vld [vmem:[%s246 + $0xc] sm:%s239]
                %251 = vst [vmem:[%s247 + $0x4] sm:%s239] %v250
                %v252 = vld [vmem:[%s246 + $0x18] sm:%s239]
                %253 = vst [vmem:[%s247 + $0x8] sm:%s239] %v252
                %v254 = vld [vmem:[%s246 + $0x24] sm:%s239]
                %255 = vst [vmem:[%s247 + $0xc] sm:%s239] %v254
                %v256 = vld [vmem:[%s246 + $0x30] sm:%s239]
                %257 = vst [vmem:[%s247 + $0x10] sm:%s239] %v256
                %v258 = vld [vmem:[%s246 + $0x3c] sm:%s239]
                %259 = vst [vmem:[%s247 + $0x14] sm:%s239] %v258
                %v260 = vld [vmem:[%s246 + $0x48] sm:%s239]
                %261 = vst [vmem:[%s247 + $0x18] sm:%s239] %v260
                %v262 = vld [vmem:[%s246 + $0x54] sm:%s239]
                %263 = vst [vmem:[%s247 + $0x1c] sm:%s239] %v262
                %v264 = vld [vmem:[%s246 + $0x60] sm:%s239]
                %265 = vst [vmem:[%s247 + $0x20] sm:%s239] %v264
                %v266 = vld [vmem:[%s246 + $0x6c] sm:%s239]
                %267 = vst [vmem:[%s247 + $0x24] sm:%s239] %v266
                %v268 = vld [vmem:[%s246 + $0x78] sm:%s239]
                %269 = vst [vmem:[%s247 + $0x28] sm:%s239] %v268
                %v270 = vld [vmem:[%s246 + $0x84] sm:%s239]
                %271 = vst [vmem:[%s247 + $0x2c] sm:%s239] %v270
                %v272 = vld [vmem:[%s246 + $0x90] sm:%s239]
                %273 = vst [vmem:[%s247 + $0x30] sm:%s239] %v272
                %v274 = vld [vmem:[%s246 + $0x9c] sm:%s239]
                %275 = vst [vmem:[%s247 + $0x34] sm:%s239] %v274
                %v276 = vld [vmem:[%s246 + $0xa8] sm:%s239]
                %277 = vst [vmem:[%s247 + $0x38] sm:%s239] %v276
                %v278 = vld [vmem:[%s246 + $0xb4] sm:%s239]
                %279 = vst [vmem:[%s247 + $0x3c] sm:%s239] %v278
              $region49: #{wave_mae_forward.28} parent=43 // loop_footer
                %s245 = sadd.s32 1, %s241
              $region50: #{wave_mae_forward.28} parent=43 // loop_footer_branch
                %240 = sbr.rel target = $region46
              $region51: #{wave_mae_forward.28} parent=43 // loop_exit
                _
            $region44: #{wave_mae_forward.28} parent=35 // pred_fallthru
              _
          $region36: #{wave_mae_forward.28} parent=31 // pred_fallthru
            _
          %332 = vnop
        $region32: #{wave_mae_forward.28} parent=27 // pred_fallthru
          _
        // Predicated region
        $region70: #{wave_mae_forward.28} parent=27 // pred_check
          %p333 = pneg %p139
        $region71: #{wave_mae_forward.28} parent=27 // pred_check_branch
          %335 = sbr.rel (%p333) target = $region73
        $region72: #{wave_mae_forward.28} parent=27 // pred_region
          %p336 = scmp.lt.s32.totalorder %s21, 2
          %s337 = scalar_select %p336, %s21, 2
          %s338 = scalar_lea.vmem %s4, %s337
        $region73: #{wave_mae_forward.28} parent=27 // pred_fallthru
          _
      $region28: #{wave_mae_forward.28} parent=5 // pred_fallthru
        _
      %p339 = scmp.le.s32.totalorder 1, %s13
      %p340 = scmp.lt.s32.totalorder %s13, 4
      %p341 = pnand %p339, %p340
      %p342 = pneg %p341
      // Predicated region
      $region74: #{wave_mae_forward.28} parent=5 // pred_check
        _
      $region75: #{wave_mae_forward.28} parent=5 // pred_check_branch
        %344 = sbr.rel (%p341) target = $region77
      $region76: #{wave_mae_forward.28} parent=5 // pred_region
        %s345 = ssub.s32 %s13, 1
        // Predicated region
        $region78: #{wave_mae_forward.28} parent=76 // pred_check
          %p346 = pneg %p72
        $region79: #{wave_mae_forward.28} parent=76 // pred_check_branch
          %348 = sbr.rel (%p346) target = $region81
        $region80: #{wave_mae_forward.28} parent=76 // pred_region
          %349 = dma.done [#allocation3], 16
        $region81: #{wave_mae_forward.28} parent=76 // pred_fallthru
          _
        // Predicated region
        $region82: #{wave_mae_forward.28} parent=76 // pred_check
          %p350 = pneg %p93
        $region83: #{wave_mae_forward.28} parent=76 // pred_check_branch
          %352 = sbr.rel (%p350) target = $region85
        $region84: #{wave_mae_forward.28} parent=76 // pred_region
          %353 = dma.done [#allocation5], 16
        $region85: #{wave_mae_forward.28} parent=76 // pred_fallthru
          _
        %s354 = sand.u32 %s106, 1
        %s355 = sand.u32 %s106, 1
        %s356 = smul.addr %s355, 64
        %s357 = scalar_lea.vmem [#allocation6], %s356
        // Predicated region
        $region86: #{wave_mae_forward.28} parent=76 // pred_check
          %p358 = pneg %p119
        $region87: #{wave_mae_forward.28} parent=76 // pred_check_branch
          %360 = sbr.rel (%p358) target = $region89
        $region88: #{wave_mae_forward.28} parent=76 // pred_region
          _
        $region89: #{wave_mae_forward.28} parent=76 // pred_fallthru
          _
        %s361 = smul.u32 4, %s22
        %p362 = scmp.lt.s32.totalorder %s361, 3
        %s363 = scalar_select %p362, %s361, 3
        %s364 = smul.addr %s363, 8
        %s365 = scalar_lea.vmem %s0, %s364
        %p366 = pneg %p51
        %p367 = pneg %p48
        %p368 = pneg %p72
        %p369 = pneg %p69
        %p370 = pneg %p93
        %p371 = pneg %p90
        %s372 = sand.u32 %s106, 1
        %s373 = sand.u32 %s106, 1
        %s374 = smul.addr %s373, 64
        %s375 = scalar_lea.vmem [#allocation6], %s374
        %p376 = pneg %p119
        %p377 = pneg %p116
        %p378 = scmp.lt.s32.totalorder %s23, 2
        %s379 = scalar_select %p378, %s23, 2
        %s380 = scalar_lea.vmem %s4, %s379
        %p381 = pneg %p145
        %p382 = pneg %p142
        %p383 = pneg %p173
        %p384 = pneg %p170
        %s385 = sand.u32 %s160, 1
        %s386 = sand.u32 %s160, 1
        %s387 = smul.addr %s386, 16
        %s388 = scalar_lea.vmem [#allocation7], %s387
        %s389 = smul.u32 4, %s22
        %p390 = scmp.lt.s32.totalorder %s389, 3
        %s391 = scalar_select %p390, %s389, 3
        %s392 = smul.addr %s391, 8
        %s393 = scalar_lea.vmem %s0, %s392
        %s394 = smul.u32 4, %s22
        %p395 = scmp.lt.s32.totalorder %s23, 2
        %s396 = scalar_select %p395, %s23, 2
        %s397 = scalar_lea.vmem %s4, %s396
        %s398 = smul.u32 4, %s22
        %v400 = vld [vmem:[%s393] sm:$0xff]
        %v401 = vld [vmem:[%s393 + $0x8] sm:$0xff]
        %v402 = vld [vmem:[%s393 + $0x10] sm:$0xff]
        %v403 = vld [vmem:[%s393 + $0x18] sm:$0xff]
        %404 = vadd.xlane.f32.xlu0 %v400
        %v405 = vpop.xlane.xlu0 %404
        %406 = vadd.xlane.f32.xlu0 %v401
        %v407 = vpop.xlane.xlu0 %406
        %408 = vadd.xlane.f32.xlu0 %v402
        %v409 = vpop.xlane.xlu0 %408
        %410 = vadd.xlane.f32.xlu0 %v403
        %v411 = vpop.xlane.xlu0 %410
        %v412 = vrcp.pop 128.0
        %v413 = vmul.f32 %v405, %v412
        %v414 = vmul.f32 %v407, %v412
        %v415 = vmul.f32 %v409, %v412
        %v416 = vmul.f32 %v411, %v412
        %v417 = vsub.f32 %v400, %v413
        %v418 = vsub.f32 %v401, %v414
        %v419 = vsub.f32 %v402, %v415
        %v420 = vsub.f32 %v403, %v416
        %v421 = vmul.f32 %v417, %v417
        %v422 = vmul.f32 %v418, %v418
        %v423 = vmul.f32 %v419, %v419
        %v424 = vmul.f32 %v420, %v420
        %425 = vadd.xlane.f32.xlu0 %v421
        %v426 = vpop.xlane.xlu0 %425
        %427 = vadd.xlane.f32.xlu0 %v422
        %v428 = vpop.xlane.xlu0 %427
        %429 = vadd.xlane.f32.xlu0 %v423
        %v430 = vpop.xlane.xlu0 %429
        %431 = vadd.xlane.f32.xlu0 %v424
        %v432 = vpop.xlane.xlu0 %431
        %v433 = vmul.f32 %v426, %v412
        %v434 = vmul.f32 %v428, %v412
        %v435 = vmul.f32 %v430, %v412
        %v436 = vmul.f32 %v432, %v412
        %v437 = vadd.f32 %v433, 1e-05
        %v438 = vadd.f32 %v434, 1e-05
        %v439 = vadd.f32 %v435, 1e-05
        %v440 = vadd.f32 %v436, 1e-05
        %v441 = vrsqrt.pop %v437
        %v442 = vrsqrt.pop %v438
        %v443 = vrsqrt.pop %v439
        %v444 = vrsqrt.pop %v440
        %v445 = vmul.f32 %v417, %v441
        %v446 = vmul.f32 %v418, %v442
        %v447 = vmul.f32 %v419, %v443
        %v448 = vmul.f32 %v420, %v444
        %v449 = vld [vmem:[#allocation2] sm:$0x1]
        %v451 = vlaneseq
        %v452 = vshrl.u32 %v451, 7
        %v453 = vsub.s32 0, %v452
        %v454 = vrot.slane %v449, %v453
        %v456 = vmul.f32 %v445, %v454
        %v457 = vmul.f32 %v446, %v454
        %v458 = vmul.f32 %v447, %v454
        %v459 = vmul.f32 %v448, %v454
        %v460 = vld [vmem:[#allocation4] sm:$0x1]
        %v462 = vlaneseq
        %v463 = vshrl.u32 %v462, 7
        %v464 = vsub.s32 0, %v463
        %v465 = vrot.slane %v460, %v464
        %v467 = vadd.f32 %v456, %v465
        %v468 = vadd.f32 %v457, %v465
        %v469 = vadd.f32 %v458, %v465
        %v470 = vadd.f32 %v459, %v465
        %v471 = vpack.c.bf16 %v468, %v467
        %v472 = vpack.c.bf16 %v470, %v469
        %v473 = vld [vmem:[%s357] sm:$0xf]
        %v474 = vld [vmem:[%s357 + $0x4] sm:$0xf]
        %v475 = vld [vmem:[%s357 + $0x8] sm:$0xf]
        %v476 = vld [vmem:[%s357 + $0xc] sm:$0xf]
        %v477 = vld [vmem:[%s357 + $0x10] sm:$0xf]
        %v478 = vld [vmem:[%s357 + $0x14] sm:$0xf]
        %v479 = vld [vmem:[%s357 + $0x18] sm:$0xf]
        %v480 = vld [vmem:[%s357 + $0x1c] sm:$0xf]
        %v481 = vld [vmem:[%s357 + $0x20] sm:$0xf]
        %v482 = vld [vmem:[%s357 + $0x24] sm:$0xf]
        %v483 = vld [vmem:[%s357 + $0x28] sm:$0xf]
        %v484 = vld [vmem:[%s357 + $0x2c] sm:$0xf]
        %v485 = vld [vmem:[%s357 + $0x30] sm:$0xf]
        %v486 = vld [vmem:[%s357 + $0x34] sm:$0xf]
        %v487 = vld [vmem:[%s357 + $0x38] sm:$0xf]
        %v488 = vld [vmem:[%s357 + $0x3c] sm:$0xf]
        %v489 = vld [vmem:[%s397] sm:$0x1]
        %v491 = vlaneseq
        %v492 = vshrl.u32 %v491, 7
        %v493 = vsub.s32 0, %v492
        %v494 = vrot.slane %v489, %v493
        %v512 = vunpack.c.l.b16 %v473
        %v513 = vunpack.c.l.b16 %v474
        %v514 = vunpack.c.l.b16 %v475
        %v515 = vunpack.c.l.b16 %v476
        %v516 = vunpack.c.l.b16 %v477
        %v517 = vunpack.c.l.b16 %v478
        %v518 = vunpack.c.l.b16 %v479
        %v519 = vunpack.c.l.b16 %v480
        %v520 = vunpack.c.l.b16 %v481
        %v521 = vunpack.c.l.b16 %v482
        %v522 = vunpack.c.l.b16 %v483
        %v523 = vunpack.c.l.b16 %v484
        %v524 = vunpack.c.l.b16 %v485
        %v525 = vunpack.c.l.b16 %v486
        %v526 = vunpack.c.l.b16 %v487
        %v527 = vunpack.c.l.b16 %v488
        %v528 = vpack.c.b16 %v513, %v512
        %v529 = vpack.c.b16 %v515, %v514
        %v530 = vpack.c.b16 %v517, %v516
        %v531 = vpack.c.b16 %v519, %v518
        %v532 = vpack.c.b16 %v521, %v520
        %v533 = vpack.c.b16 %v523, %v522
        %v534 = vpack.c.b16 %v525, %v524
        %v535 = vpack.c.b16 %v527, %v526
        %544 = vmatprep.subr.bf16.mxu0 0
        %545 = vmatpush1.bf16.msra.mxu0 %v535
        %546 = vmatprep.subr.bf16.mxu0 0
        %547 = vmatpush1.bf16.msra.mxu0 %v534
        %548 = vmatprep.subr.bf16.mxu0 0
        %549 = vmatpush1.bf16.msra.mxu0 %v533
        %550 = vmatprep.subr.bf16.mxu0 0
        %551 = vmatpush1.bf16.msra.mxu0 %v532
        %552 = vmatprep.subr.bf16.mxu0 0
        %553 = vmatpush1.bf16.msra.mxu0 %v531
        %554 = vmatprep.subr.bf16.mxu0 0
        %555 = vmatpush1.bf16.msra.mxu0 %v530
        %556 = vmatprep.subr.bf16.mxu0 0
        %557 = vmatpush1.bf16.msra.mxu0 %v529
        %558 = vmatprep.subr.bf16.mxu0 0
        %559 = vmatpush1.bf16.msra.mxu0 %v528
        %560 = vmatprep.subr.bf16.mxu0 0
        %561 = vmatpush2.bf16.msra.mxu0 0
        %562 = vmatprep.subr.bf16.mxu0 0
        %563 = vmatpush2.bf16.msra.mxu0 0
        %564 = vmatprep.subr.bf16.mxu0 0
        %565 = vmatpush2.bf16.msra.mxu0 0
        %566 = vmatprep.subr.bf16.mxu0 0
        %567 = vmatpush2.bf16.msra.mxu0 0
        %568 = vmatprep.subr.bf16.mxu0 0
        %569 = vmatpush2.bf16.msra.mxu0 0
        %570 = vmatprep.subr.bf16.mxu0 0
        %571 = vmatpush2.bf16.msra.mxu0 0
        %572 = vmatprep.subr.bf16.mxu0 0
        %573 = vmatpush2.bf16.msra.mxu0 0
        %574 = vmatprep.subr.bf16.mxu0 0
        %575 = vmatpush2.bf16.msra.mxu0 0
        %576 = vmatprep.mubr.bf16.mxu0 0
        %577 = vmatmul.mubr.bf16.gmra.mxu0 %v471
        %v578 = vpop.f32.mrf.mxu0
        %v579 = vadd.f32 %v494, %v578
        %v580 = vpop.f32.mrf.mxu0
        %v581 = vpop.f32.mrf.mxu0
        %v582 = vadd.f32 %v494, %v581
        %v583 = vpop.f32.mrf.mxu0
        %584 = vmatprep.mubr.bf16.mxu0 0
        %585 = vmatmul.mubr.bf16.gmra.mxu0 %v472
        %v586 = vpop.f32.mrf.mxu0
        %v587 = vadd.f32 %v494, %v586
        %v588 = vpop.f32.mrf.mxu0
        %v589 = vpop.f32.mrf.mxu0
        %v590 = vadd.f32 %v494, %v589
        %v591 = vpop.f32.mrf.mxu0
        %592 = vdwg.mxu0
        %v593 = vpack.c.bf16 %v582, %v579
        %v594 = vpack.c.bf16 %v590, %v587
        %v597 = vunpack.c.l.b16 %v593
        %v598 = vunpack.c.h.b16 %v593
        %v599 = vunpack.c.l.b16 %v594
        %v600 = vunpack.c.h.b16 %v594
        %v601 = vpack.c.b16 %v597, %v597
        %v602 = vpack.c.b16 %v598, %v598
        %v603 = vpack.c.b16 %v599, %v599
        %v604 = vpack.c.b16 %v600, %v600
        %609 = vst [vmem:[%s388] sm:$0xf] %v601
        %610 = vst [vmem:[%s388 + $0x4] sm:$0xf] %v602
        %611 = vst [vmem:[%s388 + $0x8] sm:$0xf] %v603
        %612 = vst [vmem:[%s388 + $0xc] sm:$0xf] %v604
        %s613 = sand.u32 %s160, 1
        %s614 = sand.u32 %s160, 1
        %s615 = smul.addr %s614, 16
        %s616 = scalar_lea.vmem [#allocation7], %s615
        // Predicated region
        $region90: #{wave_mae_forward.28} parent=76 // pred_check
          %p617 = pneg %p170
        $region91: #{wave_mae_forward.28} parent=76 // pred_check_branch
          %619 = sbr.rel (%p617) target = $region93
        $region92: #{wave_mae_forward.28} parent=76 // pred_region
          %s620 = smul.u32 4, %s22
          %s621 = smul.addr %s620, 3
          %s622 = sadd.s32 %s23, %s621
          %s623 = smul.addr %s622, 4
          %s624 = scalar_lea.vmem %s5, %s623
          // Predicated region
          $region94: #{wave_mae_forward.28} parent=92 // pred_check
            _
          $region95: #{wave_mae_forward.28} parent=92 // pred_check_branch
            %626 = sbr.rel (0) target = $region97
          $region96: #{wave_mae_forward.28} parent=92 // pred_region
            // Predicated region
            $region98: #{wave_mae_forward.28} parent=96 // pred_check
              _
            $region99: #{wave_mae_forward.28} parent=96 // pred_check_branch
              %628 = sbr.rel target = $region101
            $region100: #{wave_mae_forward.28} parent=96 // pred_region
              // Predicated region
              $region113: #{wave_mae_forward.28} parent=100 // pred_check
                _
              $region114: #{wave_mae_forward.28} parent=100 // pred_check_branch
                %650 = sbr.rel (0) target = $region116
              $region115: #{wave_mae_forward.28} parent=100 // pred_region
                loop: start=0, step=1, limit=1
                $region117: #{wave_mae_forward.28} parent=115 // loop_pre_header
                  _
                $region118: #{wave_mae_forward.28} parent=115 // loop_header
                  %s652 = sphi 0, %s656
                  %p653 = scmp.ge.s32.totalorder %s652, 1
                  %s657 = sphi %s616, %s616
                  %s658 = sphi %s624, %s624
                $region119: #{wave_mae_forward.28} parent=115 // loop_header_branch
                  %655 = sbr.rel (%p653) target = $region123
                $region120: #{wave_mae_forward.28} parent=115 // loop_body
                  _
                $region121: #{wave_mae_forward.28} parent=115 // loop_footer
                  %s656 = sadd.s32 1, %s652
                $region122: #{wave_mae_forward.28} parent=115 // loop_footer_branch
                  %651 = sbr.rel target = $region118
                $region123: #{wave_mae_forward.28} parent=115 // loop_exit
                  _
                %s660 = ssub.s32 16, 1
                loop: start=0, step=1, limit=1
                $region124: #{wave_mae_forward.28} parent=115 // loop_pre_header
                  _
                $region125: #{wave_mae_forward.28} parent=115 // loop_header
                  %s662 = sphi 0, %s666
                  %p663 = scmp.ge.s32.totalorder %s662, 1
                  %s667 = sphi %s616, %s616
                  %s668 = sphi %s624, %s624
                $region126: #{wave_mae_forward.28} parent=115 // loop_header_branch
                  %665 = sbr.rel (%p663) target = $region130
                $region127: #{wave_mae_forward.28} parent=115 // loop_body
                  %v669 = vld [vmem:[%s667] sm:%s660]
                  %670 = vst [vmem:[%s668] sm:%s660] %v669
                  %v671 = vld [vmem:[%s667 + $0x4] sm:%s660]
                  %672 = vst [vmem:[%s668 + $0xc] sm:%s660] %v671
                  %v673 = vld [vmem:[%s667 + $0x8] sm:%s660]
                  %674 = vst [vmem:[%s668 + $0x18] sm:%s660] %v673
                  %v675 = vld [vmem:[%s667 + $0xc] sm:%s660]
                  %676 = vst [vmem:[%s668 + $0x24] sm:%s660] %v675
                $region128: #{wave_mae_forward.28} parent=115 // loop_footer
                  %s666 = sadd.s32 1, %s662
                $region129: #{wave_mae_forward.28} parent=115 // loop_footer_branch
                  %661 = sbr.rel target = $region125
                $region130: #{wave_mae_forward.28} parent=115 // loop_exit
                  _
              $region116: #{wave_mae_forward.28} parent=100 // pred_fallthru
                _
            $region101: #{wave_mae_forward.28} parent=96 // pred_fallthru
              _
            // Predicated region
            $region102: #{wave_mae_forward.28} parent=96 // pred_check
              _
            $region103: #{wave_mae_forward.28} parent=96 // pred_check_branch
              %630 = sbr.rel (0) target = $region105
            $region104: #{wave_mae_forward.28} parent=96 // pred_region
              %s632 = ssub.s32 16, 1
              loop: start=0, step=1, limit=1
              $region106: #{wave_mae_forward.28} parent=104 // loop_pre_header
                _
              $region107: #{wave_mae_forward.28} parent=104 // loop_header
                %s634 = sphi 0, %s638
                %p635 = scmp.ge.s32.totalorder %s634, 1
                %s639 = sphi %s616, %s616
                %s640 = sphi %s624, %s624
              $region108: #{wave_mae_forward.28} parent=104 // loop_header_branch
                %637 = sbr.rel (%p635) target = $region112
              $region109: #{wave_mae_forward.28} parent=104 // loop_body
                %v641 = vld [vmem:[%s639] sm:%s632]
                %642 = vst [vmem:[%s640] sm:%s632] %v641
                %v643 = vld [vmem:[%s639 + $0x4] sm:%s632]
                %644 = vst [vmem:[%s640 + $0xc] sm:%s632] %v643
                %v645 = vld [vmem:[%s639 + $0x8] sm:%s632]
                %646 = vst [vmem:[%s640 + $0x18] sm:%s632] %v645
                %v647 = vld [vmem:[%s639 + $0xc] sm:%s632]
                %648 = vst [vmem:[%s640 + $0x24] sm:%s632] %v647
              $region110: #{wave_mae_forward.28} parent=104 // loop_footer
                %s638 = sadd.s32 1, %s634
              $region111: #{wave_mae_forward.28} parent=104 // loop_footer_branch
                %633 = sbr.rel target = $region107
              $region112: #{wave_mae_forward.28} parent=104 // loop_exit
                _
            $region105: #{wave_mae_forward.28} parent=96 // pred_fallthru
              _
          $region97: #{wave_mae_forward.28} parent=92 // pred_fallthru
            _
          %677 = vnop
        $region93: #{wave_mae_forward.28} parent=76 // pred_fallthru
          _
      $region77: #{wave_mae_forward.28} parent=5 // pred_fallthru
        _
      %p678 = scmp.le.s32.totalorder 2, %s13
      // Predicated region
      $region131: #{wave_mae_forward.28} parent=5 // pred_check
        %p679 = pneg %p678
      $region132: #{wave_mae_forward.28} parent=5 // pred_check_branch
        %681 = sbr.rel (%p679) target = $region134
      $region133: #{wave_mae_forward.28} parent=5 // pred_region
        %s682 = ssub.s32 %s13, 2
        // Predicated region
        $region135: #{wave_mae_forward.28} parent=133 // pred_check
          %p683 = pneg %p176
        $region136: #{wave_mae_forward.28} parent=133 // pred_check_branch
          %685 = sbr.rel (%p683) target = $region138
        $region137: #{wave_mae_forward.28} parent=133 // pred_region
          %s686 = sand.u32 %s161, 1
          %s687 = sand.u32 %s161, 1
          %s688 = smul.addr %s687, 16
          %s689 = scalar_lea.vmem [#allocation7], %s688
        $region138: #{wave_mae_forward.28} parent=133 // pred_fallthru
          _
      $region134: #{wave_mae_forward.28} parent=5 // pred_fallthru
        _
    $region6: #{wave_mae_forward.28} parent=1 // loop_footer
      %s17 = sadd.s32 1, %s13
    $region7: #{wave_mae_forward.28} parent=1 // loop_footer_branch
      %12 = sbr.rel target = $region3
    $region8: #{wave_mae_forward.28} parent=1 // loop_exit
      _
    %690 = vsyncpa [#allocation3], 1
    %s691 = scalar_lea.sflag [#allocation3], 1
    %692 = vsyncpa %s691, 1
    %693 = vsyncpa [#allocation5], 1

// kernel: wave_mae_forward.26
$region0: #{wave_mae_forward.26}
  #allocation0 [shape = 'u32[]', space=smem, size = 0x4, offset = 0x4, fixed_abs, tag = 'smem constant byte address 0x4 - core index']
  #allocation1 [shape = 'u32[144,128]{1,0:T(1,128)}', space=vmem, size = 0x12000, scoped, tag = 'internal scratch']
  %s0 = inlined_call_operand.vmem [shape: f32[32,128], index: 0, kind: input, shape index: {}]
  %s1 = inlined_call_operand.vmem [shape: f32[1,128], index: 1, kind: input, shape index: {}]
  %s2 = inlined_call_operand.hbm [shape: f32[1,128], index: 2, kind: input, shape index: {}]
  %s3 = inlined_call_operand.vmem [shape: bf16[128,512], index: 3, kind: input, shape index: {}]
  %s4 = inlined_call_operand.vmem [shape: f32[1,512], index: 4, kind: input, shape index: {}]
  %s5 = inlined_call_operand.vmem [shape: bf16[32,512], index: 5, kind: output, shape index: {}]
  %s6 = sld [smem:[#allocation0]]
  $region129: #{wave_mae_forward.26} parent=0
    _
  %s8 = ssub.s32 1, %s6
  %s9 = scalar_select 0, %s8, %s6
  $region1: #{wave_mae_forward.26} parent=0
    #allocation2 [shape = 'u8[512]{0}', space=vmem, size = 0x400, scoped, tag = 'input window, operand 2, single buffered']
    #allocation3 [shape = 's32[2]{0}', space=sflag, size = 0x8, scoped, tag = 'scoped memory for wave_mae_forward.26']
    #allocation4 [shape = 'u8[131072]{0}', space=vmem, size = 0x20000, scoped, tag = 'input window, operand 3']
    #allocation5 [shape = 'u8[32768]{0}', space=vmem, size = 0x8000, scoped, tag = 'output window, operand 0']
    %10 = vsyncpa [#allocation3], 0
    loop: start=0, step=1, limit=4
    $region2: #{wave_mae_forward.26} parent=1 // loop_pre_header
      _
    $region3: #{wave_mae_forward.26} parent=1 // loop_header
      %s12 = sphi 0, %s16
      %p13 = scmp.ge.s32.totalorder %s12, 4
      %s19 = sphi 0, %s31
      %s20 = sphi 0, %s27
      %s21 = sphi 0, %s19
      %s22 = sphi 0, %s20
      %s23 = sphi 0, %s21
      %s24 = sphi 0, %s22
      %s34 = sphi 0, %s36
      %s37 = sphi 0, %s34
      %s38 = sphi 0, %s37
      %s54 = sphi 0, %s38
      %s58 = sphi 0, %s58
      %s60 = sphi 0, %s58
      %s61 = sphi 0, %s60
      %s75 = sphi 0, %s61
      %s79 = sphi 0, %s79
      %s81 = sphi 0, %s79
      %s82 = sphi 0, %s81
      %s96 = sphi 0, %s82
      %s102 = sphi 0, %s104
      %s105 = sphi 0, %s102
      %s106 = sphi 0, %s105
      %s122 = sphi 0, %s106
      %s128 = sphi 0, %s130
      %s131 = sphi 0, %s128
      %s132 = sphi 0, %s131
      %s148 = sphi 0, %s132
      %s156 = sphi 0, %s158
      %s159 = sphi 0, %s156
      %s160 = sphi 0, %s159
      %s176 = sphi 0, %s160
    $region4: #{wave_mae_forward.26} parent=1 // loop_header_branch
      %15 = sbr.rel (%p13) target = $region8
    $region5: #{wave_mae_forward.26} parent=1 // loop_body
      %s17 = ssub.s32 %s12, 1
      %s18 = ssub.s32 %s12, 2
      %s25 = sadd.s32 1, %s20
      %p26 = scmp.ge.s32.totalorder %s25, 2
      %s27 = scalar_select %p26, 0, %s25
      %s28 = sadd.s32 1, %s19
      %s29 = scalar_select %p26, %s28, %s19
      %p30 = scmp.ge.s32.totalorder %s29, 1
      %s31 = scalar_select %p30, 0, %s29
      %s32 = ssub.s32 %s19, %s31
      %p33 = scmp.eq.s32.totalorder %s32, 0
      %s35 = sadd.s32 %s34, 1
      %s36 = scalar_select %p33, %s34, %s35
      %p39 = pneg %p33
      %p40 = scmp.eq.s32.totalorder %s12, 1
      %p41 = por %p39, %p40
      %p42 = scmp.ne.s32.totalorder %s34, %s37
      %p43 = scmp.eq.s32.totalorder %s12, 0
      %p44 = por %p42, %p43
      %p45 = scmp.ne.s32.totalorder %s34, %s37
      %p46 = scmp.eq.s32.totalorder %s17, 1
      %p47 = por %p45, %p46
      %p48 = scmp.ne.s32.totalorder %s37, %s38
      %p49 = scmp.eq.s32.totalorder %s17, 0
      %p50 = por %p48, %p49
      %p51 = scmp.ne.s32.totalorder %s37, %s38
      %p52 = scmp.eq.s32.totalorder %s18, 1
      %p53 = por %p51, %p52
      %p55 = scmp.ne.s32.totalorder %s38, %s54
      %p56 = scmp.eq.s32.totalorder %s18, 0
      %p57 = por %p55, %p56
      %s59 = sadd.s32 %s58, 1
      %p62 = scmp.eq.s32.totalorder %s12, 1
      %p63 = scmp.ne.s32.totalorder %s58, %s60
      %p64 = scmp.eq.s32.totalorder %s12, 0
      %p65 = por %p63, %p64
      %p66 = scmp.ne.s32.totalorder %s58, %s60
      %p67 = scmp.eq.s32.totalorder %s17, 1
      %p68 = por %p66, %p67
      %p69 = scmp.ne.s32.totalorder %s60, %s61
      %p70 = scmp.eq.s32.totalorder %s17, 0
      %p71 = por %p69, %p70
      %p72 = scmp.ne.s32.totalorder %s60, %s61
      %p73 = scmp.eq.s32.totalorder %s18, 1
      %p74 = por %p72, %p73
      %p76 = scmp.ne.s32.totalorder %s61, %s75
      %p77 = scmp.eq.s32.totalorder %s18, 0
      %p78 = por %p76, %p77
      %s80 = sadd.s32 %s79, 1
      %p83 = scmp.eq.s32.totalorder %s12, 1
      %p84 = scmp.ne.s32.totalorder %s79, %s81
      %p85 = scmp.eq.s32.totalorder %s12, 0
      %p86 = por %p84, %p85
      %p87 = scmp.ne.s32.totalorder %s79, %s81
      %p88 = scmp.eq.s32.totalorder %s17, 1
      %p89 = por %p87, %p88
      %p90 = scmp.ne.s32.totalorder %s81, %s82
      %p91 = scmp.eq.s32.totalorder %s17, 0
      %p92 = por %p90, %p91
      %p93 = scmp.ne.s32.totalorder %s81, %s82
      %p94 = scmp.eq.s32.totalorder %s18, 1
      %p95 = por %p93, %p94
      %p97 = scmp.ne.s32.totalorder %s82, %s96
      %p98 = scmp.eq.s32.totalorder %s18, 0
      %p99 = por %p97, %p98
      %s100 = ssub.s32 %s20, %s27
      %p101 = scmp.eq.s32.totalorder %s100, 0
      %s103 = sadd.s32 %s102, 1
      %s104 = scalar_select %p101, %s102, %s103
      %p107 = pneg %p101
      %p108 = scmp.eq.s32.totalorder %s12, 1
      %p109 = por %p107, %p108
      %p110 = scmp.ne.s32.totalorder %s102, %s105
      %p111 = scmp.eq.s32.totalorder %s12, 0
      %p112 = por %p110, %p111
      %p113 = scmp.ne.s32.totalorder %s102, %s105
      %p114 = scmp.eq.s32.totalorder %s17, 1
      %p115 = por %p113, %p114
      %p116 = scmp.ne.s32.totalorder %s105, %s106
      %p117 = scmp.eq.s32.totalorder %s17, 0
      %p118 = por %p116, %p117
      %p119 = scmp.ne.s32.totalorder %s105, %s106
      %p120 = scmp.eq.s32.totalorder %s18, 1
      %p121 = por %p119, %p120
      %p123 = scmp.ne.s32.totalorder %s106, %s122
      %p124 = scmp.eq.s32.totalorder %s18, 0
      %p125 = por %p123, %p124
      %s126 = ssub.s32 %s20, %s27
      %p127 = scmp.eq.s32.totalorder %s126, 0
      %s129 = sadd.s32 %s128, 1
      %s130 = scalar_select %p127, %s128, %s129
      %p133 = pneg %p127
      %p134 = scmp.eq.s32.totalorder %s12, 1
      %p135 = por %p133, %p134
      %p136 = scmp.ne.s32.totalorder %s128, %s131
      %p137 = scmp.eq.s32.totalorder %s12, 0
      %p138 = por %p136, %p137
      %p139 = scmp.ne.s32.totalorder %s128, %s131
      %p140 = scmp.eq.s32.totalorder %s17, 1
      %p141 = por %p139, %p140
      %p142 = scmp.ne.s32.totalorder %s131, %s132
      %p143 = scmp.eq.s32.totalorder %s17, 0
      %p144 = por %p142, %p143
      %p145 = scmp.ne.s32.totalorder %s131, %s132
      %p146 = scmp.eq.s32.totalorder %s18, 1
      %p147 = por %p145, %p146
      %p149 = scmp.ne.s32.totalorder %s132, %s148
      %p150 = scmp.eq.s32.totalorder %s18, 0
      %p151 = por %p149, %p150
      %s152 = ssub.s32 %s19, %s31
      %s153 = ssub.s32 %s20, %s27
      %s154 = sor.u32 %s152, %s153
      %p155 = scmp.eq.s32.totalorder %s154, 0
      %s157 = sadd.s32 %s156, 1
      %s158 = scalar_select %p155, %s156, %s157
      %p161 = pneg %p155
      %p162 = scmp.eq.s32.totalorder %s12, 1
      %p163 = por %p161, %p162
      %p164 = scmp.ne.s32.totalorder %s156, %s159
      %p165 = scmp.eq.s32.totalorder %s12, 0
      %p166 = por %p164, %p165
      %p167 = scmp.ne.s32.totalorder %s156, %s159
      %p168 = scmp.eq.s32.totalorder %s17, 1
      %p169 = por %p167, %p168
      %p170 = scmp.ne.s32.totalorder %s159, %s160
      %p171 = scmp.eq.s32.totalorder %s17, 0
      %p172 = por %p170, %p171
      %p173 = scmp.ne.s32.totalorder %s159, %s160
      %p174 = scmp.eq.s32.totalorder %s18, 1
      %p175 = por %p173, %p174
      %p177 = scmp.ne.s32.totalorder %s160, %s176
      %p178 = scmp.eq.s32.totalorder %s18, 0
      %p179 = por %p177, %p178
      %p180 = scmp.le.s32.totalorder 1, %s12
      %p181 = scmp.lt.s32.totalorder %s12, 3
      %p182 = pnand %p180, %p181
      %p183 = pneg %p182
      // Predicated region
      $region9: #{wave_mae_forward.26} parent=5 // pred_check
        _
      $region10: #{wave_mae_forward.26} parent=5 // pred_check_branch
        %185 = sbr.rel (%p182) target = $region12
      $region11: #{wave_mae_forward.26} parent=5 // pred_region
        %s186 = ssub.s32 %s12, 1
        // Predicated region
        $region13: #{wave_mae_forward.26} parent=11 // pred_check
          %p187 = pneg %p50
        $region14: #{wave_mae_forward.26} parent=11 // pred_check_branch
          %189 = sbr.rel (%p187) target = $region16
        $region15: #{wave_mae_forward.26} parent=11 // pred_region
          %s190 = smul.u32 4, %s21
          %p191 = scmp.lt.s32.totalorder %s190, 3
          %s192 = scalar_select %p191, %s190, 3
          %s193 = smul.addr %s192, 8
          %s194 = scalar_lea.vmem %s0, %s193
          %s195 = smul.u32 4, %s21
        $region16: #{wave_mae_forward.26} parent=11 // pred_fallthru
          _
        // Predicated region
        $region17: #{wave_mae_forward.26} parent=11 // pred_check
          %p196 = pneg %p71
        $region18: #{wave_mae_forward.26} parent=11 // pred_check_branch
          %198 = sbr.rel (%p196) target = $region20
        $region19: #{wave_mae_forward.26} parent=11 // pred_region
          _
        $region20: #{wave_mae_forward.26} parent=11 // pred_fallthru
          _
        // Predicated region
        $region21: #{wave_mae_forward.26} parent=11 // pred_check
          %p199 = pneg %p92
        $region22: #{wave_mae_forward.26} parent=11 // pred_check_branch
          %201 = sbr.rel (%p199) target = $region24
        $region23: #{wave_mae_forward.26} parent=11 // pred_region
          %s203 = ssub.s32 16, 16
          %204 = vsyncadd [#allocation3], %s203
          %s206 = sshll.u32 [#allocation2], 4
          %s207 = int_to_ptr.vmem [resolvable:$true] %s206
          %209 = dma.hbm_to_vmem [thread:$0]  %s2, 16, %s207, [#allocation3]
        $region24: #{wave_mae_forward.26} parent=11 // pred_fallthru
          _
      $region12: #{wave_mae_forward.26} parent=5 // pred_fallthru
        _
      %p210 = scmp.lt.s32.totalorder %s12, 2
      // Predicated region
      $region25: #{wave_mae_forward.26} parent=5 // pred_check
        %p211 = pneg %p210
      $region26: #{wave_mae_forward.26} parent=5 // pred_check_branch
        %213 = sbr.rel (%p211) target = $region28
      $region27: #{wave_mae_forward.26} parent=5 // pred_region
        // Predicated region
        $region29: #{wave_mae_forward.26} parent=27 // pred_check
          %p214 = pneg %p112
        $region30: #{wave_mae_forward.26} parent=27 // pred_check_branch
          %216 = sbr.rel (%p214) target = $region32
        $region31: #{wave_mae_forward.26} parent=27 // pred_region
          %s217 = sand.u32 %s102, 1
          %s218 = sand.u32 %s102, 1
          %s219 = smul.addr %s218, 128
          %s220 = scalar_lea.vmem [#allocation4], %s219
          %s221 = smul.u32 2, %s20
          %s222 = smul.addr %s221, 4
          %s223 = scalar_lea.vmem %s3, %s222
          // Predicated region
          $region33: #{wave_mae_forward.26} parent=31 // pred_check
            _
          $region34: #{wave_mae_forward.26} parent=31 // pred_check_branch
            %225 = sbr.rel (0) target = $region36
          $region35: #{wave_mae_forward.26} parent=31 // pred_region
            // Predicated region
            $region37: #{wave_mae_forward.26} parent=35 // pred_check
              _
            $region38: #{wave_mae_forward.26} parent=35 // pred_check_branch
              %227 = sbr.rel (0) target = $region40
            $region39: #{wave_mae_forward.26} parent=35 // pred_region
              // Predicated region
              $region52: #{wave_mae_forward.26} parent=39 // pred_check
                _
              $region53: #{wave_mae_forward.26} parent=39 // pred_check_branch
                %273 = sbr.rel (0) target = $region55
              $region54: #{wave_mae_forward.26} parent=39 // pred_region
                loop: start=0, step=1, limit=1
                $region56: #{wave_mae_forward.26} parent=54 // loop_pre_header
                  _
                $region57: #{wave_mae_forward.26} parent=54 // loop_header
                  %s275 = sphi 0, %s279
                  %p276 = scmp.ge.s32.totalorder %s275, 1
                  %s280 = sphi %s223, %s223
                  %s281 = sphi %s220, %s220
                $region58: #{wave_mae_forward.26} parent=54 // loop_header_branch
                  %278 = sbr.rel (%p276) target = $region62
                $region59: #{wave_mae_forward.26} parent=54 // loop_body
                  %v282 = vld [vmem:[%s280] sm:$0xff]
                  %283 = vst [vmem:[%s281] sm:$0xff] %v282
                  %v284 = vld [vmem:[%s280 + $0x10] sm:$0xff]
                  %285 = vst [vmem:[%s281 + $0x8] sm:$0xff] %v284
                  %v286 = vld [vmem:[%s280 + $0x20] sm:$0xff]
                  %287 = vst [vmem:[%s281 + $0x10] sm:$0xff] %v286
                  %v288 = vld [vmem:[%s280 + $0x30] sm:$0xff]
                  %289 = vst [vmem:[%s281 + $0x18] sm:$0xff] %v288
                  %v290 = vld [vmem:[%s280 + $0x40] sm:$0xff]
                  %291 = vst [vmem:[%s281 + $0x20] sm:$0xff] %v290
                  %v292 = vld [vmem:[%s280 + $0x50] sm:$0xff]
                  %293 = vst [vmem:[%s281 + $0x28] sm:$0xff] %v292
                  %v294 = vld [vmem:[%s280 + $0x60] sm:$0xff]
                  %295 = vst [vmem:[%s281 + $0x30] sm:$0xff] %v294
                  %v296 = vld [vmem:[%s280 + $0x70] sm:$0xff]
                  %297 = vst [vmem:[%s281 + $0x38] sm:$0xff] %v296
                  %v298 = vld [vmem:[%s280 + $0x80] sm:$0xff]
                  %299 = vst [vmem:[%s281 + $0x40] sm:$0xff] %v298
                  %v300 = vld [vmem:[%s280 + $0x90] sm:$0xff]
                  %301 = vst [vmem:[%s281 + $0x48] sm:$0xff] %v300
                  %v302 = vld [vmem:[%s280 + $0xa0] sm:$0xff]
                  %303 = vst [vmem:[%s281 + $0x50] sm:$0xff] %v302
                  %v304 = vld [vmem:[%s280 + $0xb0] sm:$0xff]
                  %305 = vst [vmem:[%s281 + $0x58] sm:$0xff] %v304
                  %v306 = vld [vmem:[%s280 + $0xc0] sm:$0xff]
                  %307 = vst [vmem:[%s281 + $0x60] sm:$0xff] %v306
                  %v308 = vld [vmem:[%s280 + $0xd0] sm:$0xff]
                  %309 = vst [vmem:[%s281 + $0x68] sm:$0xff] %v308
                  %v310 = vld [vmem:[%s280 + $0xe0] sm:$0xff]
                  %311 = vst [vmem:[%s281 + $0x70] sm:$0xff] %v310
                  %v312 = vld [vmem:[%s280 + $0xf0] sm:$0xff]
                  %313 = vst [vmem:[%s281 + $0x78] sm:$0xff] %v312
                $region60: #{wave_mae_forward.26} parent=54 // loop_footer
                  %s279 = sadd.s32 1, %s275
                $region61: #{wave_mae_forward.26} parent=54 // loop_footer_branch
                  %274 = sbr.rel target = $region57
                $region62: #{wave_mae_forward.26} parent=54 // loop_exit
                  _
              $region55: #{wave_mae_forward.26} parent=39 // pred_fallthru
                _
              // Predicated region
              $region63: #{wave_mae_forward.26} parent=39 // pred_check
                _
              $region64: #{wave_mae_forward.26} parent=39 // pred_check_branch
                %315 = sbr.rel target = $region66
              $region65: #{wave_mae_forward.26} parent=39 // pred_region
                _
              $region66: #{wave_mae_forward.26} parent=39 // pred_fallthru
                _
            $region40: #{wave_mae_forward.26} parent=35 // pred_fallthru
              _
            // Predicated region
            $region41: #{wave_mae_forward.26} parent=35 // pred_check
              _
            $region42: #{wave_mae_forward.26} parent=35 // pred_check_branch
              %229 = sbr.rel target = $region44
            $region43: #{wave_mae_forward.26} parent=35 // pred_region
              %s231 = ssub.s32 256, 1
              loop: start=0, step=1, limit=1
              $region45: #{wave_mae_forward.26} parent=43 // loop_pre_header
                _
              $region46: #{wave_mae_forward.26} parent=43 // loop_header
                %s233 = sphi 0, %s237
                %p234 = scmp.ge.s32.totalorder %s233, 1
                %s238 = sphi %s223, %s223
                %s239 = sphi %s220, %s220
              $region47: #{wave_mae_forward.26} parent=43 // loop_header_branch
                %236 = sbr.rel (%p234) target = $region51
              $region48: #{wave_mae_forward.26} parent=43 // loop_body
                %v240 = vld [vmem:[%s238] sm:%s231]
                %241 = vst [vmem:[%s239] sm:%s231] %v240
                %v242 = vld [vmem:[%s238 + $0x10] sm:%s231]
                %243 = vst [vmem:[%s239 + $0x8] sm:%s231] %v242
                %v244 = vld [vmem:[%s238 + $0x20] sm:%s231]
                %245 = vst [vmem:[%s239 + $0x10] sm:%s231] %v244
                %v246 = vld [vmem:[%s238 + $0x30] sm:%s231]
                %247 = vst [vmem:[%s239 + $0x18] sm:%s231] %v246
                %v248 = vld [vmem:[%s238 + $0x40] sm:%s231]
                %249 = vst [vmem:[%s239 + $0x20] sm:%s231] %v248
                %v250 = vld [vmem:[%s238 + $0x50] sm:%s231]
                %251 = vst [vmem:[%s239 + $0x28] sm:%s231] %v250
                %v252 = vld [vmem:[%s238 + $0x60] sm:%s231]
                %253 = vst [vmem:[%s239 + $0x30] sm:%s231] %v252
                %v254 = vld [vmem:[%s238 + $0x70] sm:%s231]
                %255 = vst [vmem:[%s239 + $0x38] sm:%s231] %v254
                %v256 = vld [vmem:[%s238 + $0x80] sm:%s231]
                %257 = vst [vmem:[%s239 + $0x40] sm:%s231] %v256
                %v258 = vld [vmem:[%s238 + $0x90] sm:%s231]
                %259 = vst [vmem:[%s239 + $0x48] sm:%s231] %v258
                %v260 = vld [vmem:[%s238 + $0xa0] sm:%s231]
                %261 = vst [vmem:[%s239 + $0x50] sm:%s231] %v260
                %v262 = vld [vmem:[%s238 + $0xb0] sm:%s231]
                %263 = vst [vmem:[%s239 + $0x58] sm:%s231] %v262
                %v264 = vld [vmem:[%s238 + $0xc0] sm:%s231]
                %265 = vst [vmem:[%s239 + $0x60] sm:%s231] %v264
                %v266 = vld [vmem:[%s238 + $0xd0] sm:%s231]
                %267 = vst [vmem:[%s239 + $0x68] sm:%s231] %v266
                %v268 = vld [vmem:[%s238 + $0xe0] sm:%s231]
                %269 = vst [vmem:[%s239 + $0x70] sm:%s231] %v268
                %v270 = vld [vmem:[%s238 + $0xf0] sm:%s231]
                %271 = vst [vmem:[%s239 + $0x78] sm:%s231] %v270
              $region49: #{wave_mae_forward.26} parent=43 // loop_footer
                %s237 = sadd.s32 1, %s233
              $region50: #{wave_mae_forward.26} parent=43 // loop_footer_branch
                %232 = sbr.rel target = $region46
              $region51: #{wave_mae_forward.26} parent=43 // loop_exit
                _
            $region44: #{wave_mae_forward.26} parent=35 // pred_fallthru
              _
          $region36: #{wave_mae_forward.26} parent=31 // pred_fallthru
            _
          %316 = vnop
        $region32: #{wave_mae_forward.26} parent=27 // pred_fallthru
          _
        // Predicated region
        $region67: #{wave_mae_forward.26} parent=27 // pred_check
          %p317 = pneg %p138
        $region68: #{wave_mae_forward.26} parent=27 // pred_check_branch
          %319 = sbr.rel (%p317) target = $region70
        $region69: #{wave_mae_forward.26} parent=27 // pred_region
          %s320 = smul.u32 2, %s20
          %p321 = scmp.lt.s32.totalorder %s320, 3
          %s322 = scalar_select %p321, %s320, 3
          %s323 = scalar_lea.vmem %s4, %s322
          %s324 = smul.u32 2, %s20
        $region70: #{wave_mae_forward.26} parent=27 // pred_fallthru
          _
      $region28: #{wave_mae_forward.26} parent=5 // pred_fallthru
        _
      %p325 = scmp.le.s32.totalorder 1, %s12
      %p326 = scmp.lt.s32.totalorder %s12, 3
      %p327 = pnand %p325, %p326
      %p328 = pneg %p327
      // Predicated region
      $region71: #{wave_mae_forward.26} parent=5 // pred_check
        _
      $region72: #{wave_mae_forward.26} parent=5 // pred_check_branch
        %330 = sbr.rel (%p327) target = $region74
      $region73: #{wave_mae_forward.26} parent=5 // pred_region
        %s331 = ssub.s32 %s12, 1
        // Predicated region
        $region75: #{wave_mae_forward.26} parent=73 // pred_check
          %p332 = pneg %p92
        $region76: #{wave_mae_forward.26} parent=73 // pred_check_branch
          %334 = sbr.rel (%p332) target = $region78
        $region77: #{wave_mae_forward.26} parent=73 // pred_region
          %335 = dma.done [#allocation3], 16
        $region78: #{wave_mae_forward.26} parent=73 // pred_fallthru
          _
        %s336 = sand.u32 %s105, 1
        %s337 = sand.u32 %s105, 1
        %s338 = smul.addr %s337, 128
        %s339 = scalar_lea.vmem [#allocation4], %s338
        // Predicated region
        $region79: #{wave_mae_forward.26} parent=73 // pred_check
          %p340 = pneg %p118
        $region80: #{wave_mae_forward.26} parent=73 // pred_check_branch
          %342 = sbr.rel (%p340) target = $region82
        $region81: #{wave_mae_forward.26} parent=73 // pred_region
          _
        $region82: #{wave_mae_forward.26} parent=73 // pred_fallthru
          _
        %s343 = smul.u32 4, %s21
        %p344 = scmp.lt.s32.totalorder %s343, 3
        %s345 = scalar_select %p344, %s343, 3
        %s346 = smul.addr %s345, 8
        %s347 = scalar_lea.vmem %s0, %s346
        %p348 = pneg %p50
        %p349 = pneg %p47
        %p350 = pneg %p71
        %p351 = pneg %p68
        %p352 = pneg %p92
        %p353 = pneg %p89
        %s354 = sand.u32 %s105, 1
        %s355 = sand.u32 %s105, 1
        %s356 = smul.addr %s355, 128
        %s357 = scalar_lea.vmem [#allocation4], %s356
        %p358 = pneg %p118
        %p359 = pneg %p115
        %s360 = smul.u32 2, %s22
        %p361 = scmp.lt.s32.totalorder %s360, 3
        %s362 = scalar_select %p361, %s360, 3
        %s363 = scalar_lea.vmem %s4, %s362
        %p364 = pneg %p144
        %p365 = pneg %p141
        %p366 = pneg %p172
        %p367 = pneg %p169
        %s368 = sand.u32 %s159, 1
        %s369 = sand.u32 %s159, 1
        %s370 = smul.addr %s369, 32
        %s371 = scalar_lea.vmem [#allocation5], %s370
        %s372 = smul.u32 4, %s21
        %p373 = scmp.lt.s32.totalorder %s372, 3
        %s374 = scalar_select %p373, %s372, 3
        %s375 = smul.addr %s374, 8
        %s376 = scalar_lea.vmem %s0, %s375
        %s377 = smul.u32 4, %s21
        %s378 = smul.u32 2, %s22
        %s379 = smul.u32 2, %s22
        %p380 = scmp.lt.s32.totalorder %s379, 3
        %s381 = scalar_select %p380, %s379, 3
        %s382 = scalar_lea.vmem %s4, %s381
        %s383 = smul.u32 2, %s22
        %s384 = smul.u32 4, %s21
        %s385 = smul.u32 2, %s22
        %v387 = vld [vmem:[%s376] sm:$0xff]
        %v388 = vld [vmem:[%s376 + $0x8] sm:$0xff]
        %v389 = vld [vmem:[%s376 + $0x10] sm:$0xff]
        %v390 = vld [vmem:[%s376 + $0x18] sm:$0xff]
        %391 = vadd.xlane.f32.xlu0 %v387
        %v392 = vpop.xlane.xlu0 %391
        %393 = vadd.xlane.f32.xlu0 %v388
        %v394 = vpop.xlane.xlu0 %393
        %395 = vadd.xlane.f32.xlu0 %v389
        %v396 = vpop.xlane.xlu0 %395
        %397 = vadd.xlane.f32.xlu0 %v390
        %v398 = vpop.xlane.xlu0 %397
        %v399 = vrcp.pop 128.0
        %v400 = vmul.f32 %v392, %v399
        %v401 = vmul.f32 %v394, %v399
        %v402 = vmul.f32 %v396, %v399
        %v403 = vmul.f32 %v398, %v399
        %v404 = vsub.f32 %v387, %v400
        %v405 = vsub.f32 %v388, %v401
        %v406 = vsub.f32 %v389, %v402
        %v407 = vsub.f32 %v390, %v403
        %v408 = vmul.f32 %v404, %v404
        %v409 = vmul.f32 %v405, %v405
        %v410 = vmul.f32 %v406, %v406
        %v411 = vmul.f32 %v407, %v407
        %412 = vadd.xlane.f32.xlu0 %v408
        %v413 = vpop.xlane.xlu0 %412
        %414 = vadd.xlane.f32.xlu0 %v409
        %v415 = vpop.xlane.xlu0 %414
        %416 = vadd.xlane.f32.xlu0 %v410
        %v417 = vpop.xlane.xlu0 %416
        %418 = vadd.xlane.f32.xlu0 %v411
        %v419 = vpop.xlane.xlu0 %418
        %v420 = vmul.f32 %v413, %v399
        %v421 = vmul.f32 %v415, %v399
        %v422 = vmul.f32 %v417, %v399
        %v423 = vmul.f32 %v419, %v399
        %v424 = vadd.f32 %v420, 1e-05
        %v425 = vadd.f32 %v421, 1e-05
        %v426 = vadd.f32 %v422, 1e-05
        %v427 = vadd.f32 %v423, 1e-05
        %v428 = vrsqrt.pop %v424
        %v429 = vrsqrt.pop %v425
        %v430 = vrsqrt.pop %v426
        %v431 = vrsqrt.pop %v427
        %v432 = vmul.f32 %v404, %v428
        %v433 = vmul.f32 %v405, %v429
        %v434 = vmul.f32 %v406, %v430
        %v435 = vmul.f32 %v407, %v431
        %v436 = vld [vmem:[%s1] sm:$0x1]
        %v438 = vlaneseq
        %v439 = vshrl.u32 %v438, 7
        %v440 = vsub.s32 0, %v439
        %v441 = vrot.slane %v436, %v440
        %v443 = vmul.f32 %v432, %v441
        %v444 = vmul.f32 %v433, %v441
        %v445 = vmul.f32 %v434, %v441
        %v446 = vmul.f32 %v435, %v441
        %v447 = vld [vmem:[#allocation2] sm:$0x1]
        %v449 = vlaneseq
        %v450 = vshrl.u32 %v449, 7
        %v451 = vsub.s32 0, %v450
        %v452 = vrot.slane %v447, %v451
        %v454 = vadd.f32 %v443, %v452
        %v455 = vadd.f32 %v444, %v452
        %v456 = vadd.f32 %v445, %v452
        %v457 = vadd.f32 %v446, %v452
        %v458 = vpack.c.bf16 %v455, %v454
        %v459 = vpack.c.bf16 %v457, %v456
        %v460 = vld [vmem:[%s339] sm:$0xff]
        %v461 = vld [vmem:[%s339 + $0x8] sm:$0xff]
        %v462 = vld [vmem:[%s339 + $0x10] sm:$0xff]
        %v463 = vld [vmem:[%s339 + $0x18] sm:$0xff]
        %v464 = vld [vmem:[%s339 + $0x20] sm:$0xff]
        %v465 = vld [vmem:[%s339 + $0x28] sm:$0xff]
        %v466 = vld [vmem:[%s339 + $0x30] sm:$0xff]
        %v467 = vld [vmem:[%s339 + $0x38] sm:$0xff]
        %v468 = vld [vmem:[%s339 + $0x40] sm:$0xff]
        %v469 = vld [vmem:[%s339 + $0x48] sm:$0xff]
        %v470 = vld [vmem:[%s339 + $0x50] sm:$0xff]
        %v471 = vld [vmem:[%s339 + $0x58] sm:$0xff]
        %v472 = vld [vmem:[%s339 + $0x60] sm:$0xff]
        %v473 = vld [vmem:[%s339 + $0x68] sm:$0xff]
        %v474 = vld [vmem:[%s339 + $0x70] sm:$0xff]
        %v475 = vld [vmem:[%s339 + $0x78] sm:$0xff]
        %v476 = vld [vmem:[%s382] sm:$0x3]
        %v478 = vlaneseq
        %v479 = vshrl.u32 %v478, 7
        %v480 = vsub.s32 0, %v479
        %v481 = vrot.slane %v476, %v480
        %v482 = vlaneseq
        %v483 = vshrl.u32 %v482, 7
        %v484 = vsub.s32 1, %v483
        %v485 = vrot.slane %v476, %v484
        %v504 = vunpack.c.l.b16 %v460
        %v505 = vunpack.c.h.b16 %v460
        %v506 = vunpack.c.l.b16 %v461
        %v507 = vunpack.c.h.b16 %v461
        %v508 = vunpack.c.l.b16 %v462
        %v509 = vunpack.c.h.b16 %v462
        %v510 = vunpack.c.l.b16 %v463
        %v511 = vunpack.c.h.b16 %v463
        %v512 = vunpack.c.l.b16 %v464
        %v513 = vunpack.c.h.b16 %v464
        %v514 = vunpack.c.l.b16 %v465
        %v515 = vunpack.c.h.b16 %v465
        %v516 = vunpack.c.l.b16 %v466
        %v517 = vunpack.c.h.b16 %v466
        %v518 = vunpack.c.l.b16 %v467
        %v519 = vunpack.c.h.b16 %v467
        %v520 = vunpack.c.l.b16 %v468
        %v521 = vunpack.c.h.b16 %v468
        %v522 = vunpack.c.l.b16 %v469
        %v523 = vunpack.c.h.b16 %v469
        %v524 = vunpack.c.l.b16 %v470
        %v525 = vunpack.c.h.b16 %v470
        %v526 = vunpack.c.l.b16 %v471
        %v527 = vunpack.c.h.b16 %v471
        %v528 = vunpack.c.l.b16 %v472
        %v529 = vunpack.c.h.b16 %v472
        %v530 = vunpack.c.l.b16 %v473
        %v531 = vunpack.c.h.b16 %v473
        %v532 = vunpack.c.l.b16 %v474
        %v533 = vunpack.c.h.b16 %v474
        %v534 = vunpack.c.l.b16 %v475
        %v535 = vunpack.c.h.b16 %v475
        %v536 = vpack.c.b16 %v506, %v504
        %v537 = vpack.c.b16 %v507, %v505
        %v538 = vpack.c.b16 %v510, %v508
        %v539 = vpack.c.b16 %v511, %v509
        %v540 = vpack.c.b16 %v514, %v512
        %v541 = vpack.c.b16 %v515, %v513
        %v542 = vpack.c.b16 %v518, %v516
        %v543 = vpack.c.b16 %v519, %v517
        %v544 = vpack.c.b16 %v522, %v520
        %v545 = vpack.c.b16 %v523, %v521
        %v546 = vpack.c.b16 %v526, %v524
        %v547 = vpack.c.b16 %v527, %v525
        %v548 = vpack.c.b16 %v530, %v528
        %v549 = vpack.c.b16 %v531, %v529
        %v550 = vpack.c.b16 %v534, %v532
        %v551 = vpack.c.b16 %v535, %v533
        %568 = vmatprep.subr.bf16.mxu0 %v551
        %569 = vmatpush1.bf16.msra.mxu0 %v550
        %570 = vmatprep.subr.bf16.mxu0 %v549
        %571 = vmatpush1.bf16.msra.mxu0 %v548
        %572 = vmatprep.subr.bf16.mxu0 %v547
        %573 = vmatpush1.bf16.msra.mxu0 %v546
        %574 = vmatprep.subr.bf16.mxu0 %v545
        %575 = vmatpush1.bf16.msra.mxu0 %v544
        %576 = vmatprep.subr.bf16.mxu0 %v543
        %577 = vmatpush1.bf16.msra.mxu0 %v542
        %578 = vmatprep.subr.bf16.mxu0 %v541
        %579 = vmatpush1.bf16.msra.mxu0 %v540
        %580 = vmatprep.subr.bf16.mxu0 %v539
        %581 = vmatpush1.bf16.msra.mxu0 %v538
        %582 = vmatprep.subr.bf16.mxu0 %v537
        %583 = vmatpush1.bf16.msra.mxu0 %v536
        %584 = vmatprep.subr.bf16.mxu0 0
        %585 = vmatpush2.bf16.msra.mxu0 0
        %586 = vmatprep.subr.bf16.mxu0 0
        %587 = vmatpush2.bf16.msra.mxu0 0
        %588 = vmatprep.subr.bf16.mxu0 0
        %589 = vmatpush2.bf16.msra.mxu0 0
        %590 = vmatprep.subr.bf16.mxu0 0
        %591 = vmatpush2.bf16.msra.mxu0 0
        %592 = vmatprep.subr.bf16.mxu0 0
        %593 = vmatpush2.bf16.msra.mxu0 0
        %594 = vmatprep.subr.bf16.mxu0 0
        %595 = vmatpush2.bf16.msra.mxu0 0
        %596 = vmatprep.subr.bf16.mxu0 0
        %597 = vmatpush2.bf16.msra.mxu0 0
        %598 = vmatprep.subr.bf16.mxu0 0
        %599 = vmatpush2.bf16.msra.mxu0 0
        %600 = vmatprep.mubr.bf16.mxu0 0
        %601 = vmatmul.mubr.bf16.gmra.mxu0 %v458
        %v602 = vpop.f32.mrf.mxu0
        %v603 = vadd.f32 %v481, %v602
        %v604 = vpop.f32.mrf.mxu0
        %v605 = vadd.f32 %v485, %v604
        %v606 = vpop.f32.mrf.mxu0
        %v607 = vadd.f32 %v481, %v606
        %v608 = vpop.f32.mrf.mxu0
        %v609 = vadd.f32 %v485, %v608
        %610 = vmatprep.mubr.bf16.mxu0 0
        %611 = vmatmul.mubr.bf16.gmra.mxu0 %v459
        %v612 = vpop.f32.mrf.mxu0
        %v613 = vadd.f32 %v481, %v612
        %v614 = vpop.f32.mrf.mxu0
        %v615 = vadd.f32 %v485, %v614
        %v616 = vpop.f32.mrf.mxu0
        %v617 = vadd.f32 %v481, %v616
        %v618 = vpop.f32.mrf.mxu0
        %v619 = vadd.f32 %v485, %v618
        %620 = vdwg.mxu0
        %v621 = vmul.f32 %v603, %v603
        %v622 = vmul.f32 %v605, %v605
        %v623 = vmul.f32 %v607, %v607
        %v624 = vmul.f32 %v609, %v609
        %v625 = vmul.f32 %v613, %v613
        %v626 = vmul.f32 %v615, %v615
        %v627 = vmul.f32 %v617, %v617
        %v628 = vmul.f32 %v619, %v619
        %v629 = vmul.f32 %v603, %v621
        %v630 = vmul.f32 %v605, %v622
        %v631 = vmul.f32 %v607, %v623
        %v632 = vmul.f32 %v609, %v624
        %v633 = vmul.f32 %v613, %v625
        %v634 = vmul.f32 %v615, %v626
        %v635 = vmul.f32 %v617, %v627
        %v636 = vmul.f32 %v619, %v628
        %v637 = vmul.f32 %v629, 0.044715
        %v638 = vmul.f32 %v630, 0.044715
        %v639 = vmul.f32 %v631, 0.044715
        %v640 = vmul.f32 %v632, 0.044715
        %v641 = vmul.f32 %v633, 0.044715
        %v642 = vmul.f32 %v634, 0.044715
        %v643 = vmul.f32 %v635, 0.044715
        %v644 = vmul.f32 %v636, 0.044715
        %v645 = vadd.f32 %v603, %v637
        %v646 = vadd.f32 %v605, %v638
        %v647 = vadd.f32 %v607, %v639
        %v648 = vadd.f32 %v609, %v640
        %v649 = vadd.f32 %v613, %v641
        %v650 = vadd.f32 %v615, %v642
        %v651 = vadd.f32 %v617, %v643
        %v652 = vadd.f32 %v619, %v644
        %v653 = vmul.f32 %v645, 0.7978846
        %v654 = vmul.f32 %v646, 0.7978846
        %v655 = vmul.f32 %v647, 0.7978846
        %v656 = vmul.f32 %v648, 0.7978846
        %v657 = vmul.f32 %v649, 0.7978846
        %v658 = vmul.f32 %v650, 0.7978846
        %v659 = vmul.f32 %v651, 0.7978846
        %v660 = vmul.f32 %v652, 0.7978846
        %v661 = vtanh.pop %v653
        %v662 = vtanh.pop %v654
        %v663 = vtanh.pop %v655
        %v664 = vtanh.pop %v656
        %v665 = vtanh.pop %v657
        %v666 = vtanh.pop %v658
        %v667 = vtanh.pop %v659
        %v668 = vtanh.pop %v660
        %v669 = vadd.f32 %v661, 1.0
        %v670 = vadd.f32 %v662, 1.0
        %v671 = vadd.f32 %v663, 1.0
        %v672 = vadd.f32 %v664, 1.0
        %v673 = vadd.f32 %v665, 1.0
        %v674 = vadd.f32 %v666, 1.0
        %v675 = vadd.f32 %v667, 1.0
        %v676 = vadd.f32 %v668, 1.0
        %v677 = vmul.f32 %v669, 0.5
        %v678 = vmul.f32 %v670, 0.5
        %v679 = vmul.f32 %v671, 0.5
        %v680 = vmul.f32 %v672, 0.5
        %v681 = vmul.f32 %v673, 0.5
        %v682 = vmul.f32 %v674, 0.5
        %v683 = vmul.f32 %v675, 0.5
        %v684 = vmul.f32 %v676, 0.5
        %v685 = vmul.f32 %v603, %v677
        %v686 = vmul.f32 %v605, %v678
        %v687 = vmul.f32 %v607, %v679
        %v688 = vmul.f32 %v609, %v680
        %v689 = vmul.f32 %v613, %v681
        %v690 = vmul.f32 %v615, %v682
        %v691 = vmul.f32 %v617, %v683
        %v692 = vmul.f32 %v619, %v684
        %v693 = vpack.c.bf16 %v687, %v685
        %v694 = vpack.c.bf16 %v688, %v686
        %v695 = vpack.c.bf16 %v691, %v689
        %v696 = vpack.c.bf16 %v692, %v690
        %v701 = vunpack.c.l.b16 %v693
        %v702 = vunpack.c.l.b16 %v694
        %v703 = vunpack.c.h.b16 %v693
        %v704 = vunpack.c.h.b16 %v694
        %v705 = vunpack.c.l.b16 %v695
        %v706 = vunpack.c.l.b16 %v696
        %v707 = vunpack.c.h.b16 %v695
        %v708 = vunpack.c.h.b16 %v696
        %v709 = vpack.c.b16 %v702, %v701
        %v710 = vpack.c.b16 %v704, %v703
        %v711 = vpack.c.b16 %v706, %v705
        %v712 = vpack.c.b16 %v708, %v707
        %717 = vst [vmem:[%s371] sm:$0xff] %v709
        %718 = vst [vmem:[%s371 + $0x8] sm:$0xff] %v710
        %719 = vst [vmem:[%s371 + $0x10] sm:$0xff] %v711
        %720 = vst [vmem:[%s371 + $0x18] sm:$0xff] %v712
        %s721 = sand.u32 %s159, 1
        %s722 = sand.u32 %s159, 1
        %s723 = smul.addr %s722, 32
        %s724 = scalar_lea.vmem [#allocation5], %s723
        // Predicated region
        $region83: #{wave_mae_forward.26} parent=73 // pred_check
          %p725 = pneg %p169
        $region84: #{wave_mae_forward.26} parent=73 // pred_check_branch
          %727 = sbr.rel (%p725) target = $region86
        $region85: #{wave_mae_forward.26} parent=73 // pred_region
          %s728 = smul.u32 4, %s21
          %s729 = smul.u32 2, %s22
          %s730 = smul.addr %s728, 4
          %s731 = sadd.s32 %s729, %s730
          %s732 = smul.addr %s731, 4
          %s733 = scalar_lea.vmem %s5, %s732
          // Predicated region
          $region87: #{wave_mae_forward.26} parent=85 // pred_check
            _
          $region88: #{wave_mae_forward.26} parent=85 // pred_check_branch
            %735 = sbr.rel (0) target = $region90
          $region89: #{wave_mae_forward.26} parent=85 // pred_region
            // Predicated region
            $region91: #{wave_mae_forward.26} parent=89 // pred_check
              _
            $region92: #{wave_mae_forward.26} parent=89 // pred_check_branch
              %737 = sbr.rel (0) target = $region94
            $region93: #{wave_mae_forward.26} parent=89 // pred_region
              // Predicated region
              $region106: #{wave_mae_forward.26} parent=93 // pred_check
                _
              $region107: #{wave_mae_forward.26} parent=93 // pred_check_branch
                %759 = sbr.rel (0) target = $region109
              $region108: #{wave_mae_forward.26} parent=93 // pred_region
                loop: start=0, step=1, limit=1
                $region110: #{wave_mae_forward.26} parent=108 // loop_pre_header
                  _
                $region111: #{wave_mae_forward.26} parent=108 // loop_header
                  %s761 = sphi 0, %s765
                  %p762 = scmp.ge.s32.totalorder %s761, 1
                  %s766 = sphi %s724, %s724
                  %s767 = sphi %s733, %s733
                $region112: #{wave_mae_forward.26} parent=108 // loop_header_branch
                  %764 = sbr.rel (%p762) target = $region116
                $region113: #{wave_mae_forward.26} parent=108 // loop_body
                  %v768 = vld [vmem:[%s766] sm:$0xff]
                  %769 = vst [vmem:[%s767] sm:$0xff] %v768
                  %v770 = vld [vmem:[%s766 + $0x8] sm:$0xff]
                  %771 = vst [vmem:[%s767 + $0x10] sm:$0xff] %v770
                  %v772 = vld [vmem:[%s766 + $0x10] sm:$0xff]
                  %773 = vst [vmem:[%s767 + $0x20] sm:$0xff] %v772
                  %v774 = vld [vmem:[%s766 + $0x18] sm:$0xff]
                  %775 = vst [vmem:[%s767 + $0x30] sm:$0xff] %v774
                $region114: #{wave_mae_forward.26} parent=108 // loop_footer
                  %s765 = sadd.s32 1, %s761
                $region115: #{wave_mae_forward.26} parent=108 // loop_footer_branch
                  %760 = sbr.rel target = $region111
                $region116: #{wave_mae_forward.26} parent=108 // loop_exit
                  _
              $region109: #{wave_mae_forward.26} parent=93 // pred_fallthru
                _
              // Predicated region
              $region117: #{wave_mae_forward.26} parent=93 // pred_check
                _
              $region118: #{wave_mae_forward.26} parent=93 // pred_check_branch
                %777 = sbr.rel target = $region120
              $region119: #{wave_mae_forward.26} parent=93 // pred_region
                _
              $region120: #{wave_mae_forward.26} parent=93 // pred_fallthru
                _
            $region94: #{wave_mae_forward.26} parent=89 // pred_fallthru
              _
            // Predicated region
            $region95: #{wave_mae_forward.26} parent=89 // pred_check
              _
            $region96: #{wave_mae_forward.26} parent=89 // pred_check_branch
              %739 = sbr.rel target = $region98
            $region97: #{wave_mae_forward.26} parent=89 // pred_region
              %s741 = ssub.s32 256, 1
              loop: start=0, step=1, limit=1
              $region99: #{wave_mae_forward.26} parent=97 // loop_pre_header
                _
              $region100: #{wave_mae_forward.26} parent=97 // loop_header
                %s743 = sphi 0, %s747
                %p744 = scmp.ge.s32.totalorder %s743, 1
                %s748 = sphi %s724, %s724
                %s749 = sphi %s733, %s733
              $region101: #{wave_mae_forward.26} parent=97 // loop_header_branch
                %746 = sbr.rel (%p744) target = $region105
              $region102: #{wave_mae_forward.26} parent=97 // loop_body
                %v750 = vld [vmem:[%s748] sm:%s741]
                %751 = vst [vmem:[%s749] sm:%s741] %v750
                %v752 = vld [vmem:[%s748 + $0x8] sm:%s741]
                %753 = vst [vmem:[%s749 + $0x10] sm:%s741] %v752
                %v754 = vld [vmem:[%s748 + $0x10] sm:%s741]
                %755 = vst [vmem:[%s749 + $0x20] sm:%s741] %v754
                %v756 = vld [vmem:[%s748 + $0x18] sm:%s741]
                %757 = vst [vmem:[%s749 + $0x30] sm:%s741] %v756
              $region103: #{wave_mae_forward.26} parent=97 // loop_footer
                %s747 = sadd.s32 1, %s743
              $region104: #{wave_mae_forward.26} parent=97 // loop_footer_branch
                %742 = sbr.rel target = $region100
              $region105: #{wave_mae_forward.26} parent=97 // loop_exit
                _
            $region98: #{wave_mae_forward.26} parent=89 // pred_fallthru
              _
          $region90: #{wave_mae_forward.26} parent=85 // pred_fallthru
            _
          %778 = vnop
        $region86: #{wave_mae_forward.26} parent=73 // pred_fallthru
          _
      $region74: #{wave_mae_forward.26} parent=5 // pred_fallthru
        _
      %p779 = scmp.le.s32.totalorder 2, %s12
      // Predicated region
      $region121: #{wave_mae_forward.26} parent=5 // pred_check
        %p780 = pneg %p779
      $region122: #{wave_mae_forward.26} parent=5 // pred_check_branch
        %782 = sbr.rel (%p780) target = $region124
      $region123: #{wave_mae_forward.26} parent=5 // pred_region
        %s783 = ssub.s32 %s12, 2
        // Predicated region
        $region125: #{wave_mae_forward.26} parent=123 // pred_check
          %p784 = pneg %p175
        $region126: #{wave_mae_forward.26} parent=123 // pred_check_branch
          %786 = sbr.rel (%p784) target = $region128
        $region127: #{wave_mae_forward.26} parent=123 // pred_region
          %s787 = sand.u32 %s160, 1
          %s788 = sand.u32 %s160, 1
          %s789 = smul.addr %s788, 32
          %s790 = scalar_lea.vmem [#allocation5], %s789
        $region128: #{wave_mae_forward.26} parent=123 // pred_fallthru
          _
      $region124: #{wave_mae_forward.26} parent=5 // pred_fallthru
        _
    $region6: #{wave_mae_forward.26} parent=1 // loop_footer
      %s16 = sadd.s32 1, %s12
    $region7: #{wave_mae_forward.26} parent=1 // loop_footer_branch
      %11 = sbr.rel target = $region3
    $region8: #{wave_mae_forward.26} parent=1 // loop_exit
      _
    %791 = vsyncpa [#allocation3], 1
    %s792 = scalar_lea.sflag [#allocation3], 1
    %793 = vsyncpa %s792, 1

// kernel: wave_mae_forward.27
$region0: #{wave_mae_forward.27}
  #allocation0 [shape = 'u32[]', space=smem, size = 0x4, offset = 0x4, fixed_abs, tag = 'smem constant byte address 0x4 - core index']
  #allocation1 [shape = 'u32[144,128]{1,0:T(1,128)}', space=vmem, size = 0x12000, scoped, tag = 'internal scratch']
  %s0 = inlined_call_operand.vmem [shape: bf16[32,512], index: 0, kind: input, shape index: {}]
  %s1 = inlined_call_operand.vmem [shape: bf16[512,128], index: 1, kind: input, shape index: {}]
  %s2 = inlined_call_operand.vmem [shape: f32[1,128], index: 2, kind: input, shape index: {}]
  %s3 = inlined_call_operand.vmem [shape: f32[32,128], index: 3, kind: input, shape index: {}]
  %s4 = inlined_call_operand.vmem [shape: f32[32,128], index: 4, kind: output, shape index: {}]
  %s5 = sld [smem:[#allocation0]]
  $region26: #{wave_mae_forward.27} parent=0
    _
  %s7 = ssub.s32 1, %s5
  %s8 = scalar_select 0, %s7, %s5
  // Predicated region
  $region2: #{wave_mae_forward.27} parent=0 // pred_check
    _
  $region3: #{wave_mae_forward.27} parent=0 // pred_check_branch
    %10 = sbr.rel (0) target = $region5
  $region4: #{wave_mae_forward.27} parent=0 // pred_region
    _
  $region5: #{wave_mae_forward.27} parent=0 // pred_fallthru
    _
  // Predicated region
  $region6: #{wave_mae_forward.27} parent=0 // pred_check
    _
  $region7: #{wave_mae_forward.27} parent=0 // pred_check_branch
    %12 = sbr.rel (0) target = $region9
  $region8: #{wave_mae_forward.27} parent=0 // pred_region
    _
  $region9: #{wave_mae_forward.27} parent=0 // pred_fallthru
    _
  // Predicated region
  $region10: #{wave_mae_forward.27} parent=0 // pred_check
    _
  $region11: #{wave_mae_forward.27} parent=0 // pred_check_branch
    %14 = sbr.rel (0) target = $region13
  $region12: #{wave_mae_forward.27} parent=0 // pred_region
    _
  $region13: #{wave_mae_forward.27} parent=0 // pred_fallthru
    _
  // Predicated region
  $region14: #{wave_mae_forward.27} parent=0 // pred_check
    _
  $region15: #{wave_mae_forward.27} parent=0 // pred_check_branch
    %16 = sbr.rel (0) target = $region17
  $region16: #{wave_mae_forward.27} parent=0 // pred_region
    _
  $region17: #{wave_mae_forward.27} parent=0 // pred_fallthru
    _
  %v18 = vld [vmem:[%s0] sm:$0xff]
  %v19 = vld [vmem:[%s0 + $0x8] sm:$0xff]
  %v20 = vld [vmem:[%s0 + $0x10] sm:$0xff]
  %v21 = vld [vmem:[%s0 + $0x18] sm:$0xff]
  %v22 = vld [vmem:[%s0 + $0x20] sm:$0xff]
  %v23 = vld [vmem:[%s0 + $0x28] sm:$0xff]
  %v24 = vld [vmem:[%s0 + $0x30] sm:$0xff]
  %v25 = vld [vmem:[%s0 + $0x38] sm:$0xff]
  %v26 = vld [vmem:[%s1] sm:$0xf]
  %v27 = vld [vmem:[%s1 + $0x4] sm:$0xf]
  %v28 = vld [vmem:[%s1 + $0x8] sm:$0xf]
  %v29 = vld [vmem:[%s1 + $0xc] sm:$0xf]
  %v30 = vld [vmem:[%s1 + $0x10] sm:$0xf]
  %v31 = vld [vmem:[%s1 + $0x14] sm:$0xf]
  %v32 = vld [vmem:[%s1 + $0x18] sm:$0xf]
  %v33 = vld [vmem:[%s1 + $0x1c] sm:$0xf]
  %v34 = vld [vmem:[%s1 + $0x20] sm:$0xf]
  %v35 = vld [vmem:[%s1 + $0x24] sm:$0xf]
  %v36 = vld [vmem:[%s1 + $0x28] sm:$0xf]
  %v37 = vld [vmem:[%s1 + $0x2c] sm:$0xf]
  %v38 = vld [vmem:[%s1 + $0x30] sm:$0xf]
  %v39 = vld [vmem:[%s1 + $0x34] sm:$0xf]
  %v40 = vld [vmem:[%s1 + $0x38] sm:$0xf]
  %v41 = vld [vmem:[%s1 + $0x3c] sm:$0xf]
  %v42 = vld [vmem:[%s1 + $0x40] sm:$0xf]
  %v43 = vld [vmem:[%s1 + $0x44] sm:$0xf]
  %v44 = vld [vmem:[%s1 + $0x48] sm:$0xf]
  %v45 = vld [vmem:[%s1 + $0x4c] sm:$0xf]
  %v46 = vld [vmem:[%s1 + $0x50] sm:$0xf]
  %v47 = vld [vmem:[%s1 + $0x54] sm:$0xf]
  %v48 = vld [vmem:[%s1 + $0x58] sm:$0xf]
  %v49 = vld [vmem:[%s1 + $0x5c] sm:$0xf]
  %v50 = vld [vmem:[%s1 + $0x60] sm:$0xf]
  %v51 = vld [vmem:[%s1 + $0x64] sm:$0xf]
  %v52 = vld [vmem:[%s1 + $0x68] sm:$0xf]
  %v53 = vld [vmem:[%s1 + $0x6c] sm:$0xf]
  %v54 = vld [vmem:[%s1 + $0x70] sm:$0xf]
  %v55 = vld [vmem:[%s1 + $0x74] sm:$0xf]
  %v56 = vld [vmem:[%s1 + $0x78] sm:$0xf]
  %v57 = vld [vmem:[%s1 + $0x7c] sm:$0xf]
  %v58 = vld [vmem:[%s1 + $0x80] sm:$0xf]
  %v59 = vld [vmem:[%s1 + $0x84] sm:$0xf]
  %v60 = vld [vmem:[%s1 + $0x88] sm:$0xf]
  %v61 = vld [vmem:[%s1 + $0x8c] sm:$0xf]
  %v62 = vld [vmem:[%s1 + $0x90] sm:$0xf]
  %v63 = vld [vmem:[%s1 + $0x94] sm:$0xf]
  %v64 = vld [vmem:[%s1 + $0x98] sm:$0xf]
  %v65 = vld [vmem:[%s1 + $0x9c] sm:$0xf]
  %v66 = vld [vmem:[%s1 + $0xa0] sm:$0xf]
  %v67 = vld [vmem:[%s1 + $0xa4] sm:$0xf]
  %v68 = vld [vmem:[%s1 + $0xa8] sm:$0xf]
  %v69 = vld [vmem:[%s1 + $0xac] sm:$0xf]
  %v70 = vld [vmem:[%s1 + $0xb0] sm:$0xf]
  %v71 = vld [vmem:[%s1 + $0xb4] sm:$0xf]
  %v72 = vld [vmem:[%s1 + $0xb8] sm:$0xf]
  %v73 = vld [vmem:[%s1 + $0xbc] sm:$0xf]
  %v74 = vld [vmem:[%s1 + $0xc0] sm:$0xf]
  %v75 = vld [vmem:[%s1 + $0xc4] sm:$0xf]
  %v76 = vld [vmem:[%s1 + $0xc8] sm:$0xf]
  %v77 = vld [vmem:[%s1 + $0xcc] sm:$0xf]
  %v78 = vld [vmem:[%s1 + $0xd0] sm:$0xf]
  %v79 = vld [vmem:[%s1 + $0xd4] sm:$0xf]
  %v80 = vld [vmem:[%s1 + $0xd8] sm:$0xf]
  %v81 = vld [vmem:[%s1 + $0xdc] sm:$0xf]
  %v82 = vld [vmem:[%s1 + $0xe0] sm:$0xf]
  %v83 = vld [vmem:[%s1 + $0xe4] sm:$0xf]
  %v84 = vld [vmem:[%s1 + $0xe8] sm:$0xf]
  %v85 = vld [vmem:[%s1 + $0xec] sm:$0xf]
  %v86 = vld [vmem:[%s1 + $0xf0] sm:$0xf]
  %v87 = vld [vmem:[%s1 + $0xf4] sm:$0xf]
  %v88 = vld [vmem:[%s1 + $0xf8] sm:$0xf]
  %v89 = vld [vmem:[%s1 + $0xfc] sm:$0xf]
  %v90 = vld [vmem:[%s2] sm:$0x1]
  %v92 = vlaneseq
  %v93 = vshrl.u32 %v92, 7
  %v94 = vsub.s32 0, %v93
  %v95 = vrot.slane %v90, %v94
  %v105 = vunpack.c.l.b16 %v18
  %v106 = vunpack.c.h.b16 %v18
  %v107 = vunpack.c.l.b16 %v19
  %v108 = vunpack.c.h.b16 %v19
  %v109 = vunpack.c.l.b16 %v20
  %v110 = vunpack.c.h.b16 %v20
  %v111 = vunpack.c.l.b16 %v21
  %v112 = vunpack.c.h.b16 %v21
  %v113 = vunpack.c.l.b16 %v22
  %v114 = vunpack.c.h.b16 %v22
  %v115 = vunpack.c.l.b16 %v23
  %v116 = vunpack.c.h.b16 %v23
  %v117 = vunpack.c.l.b16 %v24
  %v118 = vunpack.c.h.b16 %v24
  %v119 = vunpack.c.l.b16 %v25
  %v120 = vunpack.c.h.b16 %v25
  %v121 = vpack.c.b16 %v109, %v105
  %v122 = vpack.c.b16 %v110, %v106
  %v123 = vpack.c.b16 %v111, %v107
  %v124 = vpack.c.b16 %v112, %v108
  %v125 = vpack.c.b16 %v117, %v113
  %v126 = vpack.c.b16 %v118, %v114
  %v127 = vpack.c.b16 %v119, %v115
  %v128 = vpack.c.b16 %v120, %v116
  %v201 = vunpack.c.l.b16 %v26
  %v202 = vunpack.c.l.b16 %v27
  %v203 = vunpack.c.l.b16 %v28
  %v204 = vunpack.c.l.b16 %v29
  %v205 = vunpack.c.l.b16 %v30
  %v206 = vunpack.c.l.b16 %v31
  %v207 = vunpack.c.l.b16 %v32
  %v208 = vunpack.c.l.b16 %v33
  %v209 = vunpack.c.l.b16 %v34
  %v210 = vunpack.c.l.b16 %v35
  %v211 = vunpack.c.l.b16 %v36
  %v212 = vunpack.c.l.b16 %v37
  %v213 = vunpack.c.l.b16 %v38
  %v214 = vunpack.c.l.b16 %v39
  %v215 = vunpack.c.l.b16 %v40
  %v216 = vunpack.c.l.b16 %v41
  %v217 = vunpack.c.l.b16 %v42
  %v218 = vunpack.c.l.b16 %v43
  %v219 = vunpack.c.l.b16 %v44
  %v220 = vunpack.c.l.b16 %v45
  %v221 = vunpack.c.l.b16 %v46
  %v222 = vunpack.c.l.b16 %v47
  %v223 = vunpack.c.l.b16 %v48
  %v224 = vunpack.c.l.b16 %v49
  %v225 = vunpack.c.l.b16 %v50
  %v226 = vunpack.c.l.b16 %v51
  %v227 = vunpack.c.l.b16 %v52
  %v228 = vunpack.c.l.b16 %v53
  %v229 = vunpack.c.l.b16 %v54
  %v230 = vunpack.c.l.b16 %v55
  %v231 = vunpack.c.l.b16 %v56
  %v232 = vunpack.c.l.b16 %v57
  %v233 = vunpack.c.l.b16 %v58
  %v234 = vunpack.c.l.b16 %v59
  %v235 = vunpack.c.l.b16 %v60
  %v236 = vunpack.c.l.b16 %v61
  %v237 = vunpack.c.l.b16 %v62
  %v238 = vunpack.c.l.b16 %v63
  %v239 = vunpack.c.l.b16 %v64
  %v240 = vunpack.c.l.b16 %v65
  %v241 = vunpack.c.l.b16 %v66
  %v242 = vunpack.c.l.b16 %v67
  %v243 = vunpack.c.l.b16 %v68
  %v244 = vunpack.c.l.b16 %v69
  %v245 = vunpack.c.l.b16 %v70
  %v246 = vunpack.c.l.b16 %v71
  %v247 = vunpack.c.l.b16 %v72
  %v248 = vunpack.c.l.b16 %v73
  %v249 = vunpack.c.l.b16 %v74
  %v250 = vunpack.c.l.b16 %v75
  %v251 = vunpack.c.l.b16 %v76
  %v252 = vunpack.c.l.b16 %v77
  %v253 = vunpack.c.l.b16 %v78
  %v254 = vunpack.c.l.b16 %v79
  %v255 = vunpack.c.l.b16 %v80
  %v256 = vunpack.c.l.b16 %v81
  %v257 = vunpack.c.l.b16 %v82
  %v258 = vunpack.c.l.b16 %v83
  %v259 = vunpack.c.l.b16 %v84
  %v260 = vunpack.c.l.b16 %v85
  %v261 = vunpack.c.l.b16 %v86
  %v262 = vunpack.c.l.b16 %v87
  %v263 = vunpack.c.l.b16 %v88
  %v264 = vunpack.c.l.b16 %v89
  %v265 = vpack.c.b16 %v202, %v201
  %v266 = vpack.c.b16 %v204, %v203
  %v267 = vpack.c.b16 %v206, %v205
  %v268 = vpack.c.b16 %v208, %v207
  %v269 = vpack.c.b16 %v210, %v209
  %v270 = vpack.c.b16 %v212, %v211
  %v271 = vpack.c.b16 %v214, %v213
  %v272 = vpack.c.b16 %v216, %v215
  %v273 = vpack.c.b16 %v218, %v217
  %v274 = vpack.c.b16 %v220, %v219
  %v275 = vpack.c.b16 %v222, %v221
  %v276 = vpack.c.b16 %v224, %v223
  %v277 = vpack.c.b16 %v226, %v225
  %v278 = vpack.c.b16 %v228, %v227
  %v279 = vpack.c.b16 %v230, %v229
  %v280 = vpack.c.b16 %v232, %v231
  %v281 = vpack.c.b16 %v234, %v233
  %v282 = vpack.c.b16 %v236, %v235
  %v283 = vpack.c.b16 %v238, %v237
  %v284 = vpack.c.b16 %v240, %v239
  %v285 = vpack.c.b16 %v242, %v241
  %v286 = vpack.c.b16 %v244, %v243
  %v287 = vpack.c.b16 %v246, %v245
  %v288 = vpack.c.b16 %v248, %v247
  %v289 = vpack.c.b16 %v250, %v249
  %v290 = vpack.c.b16 %v252, %v251
  %v291 = vpack.c.b16 %v254, %v253
  %v292 = vpack.c.b16 %v256, %v255
  %v293 = vpack.c.b16 %v258, %v257
  %v294 = vpack.c.b16 %v260, %v259
  %v295 = vpack.c.b16 %v262, %v261
  %v296 = vpack.c.b16 %v264, %v263
  %329 = vmatprep.subr.bf16.mxu0 0
  %330 = vmatpush1.bf16.msra.mxu0 %v272
  %331 = vmatprep.subr.bf16.mxu0 0
  %332 = vmatpush1.bf16.msra.mxu0 %v271
  %333 = vmatprep.subr.bf16.mxu0 0
  %334 = vmatpush1.bf16.msra.mxu0 %v270
  %335 = vmatprep.subr.bf16.mxu0 0
  %336 = vmatpush1.bf16.msra.mxu0 %v269
  %337 = vmatprep.subr.bf16.mxu0 0
  %338 = vmatpush1.bf16.msra.mxu0 %v268
  %339 = vmatprep.subr.bf16.mxu0 0
  %340 = vmatpush1.bf16.msra.mxu0 %v267
  %341 = vmatprep.subr.bf16.mxu0 0
  %342 = vmatpush1.bf16.msra.mxu0 %v266
  %343 = vmatprep.subr.bf16.mxu0 0
  %344 = vmatpush1.bf16.msra.mxu0 %v265
  %345 = vmatprep.subr.bf16.mxu0 0
  %346 = vmatpush2.bf16.msra.mxu0 %v280
  %347 = vmatprep.subr.bf16.mxu0 0
  %348 = vmatpush2.bf16.msra.mxu0 %v279
  %349 = vmatprep.subr.bf16.mxu0 0
  %350 = vmatpush2.bf16.msra.mxu0 %v278
  %351 = vmatprep.subr.bf16.mxu0 0
  %352 = vmatpush2.bf16.msra.mxu0 %v277
  %353 = vmatprep.subr.bf16.mxu0 0
  %354 = vmatpush2.bf16.msra.mxu0 %v276
  %355 = vmatprep.subr.bf16.mxu0 0
  %356 = vmatpush2.bf16.msra.mxu0 %v275
  %357 = vmatprep.subr.bf16.mxu0 0
  %358 = vmatpush2.bf16.msra.mxu0 %v274
  %359 = vmatprep.subr.bf16.mxu0 0
  %360 = vmatpush2.bf16.msra.mxu0 %v273
  %361 = vmatprep.mubr.bf16.mxu0 %v122
  %362 = vmatmul.mubr.bf16.gmra.mxu0 %v121
  %v363 = vpop.f32.mrf.mxu0
  %v364 = vadd.f32 %v95, %v363
  %v365 = vpop.f32.mrf.mxu0
  %v366 = vpop.f32.mrf.mxu0
  %v367 = vadd.f32 %v95, %v366
  %v368 = vpop.f32.mrf.mxu0
  %369 = vmatprep.mubr.bf16.mxu0 %v126
  %370 = vmatmul.mubr.bf16.gmra.mxu0 %v125
  %v371 = vpop.f32.mrf.mxu0
  %v372 = vadd.f32 %v95, %v371
  %v373 = vpop.f32.mrf.mxu0
  %v374 = vpop.f32.mrf.mxu0
  %v375 = vadd.f32 %v95, %v374
  %v376 = vpop.f32.mrf.mxu0
  %377 = vdwg.mxu0
  %378 = vmatprep.subr.bf16.mxu0 0
  %379 = vmatpush1.bf16.msra.mxu0 %v288
  %380 = vmatprep.subr.bf16.mxu0 0
  %381 = vmatpush1.bf16.msra.mxu0 %v287
  %382 = vmatprep.subr.bf16.mxu0 0
  %383 = vmatpush1.bf16.msra.mxu0 %v286
  %384 = vmatprep.subr.bf16.mxu0 0
  %385 = vmatpush1.bf16.msra.mxu0 %v285
  %386 = vmatprep.subr.bf16.mxu0 0
  %387 = vmatpush1.bf16.msra.mxu0 %v284
  %388 = vmatprep.subr.bf16.mxu0 0
  %389 = vmatpush1.bf16.msra.mxu0 %v283
  %390 = vmatprep.subr.bf16.mxu0 0
  %391 = vmatpush1.bf16.msra.mxu0 %v282
  %392 = vmatprep.subr.bf16.mxu0 0
  %393 = vmatpush1.bf16.msra.mxu0 %v281
  %394 = vmatprep.subr.bf16.mxu0 0
  %395 = vmatpush2.bf16.msra.mxu0 %v296
  %396 = vmatprep.subr.bf16.mxu0 0
  %397 = vmatpush2.bf16.msra.mxu0 %v295
  %398 = vmatprep.subr.bf16.mxu0 0
  %399 = vmatpush2.bf16.msra.mxu0 %v294
  %400 = vmatprep.subr.bf16.mxu0 0
  %401 = vmatpush2.bf16.msra.mxu0 %v293
  %402 = vmatprep.subr.bf16.mxu0 0
  %403 = vmatpush2.bf16.msra.mxu0 %v292
  %404 = vmatprep.subr.bf16.mxu0 0
  %405 = vmatpush2.bf16.msra.mxu0 %v291
  %406 = vmatprep.subr.bf16.mxu0 0
  %407 = vmatpush2.bf16.msra.mxu0 %v290
  %408 = vmatprep.subr.bf16.mxu0 0
  %409 = vmatpush2.bf16.msra.mxu0 %v289
  %410 = vmatprep.mubr.bf16.mxu0 %v124
  %411 = vmatmul.mubr.bf16.gmra.mxu0 %v123
  %v412 = vpop.f32.mrf.mxu0
  %v413 = vadd.f32 %v364, %v412
  %v414 = vpop.f32.mrf.mxu0
  %v415 = vpop.f32.mrf.mxu0
  %v416 = vadd.f32 %v367, %v415
  %v417 = vpop.f32.mrf.mxu0
  %418 = vmatprep.mubr.bf16.mxu0 %v128
  %419 = vmatmul.mubr.bf16.gmra.mxu0 %v127
  %v420 = vpop.f32.mrf.mxu0
  %v421 = vadd.f32 %v372, %v420
  %v422 = vpop.f32.mrf.mxu0
  %v423 = vpop.f32.mrf.mxu0
  %v424 = vadd.f32 %v375, %v423
  %v425 = vpop.f32.mrf.mxu0
  %426 = vdwg.mxu0
  %v427 = vld [vmem:[%s3] sm:$0xff]
  %v428 = vld [vmem:[%s3 + $0x8] sm:$0xff]
  %v429 = vld [vmem:[%s3 + $0x10] sm:$0xff]
  %v430 = vld [vmem:[%s3 + $0x18] sm:$0xff]
  %v431 = vadd.f32 %v413, %v427
  %v432 = vadd.f32 %v416, %v428
  %v433 = vadd.f32 %v421, %v429
  %v434 = vadd.f32 %v424, %v430
  %435 = vst [vmem:[%s4] sm:$0xff] %v431
  %436 = vst [vmem:[%s4 + $0x8] sm:$0xff] %v432
  %437 = vst [vmem:[%s4 + $0x10] sm:$0xff] %v433
  %438 = vst [vmem:[%s4 + $0x18] sm:$0xff] %v434
  // Predicated region
  $region18: #{wave_mae_forward.27} parent=0 // pred_check
    _
  $region19: #{wave_mae_forward.27} parent=0 // pred_check_branch
    %440 = sbr.rel (0) target = $region21
  $region20: #{wave_mae_forward.27} parent=0 // pred_region
    _
  $region21: #{wave_mae_forward.27} parent=0 // pred_fallthru
    _
  // Predicated region
  $region22: #{wave_mae_forward.27} parent=0 // pred_check
    _
  $region23: #{wave_mae_forward.27} parent=0 // pred_check_branch
    %442 = sbr.rel (0) target = $region25
  $region24: #{wave_mae_forward.27} parent=0 // pred_region
    _
  $region25: #{wave_mae_forward.27} parent=0 // pred_fallthru
    _

// kernel: wave_mae_forward.30
$region0: #{wave_mae_forward.30}
  #allocation0 [shape = 'u32[]', space=smem, size = 0x4, offset = 0x4, fixed_abs, tag = 'smem constant byte address 0x4 - core index']
  #allocation1 [shape = 'u32[144,128]{1,0:T(1,128)}', space=vmem, size = 0x12000, scoped, tag = 'internal scratch']
  %s0 = inlined_call_operand.vmem [shape: bf16[32,128], index: 0, kind: input, shape index: {}]
  %s1 = inlined_call_operand.vmem [shape: bf16[128,128], index: 1, kind: input, shape index: {}]
  %s2 = inlined_call_operand.hbm [shape: f32[1,128], index: 2, kind: input, shape index: {}]
  %s3 = inlined_call_operand.vmem [shape: f32[32,128], index: 3, kind: input, shape index: {}]
  %s4 = inlined_call_operand.vmem [shape: f32[32,128], index: 4, kind: output, shape index: {}]
  %s5 = sld [smem:[#allocation0]]
  $region30: #{wave_mae_forward.30} parent=0
    _
  %s7 = ssub.s32 1, %s5
  %s8 = scalar_select 0, %s7, %s5
  $region1: #{wave_mae_forward.30} parent=0
    #allocation2 [shape = 'u8[512]{0}', space=vmem, size = 0x400, scoped, tag = 'input window, operand 2, single buffered']
    #allocation3 [shape = 's32[1]{0}', space=sflag, size = 0x4, scoped, tag = 'scoped memory for wave_mae_forward.30']
    %9 = vsyncpa [#allocation3], 0
    // Predicated region
    $region2: #{wave_mae_forward.30} parent=1 // pred_check
      _
    $region3: #{wave_mae_forward.30} parent=1 // pred_check_branch
      %11 = sbr.rel (0) target = $region5
    $region4: #{wave_mae_forward.30} parent=1 // pred_region
      _
    $region5: #{wave_mae_forward.30} parent=1 // pred_fallthru
      _
    // Predicated region
    $region6: #{wave_mae_forward.30} parent=1 // pred_check
      _
    $region7: #{wave_mae_forward.30} parent=1 // pred_check_branch
      %13 = sbr.rel (0) target = $region9
    $region8: #{wave_mae_forward.30} parent=1 // pred_region
      _
    $region9: #{wave_mae_forward.30} parent=1 // pred_fallthru
      _
    // Predicated region
    $region10: #{wave_mae_forward.30} parent=1 // pred_check
      _
    $region11: #{wave_mae_forward.30} parent=1 // pred_check_branch
      %15 = sbr.rel (0) target = $region13
    $region12: #{wave_mae_forward.30} parent=1 // pred_region
      %s17 = ssub.s32 16, 16
      %18 = vsyncadd [#allocation3], %s17
      %s20 = sshll.u32 [#allocation2], 4
      %s21 = int_to_ptr.vmem [resolvable:$true] %s20
      %23 = dma.hbm_to_vmem [thread:$0]  %s2, 16, %s21, [#allocation3]
    $region13: #{wave_mae_forward.30} parent=1 // pred_fallthru
      _
    // Predicated region
    $region14: #{wave_mae_forward.30} parent=1 // pred_check
      _
    $region15: #{wave_mae_forward.30} parent=1 // pred_check_branch
      %25 = sbr.rel (0) target = $region17
    $region16: #{wave_mae_forward.30} parent=1 // pred_region
      _
    $region17: #{wave_mae_forward.30} parent=1 // pred_fallthru
      _
    // Predicated region
    $region18: #{wave_mae_forward.30} parent=1 // pred_check
      _
    $region19: #{wave_mae_forward.30} parent=1 // pred_check_branch
      %27 = sbr.rel (0) target = $region21
    $region20: #{wave_mae_forward.30} parent=1 // pred_region
      %28 = dma.done [#allocation3], 16
    $region21: #{wave_mae_forward.30} parent=1 // pred_fallthru
      _
    %v30 = vld [vmem:[%s0] sm:$0xf]
    %v31 = vld [vmem:[%s0 + $0x4] sm:$0xf]
    %v32 = vld [vmem:[%s0 + $0x8] sm:$0xf]
    %v33 = vld [vmem:[%s0 + $0xc] sm:$0xf]
    %v34 = vld [vmem:[%s1] sm:$0xf]
    %v35 = vld [vmem:[%s1 + $0x4] sm:$0xf]
    %v36 = vld [vmem:[%s1 + $0x8] sm:$0xf]
    %v37 = vld [vmem:[%s1 + $0xc] sm:$0xf]
    %v38 = vld [vmem:[%s1 + $0x10] sm:$0xf]
    %v39 = vld [vmem:[%s1 + $0x14] sm:$0xf]
    %v40 = vld [vmem:[%s1 + $0x18] sm:$0xf]
    %v41 = vld [vmem:[%s1 + $0x1c] sm:$0xf]
    %v42 = vld [vmem:[%s1 + $0x20] sm:$0xf]
    %v43 = vld [vmem:[%s1 + $0x24] sm:$0xf]
    %v44 = vld [vmem:[%s1 + $0x28] sm:$0xf]
    %v45 = vld [vmem:[%s1 + $0x2c] sm:$0xf]
    %v46 = vld [vmem:[%s1 + $0x30] sm:$0xf]
    %v47 = vld [vmem:[%s1 + $0x34] sm:$0xf]
    %v48 = vld [vmem:[%s1 + $0x38] sm:$0xf]
    %v49 = vld [vmem:[%s1 + $0x3c] sm:$0xf]
    %v50 = vld [vmem:[#allocation2] sm:$0x1]
    %v52 = vlaneseq
    %v53 = vshrl.u32 %v52, 7
    %v54 = vsub.s32 0, %v53
    %v55 = vrot.slane %v50, %v54
    %v61 = vunpack.c.l.b16 %v30
    %v62 = vunpack.c.l.b16 %v31
    %v63 = vunpack.c.l.b16 %v32
    %v64 = vunpack.c.l.b16 %v33
    %v65 = vpack.c.b16 %v62, %v61
    %v66 = vpack.c.b16 %v64, %v63
    %v85 = vunpack.c.l.b16 %v34
    %v86 = vunpack.c.l.b16 %v35
    %v87 = vunpack.c.l.b16 %v36
    %v88 = vunpack.c.l.b16 %v37
    %v89 = vunpack.c.l.b16 %v38
    %v90 = vunpack.c.l.b16 %v39
    %v91 = vunpack.c.l.b16 %v40
    %v92 = vunpack.c.l.b16 %v41
    %v93 = vunpack.c.l.b16 %v42
    %v94 = vunpack.c.l.b16 %v43
    %v95 = vunpack.c.l.b16 %v44
    %v96 = vunpack.c.l.b16 %v45
    %v97 = vunpack.c.l.b16 %v46
    %v98 = vunpack.c.l.b16 %v47
    %v99 = vunpack.c.l.b16 %v48
    %v100 = vunpack.c.l.b16 %v49
    %v101 = vpack.c.b16 %v86, %v85
    %v102 = vpack.c.b16 %v88, %v87
    %v103 = vpack.c.b16 %v90, %v89
    %v104 = vpack.c.b16 %v92, %v91
    %v105 = vpack.c.b16 %v94, %v93
    %v106 = vpack.c.b16 %v96, %v95
    %v107 = vpack.c.b16 %v98, %v97
    %v108 = vpack.c.b16 %v100, %v99
    %117 = vmatprep.subr.bf16.mxu0 0
    %118 = vmatpush1.bf16.msra.mxu0 %v108
    %119 = vmatprep.subr.bf16.mxu0 0
    %120 = vmatpush1.bf16.msra.mxu0 %v107
    %121 = vmatprep.subr.bf16.mxu0 0
    %122 = vmatpush1.bf16.msra.mxu0 %v106
    %123 = vmatprep.subr.bf16.mxu0 0
    %124 = vmatpush1.bf16.msra.mxu0 %v105
    %125 = vmatprep.subr.bf16.mxu0 0
    %126 = vmatpush1.bf16.msra.mxu0 %v104
    %127 = vmatprep.subr.bf16.mxu0 0
    %128 = vmatpush1.bf16.msra.mxu0 %v103
    %129 = vmatprep.subr.bf16.mxu0 0
    %130 = vmatpush1.bf16.msra.mxu0 %v102
    %131 = vmatprep.subr.bf16.mxu0 0
    %132 = vmatpush1.bf16.msra.mxu0 %v101
    %133 = vmatprep.subr.bf16.mxu0 0
    %134 = vmatpush2.bf16.msra.mxu0 0
    %135 = vmatprep.subr.bf16.mxu0 0
    %136 = vmatpush2.bf16.msra.mxu0 0
    %137 = vmatprep.subr.bf16.mxu0 0
    %138 = vmatpush2.bf16.msra.mxu0 0
    %139 = vmatprep.subr.bf16.mxu0 0
    %140 = vmatpush2.bf16.msra.mxu0 0
    %141 = vmatprep.subr.bf16.mxu0 0
    %142 = vmatpush2.bf16.msra.mxu0 0
    %143 = vmatprep.subr.bf16.mxu0 0
    %144 = vmatpush2.bf16.msra.mxu0 0
    %145 = vmatprep.subr.bf16.mxu0 0
    %146 = vmatpush2.bf16.msra.mxu0 0
    %147 = vmatprep.subr.bf16.mxu0 0
    %148 = vmatpush2.bf16.msra.mxu0 0
    %149 = vmatprep.mubr.bf16.mxu0 0
    %150 = vmatmul.mubr.bf16.gmra.mxu0 %v65
    %v151 = vpop.f32.mrf.mxu0
    %v152 = vadd.f32 %v55, %v151
    %v153 = vpop.f32.mrf.mxu0
    %v154 = vpop.f32.mrf.mxu0
    %v155 = vadd.f32 %v55, %v154
    %v156 = vpop.f32.mrf.mxu0
    %157 = vmatprep.mubr.bf16.mxu0 0
    %158 = vmatmul.mubr.bf16.gmra.mxu0 %v66
    %v159 = vpop.f32.mrf.mxu0
    %v160 = vadd.f32 %v55, %v159
    %v161 = vpop.f32.mrf.mxu0
    %v162 = vpop.f32.mrf.mxu0
    %v163 = vadd.f32 %v55, %v162
    %v164 = vpop.f32.mrf.mxu0
    %165 = vdwg.mxu0
    %v166 = vld [vmem:[%s3] sm:$0xff]
    %v167 = vld [vmem:[%s3 + $0x8] sm:$0xff]
    %v168 = vld [vmem:[%s3 + $0x10] sm:$0xff]
    %v169 = vld [vmem:[%s3 + $0x18] sm:$0xff]
    %v170 = vadd.f32 %v152, %v166
    %v171 = vadd.f32 %v155, %v167
    %v172 = vadd.f32 %v160, %v168
    %v173 = vadd.f32 %v163, %v169
    %174 = vst [vmem:[%s4] sm:$0xff] %v170
    %175 = vst [vmem:[%s4 + $0x8] sm:$0xff] %v171
    %176 = vst [vmem:[%s4 + $0x10] sm:$0xff] %v172
    %177 = vst [vmem:[%s4 + $0x18] sm:$0xff] %v173
    // Predicated region
    $region22: #{wave_mae_forward.30} parent=1 // pred_check
      _
    $region23: #{wave_mae_forward.30} parent=1 // pred_check_branch
      %179 = sbr.rel (0) target = $region25
    $region24: #{wave_mae_forward.30} parent=1 // pred_region
      _
    $region25: #{wave_mae_forward.30} parent=1 // pred_fallthru
      _
    // Predicated region
    $region26: #{wave_mae_forward.30} parent=1 // pred_check
      _
    $region27: #{wave_mae_forward.30} parent=1 // pred_check_branch
      %181 = sbr.rel (0) target = $region29
    $region28: #{wave_mae_forward.30} parent=1 // pred_region
      _
    $region29: #{wave_mae_forward.30} parent=1 // pred_fallthru
      _
    %182 = vsyncpa [#allocation3], 1

// kernel: wave_mae_forward.31
$region0: #{wave_mae_forward.31}
  #allocation0 [shape = 'u32[]', space=smem, size = 0x4, offset = 0x4, fixed_abs, tag = 'smem constant byte address 0x4 - core index']
  #allocation1 [shape = 'u32[144,128]{1,0:T(1,128)}', space=vmem, size = 0x12000, scoped, tag = 'internal scratch']
  %s0 = inlined_call_operand.vmem [shape: f32[32,128], index: 0, kind: input, shape index: {}]
  %s1 = inlined_call_operand.hbm [shape: f32[1,128], index: 1, kind: input, shape index: {}]
  %s2 = inlined_call_operand.hbm [shape: f32[1,128], index: 2, kind: input, shape index: {}]
  %s3 = inlined_call_operand.vmem [shape: bf16[128,512], index: 3, kind: input, shape index: {}]
  %s4 = inlined_call_operand.vmem [shape: f32[1,512], index: 4, kind: input, shape index: {}]
  %s5 = inlined_call_operand.vmem [shape: bf16[32,512], index: 5, kind: output, shape index: {}]
  %s6 = sld [smem:[#allocation0]]
  $region133: #{wave_mae_forward.31} parent=0
    _
  %s8 = ssub.s32 1, %s6
  %s9 = scalar_select 0, %s8, %s6
  $region1: #{wave_mae_forward.31} parent=0
    #allocation2 [shape = 'u8[512]{0}', space=vmem, size = 0x400, scoped, tag = 'input window, operand 1, single buffered']
    #allocation3 [shape = 's32[2]{0}', space=sflag, size = 0x8, scoped, tag = 'scoped memory for wave_mae_forward.31']
    #allocation4 [shape = 'u8[512]{0}', space=vmem, size = 0x400, scoped, tag = 'input window, operand 2, single buffered']
    #allocation5 [shape = 's32[1]{0}', space=sflag, size = 0x4, scoped, tag = 'scoped memory for wave_mae_forward.31']
    #allocation6 [shape = 'u8[131072]{0}', space=vmem, size = 0x20000, scoped, tag = 'input window, operand 3']
    #allocation7 [shape = 'u8[32768]{0}', space=vmem, size = 0x8000, scoped, tag = 'output window, operand 0']
    %10 = vsyncpa [#allocation3], 0
    %11 = vsyncpa [#allocation5], 0
    loop: start=0, step=1, limit=4
    $region2: #{wave_mae_forward.31} parent=1 // loop_pre_header
      _
    $region3: #{wave_mae_forward.31} parent=1 // loop_header
      %s13 = sphi 0, %s17
      %p14 = scmp.ge.s32.totalorder %s13, 4
      %s20 = sphi 0, %s32
      %s21 = sphi 0, %s28
      %s22 = sphi 0, %s20
      %s23 = sphi 0, %s21
      %s24 = sphi 0, %s22
      %s25 = sphi 0, %s23
      %s35 = sphi 0, %s37
      %s38 = sphi 0, %s35
      %s39 = sphi 0, %s38
      %s55 = sphi 0, %s39
      %s59 = sphi 0, %s59
      %s61 = sphi 0, %s59
      %s62 = sphi 0, %s61
      %s76 = sphi 0, %s62
      %s80 = sphi 0, %s80
      %s82 = sphi 0, %s80
      %s83 = sphi 0, %s82
      %s97 = sphi 0, %s83
      %s103 = sphi 0, %s105
      %s106 = sphi 0, %s103
      %s107 = sphi 0, %s106
      %s123 = sphi 0, %s107
      %s129 = sphi 0, %s131
      %s132 = sphi 0, %s129
      %s133 = sphi 0, %s132
      %s149 = sphi 0, %s133
      %s157 = sphi 0, %s159
      %s160 = sphi 0, %s157
      %s161 = sphi 0, %s160
      %s177 = sphi 0, %s161
    $region4: #{wave_mae_forward.31} parent=1 // loop_header_branch
      %16 = sbr.rel (%p14) target = $region8
    $region5: #{wave_mae_forward.31} parent=1 // loop_body
      %s18 = ssub.s32 %s13, 1
      %s19 = ssub.s32 %s13, 2
      %s26 = sadd.s32 1, %s21
      %p27 = scmp.ge.s32.totalorder %s26, 2
      %s28 = scalar_select %p27, 0, %s26
      %s29 = sadd.s32 1, %s20
      %s30 = scalar_select %p27, %s29, %s20
      %p31 = scmp.ge.s32.totalorder %s30, 1
      %s32 = scalar_select %p31, 0, %s30
      %s33 = ssub.s32 %s20, %s32
      %p34 = scmp.eq.s32.totalorder %s33, 0
      %s36 = sadd.s32 %s35, 1
      %s37 = scalar_select %p34, %s35, %s36
      %p40 = pneg %p34
      %p41 = scmp.eq.s32.totalorder %s13, 1
      %p42 = por %p40, %p41
      %p43 = scmp.ne.s32.totalorder %s35, %s38
      %p44 = scmp.eq.s32.totalorder %s13, 0
      %p45 = por %p43, %p44
      %p46 = scmp.ne.s32.totalorder %s35, %s38
      %p47 = scmp.eq.s32.totalorder %s18, 1
      %p48 = por %p46, %p47
      %p49 = scmp.ne.s32.totalorder %s38, %s39
      %p50 = scmp.eq.s32.totalorder %s18, 0
      %p51 = por %p49, %p50
      %p52 = scmp.ne.s32.totalorder %s38, %s39
      %p53 = scmp.eq.s32.totalorder %s19, 1
      %p54 = por %p52, %p53
      %p56 = scmp.ne.s32.totalorder %s39, %s55
      %p57 = scmp.eq.s32.totalorder %s19, 0
      %p58 = por %p56, %p57
      %s60 = sadd.s32 %s59, 1
      %p63 = scmp.eq.s32.totalorder %s13, 1
      %p64 = scmp.ne.s32.totalorder %s59, %s61
      %p65 = scmp.eq.s32.totalorder %s13, 0
      %p66 = por %p64, %p65
      %p67 = scmp.ne.s32.totalorder %s59, %s61
      %p68 = scmp.eq.s32.totalorder %s18, 1
      %p69 = por %p67, %p68
      %p70 = scmp.ne.s32.totalorder %s61, %s62
      %p71 = scmp.eq.s32.totalorder %s18, 0
      %p72 = por %p70, %p71
      %p73 = scmp.ne.s32.totalorder %s61, %s62
      %p74 = scmp.eq.s32.totalorder %s19, 1
      %p75 = por %p73, %p74
      %p77 = scmp.ne.s32.totalorder %s62, %s76
      %p78 = scmp.eq.s32.totalorder %s19, 0
      %p79 = por %p77, %p78
      %s81 = sadd.s32 %s80, 1
      %p84 = scmp.eq.s32.totalorder %s13, 1
      %p85 = scmp.ne.s32.totalorder %s80, %s82
      %p86 = scmp.eq.s32.totalorder %s13, 0
      %p87 = por %p85, %p86
      %p88 = scmp.ne.s32.totalorder %s80, %s82
      %p89 = scmp.eq.s32.totalorder %s18, 1
      %p90 = por %p88, %p89
      %p91 = scmp.ne.s32.totalorder %s82, %s83
      %p92 = scmp.eq.s32.totalorder %s18, 0
      %p93 = por %p91, %p92
      %p94 = scmp.ne.s32.totalorder %s82, %s83
      %p95 = scmp.eq.s32.totalorder %s19, 1
      %p96 = por %p94, %p95
      %p98 = scmp.ne.s32.totalorder %s83, %s97
      %p99 = scmp.eq.s32.totalorder %s19, 0
      %p100 = por %p98, %p99
      %s101 = ssub.s32 %s21, %s28
      %p102 = scmp.eq.s32.totalorder %s101, 0
      %s104 = sadd.s32 %s103, 1
      %s105 = scalar_select %p102, %s103, %s104
      %p108 = pneg %p102
      %p109 = scmp.eq.s32.totalorder %s13, 1
      %p110 = por %p108, %p109
      %p111 = scmp.ne.s32.totalorder %s103, %s106
      %p112 = scmp.eq.s32.totalorder %s13, 0
      %p113 = por %p111, %p112
      %p114 = scmp.ne.s32.totalorder %s103, %s106
      %p115 = scmp.eq.s32.totalorder %s18, 1
      %p116 = por %p114, %p115
      %p117 = scmp.ne.s32.totalorder %s106, %s107
      %p118 = scmp.eq.s32.totalorder %s18, 0
      %p119 = por %p117, %p118
      %p120 = scmp.ne.s32.totalorder %s106, %s107
      %p121 = scmp.eq.s32.totalorder %s19, 1
      %p122 = por %p120, %p121
      %p124 = scmp.ne.s32.totalorder %s107, %s123
      %p125 = scmp.eq.s32.totalorder %s19, 0
      %p126 = por %p124, %p125
      %s127 = ssub.s32 %s21, %s28
      %p128 = scmp.eq.s32.totalorder %s127, 0
      %s130 = sadd.s32 %s129, 1
      %s131 = scalar_select %p128, %s129, %s130
      %p134 = pneg %p128
      %p135 = scmp.eq.s32.totalorder %s13, 1
      %p136 = por %p134, %p135
      %p137 = scmp.ne.s32.totalorder %s129, %s132
      %p138 = scmp.eq.s32.totalorder %s13, 0
      %p139 = por %p137, %p138
      %p140 = scmp.ne.s32.totalorder %s129, %s132
      %p141 = scmp.eq.s32.totalorder %s18, 1
      %p142 = por %p140, %p141
      %p143 = scmp.ne.s32.totalorder %s132, %s133
      %p144 = scmp.eq.s32.totalorder %s18, 0
      %p145 = por %p143, %p144
      %p146 = scmp.ne.s32.totalorder %s132, %s133
      %p147 = scmp.eq.s32.totalorder %s19, 1
      %p148 = por %p146, %p147
      %p150 = scmp.ne.s32.totalorder %s133, %s149
      %p151 = scmp.eq.s32.totalorder %s19, 0
      %p152 = por %p150, %p151
      %s153 = ssub.s32 %s20, %s32
      %s154 = ssub.s32 %s21, %s28
      %s155 = sor.u32 %s153, %s154
      %p156 = scmp.eq.s32.totalorder %s155, 0
      %s158 = sadd.s32 %s157, 1
      %s159 = scalar_select %p156, %s157, %s158
      %p162 = pneg %p156
      %p163 = scmp.eq.s32.totalorder %s13, 1
      %p164 = por %p162, %p163
      %p165 = scmp.ne.s32.totalorder %s157, %s160
      %p166 = scmp.eq.s32.totalorder %s13, 0
      %p167 = por %p165, %p166
      %p168 = scmp.ne.s32.totalorder %s157, %s160
      %p169 = scmp.eq.s32.totalorder %s18, 1
      %p170 = por %p168, %p169
      %p171 = scmp.ne.s32.totalorder %s160, %s161
      %p172 = scmp.eq.s32.totalorder %s18, 0
      %p173 = por %p171, %p172
      %p174 = scmp.ne.s32.totalorder %s160, %s161
      %p175 = scmp.eq.s32.totalorder %s19, 1
      %p176 = por %p174, %p175
      %p178 = scmp.ne.s32.totalorder %s161, %s177
      %p179 = scmp.eq.s32.totalorder %s19, 0
      %p180 = por %p178, %p179
      %p181 = scmp.le.s32.totalorder 1, %s13
      %p182 = scmp.lt.s32.totalorder %s13, 3
      %p183 = pnand %p181, %p182
      %p184 = pneg %p183
      // Predicated region
      $region9: #{wave_mae_forward.31} parent=5 // pred_check
        _
      $region10: #{wave_mae_forward.31} parent=5 // pred_check_branch
        %186 = sbr.rel (%p183) target = $region12
      $region11: #{wave_mae_forward.31} parent=5 // pred_region
        %s187 = ssub.s32 %s13, 1
        // Predicated region
        $region13: #{wave_mae_forward.31} parent=11 // pred_check
          %p188 = pneg %p51
        $region14: #{wave_mae_forward.31} parent=11 // pred_check_branch
          %190 = sbr.rel (%p188) target = $region16
        $region15: #{wave_mae_forward.31} parent=11 // pred_region
          %s191 = smul.u32 4, %s22
          %p192 = scmp.lt.s32.totalorder %s191, 3
          %s193 = scalar_select %p192, %s191, 3
          %s194 = smul.addr %s193, 8
          %s195 = scalar_lea.vmem %s0, %s194
          %s196 = smul.u32 4, %s22
        $region16: #{wave_mae_forward.31} parent=11 // pred_fallthru
          _
        // Predicated region
        $region17: #{wave_mae_forward.31} parent=11 // pred_check
          %p197 = pneg %p72
        $region18: #{wave_mae_forward.31} parent=11 // pred_check_branch
          %199 = sbr.rel (%p197) target = $region20
        $region19: #{wave_mae_forward.31} parent=11 // pred_region
          %s201 = ssub.s32 16, 16
          %202 = vsyncadd [#allocation3], %s201
          %s204 = sshll.u32 [#allocation2], 4
          %s205 = int_to_ptr.vmem [resolvable:$true] %s204
          %207 = dma.hbm_to_vmem [thread:$0]  %s1, 16, %s205, [#allocation3]
        $region20: #{wave_mae_forward.31} parent=11 // pred_fallthru
          _
        // Predicated region
        $region21: #{wave_mae_forward.31} parent=11 // pred_check
          %p208 = pneg %p93
        $region22: #{wave_mae_forward.31} parent=11 // pred_check_branch
          %210 = sbr.rel (%p208) target = $region24
        $region23: #{wave_mae_forward.31} parent=11 // pred_region
          %s212 = ssub.s32 16, 16
          %213 = vsyncadd [#allocation5], %s212
          %s215 = sshll.u32 [#allocation4], 4
          %s216 = int_to_ptr.vmem [resolvable:$true] %s215
          %218 = dma.hbm_to_vmem [thread:$0]  %s2, 16, %s216, [#allocation5]
        $region24: #{wave_mae_forward.31} parent=11 // pred_fallthru
          _
      $region12: #{wave_mae_forward.31} parent=5 // pred_fallthru
        _
      %p219 = scmp.lt.s32.totalorder %s13, 2
      // Predicated region
      $region25: #{wave_mae_forward.31} parent=5 // pred_check
        %p220 = pneg %p219
      $region26: #{wave_mae_forward.31} parent=5 // pred_check_branch
        %222 = sbr.rel (%p220) target = $region28
      $region27: #{wave_mae_forward.31} parent=5 // pred_region
        // Predicated region
        $region29: #{wave_mae_forward.31} parent=27 // pred_check
          %p223 = pneg %p113
        $region30: #{wave_mae_forward.31} parent=27 // pred_check_branch
          %225 = sbr.rel (%p223) target = $region32
        $region31: #{wave_mae_forward.31} parent=27 // pred_region
          %s226 = sand.u32 %s103, 1
          %s227 = sand.u32 %s103, 1
          %s228 = smul.addr %s227, 128
          %s229 = scalar_lea.vmem [#allocation6], %s228
          %s230 = smul.u32 2, %s21
          %s231 = smul.addr %s230, 4
          %s232 = scalar_lea.vmem %s3, %s231
          // Predicated region
          $region33: #{wave_mae_forward.31} parent=31 // pred_check
            _
          $region34: #{wave_mae_forward.31} parent=31 // pred_check_branch
            %234 = sbr.rel (0) target = $region36
          $region35: #{wave_mae_forward.31} parent=31 // pred_region
            // Predicated region
            $region37: #{wave_mae_forward.31} parent=35 // pred_check
              _
            $region38: #{wave_mae_forward.31} parent=35 // pred_check_branch
              %236 = sbr.rel (0) target = $region40
            $region39: #{wave_mae_forward.31} parent=35 // pred_region
              // Predicated region
              $region52: #{wave_mae_forward.31} parent=39 // pred_check
                _
              $region53: #{wave_mae_forward.31} parent=39 // pred_check_branch
                %282 = sbr.rel (0) target = $region55
              $region54: #{wave_mae_forward.31} parent=39 // pred_region
                loop: start=0, step=1, limit=1
                $region56: #{wave_mae_forward.31} parent=54 // loop_pre_header
                  _
                $region57: #{wave_mae_forward.31} parent=54 // loop_header
                  %s284 = sphi 0, %s288
                  %p285 = scmp.ge.s32.totalorder %s284, 1
                  %s289 = sphi %s232, %s232
                  %s290 = sphi %s229, %s229
                $region58: #{wave_mae_forward.31} parent=54 // loop_header_branch
                  %287 = sbr.rel (%p285) target = $region62
                $region59: #{wave_mae_forward.31} parent=54 // loop_body
                  %v291 = vld [vmem:[%s289] sm:$0xff]
                  %292 = vst [vmem:[%s290] sm:$0xff] %v291
                  %v293 = vld [vmem:[%s289 + $0x10] sm:$0xff]
                  %294 = vst [vmem:[%s290 + $0x8] sm:$0xff] %v293
                  %v295 = vld [vmem:[%s289 + $0x20] sm:$0xff]
                  %296 = vst [vmem:[%s290 + $0x10] sm:$0xff] %v295
                  %v297 = vld [vmem:[%s289 + $0x30] sm:$0xff]
                  %298 = vst [vmem:[%s290 + $0x18] sm:$0xff] %v297
                  %v299 = vld [vmem:[%s289 + $0x40] sm:$0xff]
                  %300 = vst [vmem:[%s290 + $0x20] sm:$0xff] %v299
                  %v301 = vld [vmem:[%s289 + $0x50] sm:$0xff]
                  %302 = vst [vmem:[%s290 + $0x28] sm:$0xff] %v301
                  %v303 = vld [vmem:[%s289 + $0x60] sm:$0xff]
                  %304 = vst [vmem:[%s290 + $0x30] sm:$0xff] %v303
                  %v305 = vld [vmem:[%s289 + $0x70] sm:$0xff]
                  %306 = vst [vmem:[%s290 + $0x38] sm:$0xff] %v305
                  %v307 = vld [vmem:[%s289 + $0x80] sm:$0xff]
                  %308 = vst [vmem:[%s290 + $0x40] sm:$0xff] %v307
                  %v309 = vld [vmem:[%s289 + $0x90] sm:$0xff]
                  %310 = vst [vmem:[%s290 + $0x48] sm:$0xff] %v309
                  %v311 = vld [vmem:[%s289 + $0xa0] sm:$0xff]
                  %312 = vst [vmem:[%s290 + $0x50] sm:$0xff] %v311
                  %v313 = vld [vmem:[%s289 + $0xb0] sm:$0xff]
                  %314 = vst [vmem:[%s290 + $0x58] sm:$0xff] %v313
                  %v315 = vld [vmem:[%s289 + $0xc0] sm:$0xff]
                  %316 = vst [vmem:[%s290 + $0x60] sm:$0xff] %v315
                  %v317 = vld [vmem:[%s289 + $0xd0] sm:$0xff]
                  %318 = vst [vmem:[%s290 + $0x68] sm:$0xff] %v317
                  %v319 = vld [vmem:[%s289 + $0xe0] sm:$0xff]
                  %320 = vst [vmem:[%s290 + $0x70] sm:$0xff] %v319
                  %v321 = vld [vmem:[%s289 + $0xf0] sm:$0xff]
                  %322 = vst [vmem:[%s290 + $0x78] sm:$0xff] %v321
                $region60: #{wave_mae_forward.31} parent=54 // loop_footer
                  %s288 = sadd.s32 1, %s284
                $region61: #{wave_mae_forward.31} parent=54 // loop_footer_branch
                  %283 = sbr.rel target = $region57
                $region62: #{wave_mae_forward.31} parent=54 // loop_exit
                  _
              $region55: #{wave_mae_forward.31} parent=39 // pred_fallthru
                _
              // Predicated region
              $region63: #{wave_mae_forward.31} parent=39 // pred_check
                _
              $region64: #{wave_mae_forward.31} parent=39 // pred_check_branch
                %324 = sbr.rel target = $region66
              $region65: #{wave_mae_forward.31} parent=39 // pred_region
                _
              $region66: #{wave_mae_forward.31} parent=39 // pred_fallthru
                _
            $region40: #{wave_mae_forward.31} parent=35 // pred_fallthru
              _
            // Predicated region
            $region41: #{wave_mae_forward.31} parent=35 // pred_check
              _
            $region42: #{wave_mae_forward.31} parent=35 // pred_check_branch
              %238 = sbr.rel target = $region44
            $region43: #{wave_mae_forward.31} parent=35 // pred_region
              %s240 = ssub.s32 256, 1
              loop: start=0, step=1, limit=1
              $region45: #{wave_mae_forward.31} parent=43 // loop_pre_header
                _
              $region46: #{wave_mae_forward.31} parent=43 // loop_header
                %s242 = sphi 0, %s246
                %p243 = scmp.ge.s32.totalorder %s242, 1
                %s247 = sphi %s232, %s232
                %s248 = sphi %s229, %s229
              $region47: #{wave_mae_forward.31} parent=43 // loop_header_branch
                %245 = sbr.rel (%p243) target = $region51
              $region48: #{wave_mae_forward.31} parent=43 // loop_body
                %v249 = vld [vmem:[%s247] sm:%s240]
                %250 = vst [vmem:[%s248] sm:%s240] %v249
                %v251 = vld [vmem:[%s247 + $0x10] sm:%s240]
                %252 = vst [vmem:[%s248 + $0x8] sm:%s240] %v251
                %v253 = vld [vmem:[%s247 + $0x20] sm:%s240]
                %254 = vst [vmem:[%s248 + $0x10] sm:%s240] %v253
                %v255 = vld [vmem:[%s247 + $0x30] sm:%s240]
                %256 = vst [vmem:[%s248 + $0x18] sm:%s240] %v255
                %v257 = vld [vmem:[%s247 + $0x40] sm:%s240]
                %258 = vst [vmem:[%s248 + $0x20] sm:%s240] %v257
                %v259 = vld [vmem:[%s247 + $0x50] sm:%s240]
                %260 = vst [vmem:[%s248 + $0x28] sm:%s240] %v259
                %v261 = vld [vmem:[%s247 + $0x60] sm:%s240]
                %262 = vst [vmem:[%s248 + $0x30] sm:%s240] %v261
                %v263 = vld [vmem:[%s247 + $0x70] sm:%s240]
                %264 = vst [vmem:[%s248 + $0x38] sm:%s240] %v263
                %v265 = vld [vmem:[%s247 + $0x80] sm:%s240]
                %266 = vst [vmem:[%s248 + $0x40] sm:%s240] %v265
                %v267 = vld [vmem:[%s247 + $0x90] sm:%s240]
                %268 = vst [vmem:[%s248 + $0x48] sm:%s240] %v267
                %v269 = vld [vmem:[%s247 + $0xa0] sm:%s240]
                %270 = vst [vmem:[%s248 + $0x50] sm:%s240] %v269
                %v271 = vld [vmem:[%s247 + $0xb0] sm:%s240]
                %272 = vst [vmem:[%s248 + $0x58] sm:%s240] %v271
                %v273 = vld [vmem:[%s247 + $0xc0] sm:%s240]
                %274 = vst [vmem:[%s248 + $0x60] sm:%s240] %v273
                %v275 = vld [vmem:[%s247 + $0xd0] sm:%s240]
                %276 = vst [vmem:[%s248 + $0x68] sm:%s240] %v275
                %v277 = vld [vmem:[%s247 + $0xe0] sm:%s240]
                %278 = vst [vmem:[%s248 + $0x70] sm:%s240] %v277
                %v279 = vld [vmem:[%s247 + $0xf0] sm:%s240]
                %280 = vst [vmem:[%s248 + $0x78] sm:%s240] %v279
              $region49: #{wave_mae_forward.31} parent=43 // loop_footer
                %s246 = sadd.s32 1, %s242
              $region50: #{wave_mae_forward.31} parent=43 // loop_footer_branch
                %241 = sbr.rel target = $region46
              $region51: #{wave_mae_forward.31} parent=43 // loop_exit
                _
            $region44: #{wave_mae_forward.31} parent=35 // pred_fallthru
              _
          $region36: #{wave_mae_forward.31} parent=31 // pred_fallthru
            _
          %325 = vnop
        $region32: #{wave_mae_forward.31} parent=27 // pred_fallthru
          _
        // Predicated region
        $region67: #{wave_mae_forward.31} parent=27 // pred_check
          %p326 = pneg %p139
        $region68: #{wave_mae_forward.31} parent=27 // pred_check_branch
          %328 = sbr.rel (%p326) target = $region70
        $region69: #{wave_mae_forward.31} parent=27 // pred_region
          %s329 = smul.u32 2, %s21
          %p330 = scmp.lt.s32.totalorder %s329, 3
          %s331 = scalar_select %p330, %s329, 3
          %s332 = scalar_lea.vmem %s4, %s331
          %s333 = smul.u32 2, %s21
        $region70: #{wave_mae_forward.31} parent=27 // pred_fallthru
          _
      $region28: #{wave_mae_forward.31} parent=5 // pred_fallthru
        _
      %p334 = scmp.le.s32.totalorder 1, %s13
      %p335 = scmp.lt.s32.totalorder %s13, 3
      %p336 = pnand %p334, %p335
      %p337 = pneg %p336
      // Predicated region
      $region71: #{wave_mae_forward.31} parent=5 // pred_check
        _
      $region72: #{wave_mae_forward.31} parent=5 // pred_check_branch
        %339 = sbr.rel (%p336) target = $region74
      $region73: #{wave_mae_forward.31} parent=5 // pred_region
        %s340 = ssub.s32 %s13, 1
        // Predicated region
        $region75: #{wave_mae_forward.31} parent=73 // pred_check
          %p341 = pneg %p72
        $region76: #{wave_mae_forward.31} parent=73 // pred_check_branch
          %343 = sbr.rel (%p341) target = $region78
        $region77: #{wave_mae_forward.31} parent=73 // pred_region
          %344 = dma.done [#allocation3], 16
        $region78: #{wave_mae_forward.31} parent=73 // pred_fallthru
          _
        // Predicated region
        $region79: #{wave_mae_forward.31} parent=73 // pred_check
          %p345 = pneg %p93
        $region80: #{wave_mae_forward.31} parent=73 // pred_check_branch
          %347 = sbr.rel (%p345) target = $region82
        $region81: #{wave_mae_forward.31} parent=73 // pred_region
          %348 = dma.done [#allocation5], 16
        $region82: #{wave_mae_forward.31} parent=73 // pred_fallthru
          _
        %s349 = sand.u32 %s106, 1
        %s350 = sand.u32 %s106, 1
        %s351 = smul.addr %s350, 128
        %s352 = scalar_lea.vmem [#allocation6], %s351
        // Predicated region
        $region83: #{wave_mae_forward.31} parent=73 // pred_check
          %p353 = pneg %p119
        $region84: #{wave_mae_forward.31} parent=73 // pred_check_branch
          %355 = sbr.rel (%p353) target = $region86
        $region85: #{wave_mae_forward.31} parent=73 // pred_region
          _
        $region86: #{wave_mae_forward.31} parent=73 // pred_fallthru
          _
        %s356 = smul.u32 4, %s22
        %p357 = scmp.lt.s32.totalorder %s356, 3
        %s358 = scalar_select %p357, %s356, 3
        %s359 = smul.addr %s358, 8
        %s360 = scalar_lea.vmem %s0, %s359
        %p361 = pneg %p51
        %p362 = pneg %p48
        %p363 = pneg %p72
        %p364 = pneg %p69
        %p365 = pneg %p93
        %p366 = pneg %p90
        %s367 = sand.u32 %s106, 1
        %s368 = sand.u32 %s106, 1
        %s369 = smul.addr %s368, 128
        %s370 = scalar_lea.vmem [#allocation6], %s369
        %p371 = pneg %p119
        %p372 = pneg %p116
        %s373 = smul.u32 2, %s23
        %p374 = scmp.lt.s32.totalorder %s373, 3
        %s375 = scalar_select %p374, %s373, 3
        %s376 = scalar_lea.vmem %s4, %s375
        %p377 = pneg %p145
        %p378 = pneg %p142
        %p379 = pneg %p173
        %p380 = pneg %p170
        %s381 = sand.u32 %s160, 1
        %s382 = sand.u32 %s160, 1
        %s383 = smul.addr %s382, 32
        %s384 = scalar_lea.vmem [#allocation7], %s383
        %s385 = smul.u32 4, %s22
        %p386 = scmp.lt.s32.totalorder %s385, 3
        %s387 = scalar_select %p386, %s385, 3
        %s388 = smul.addr %s387, 8
        %s389 = scalar_lea.vmem %s0, %s388
        %s390 = smul.u32 4, %s22
        %s391 = smul.u32 2, %s23
        %s392 = smul.u32 2, %s23
        %p393 = scmp.lt.s32.totalorder %s392, 3
        %s394 = scalar_select %p393, %s392, 3
        %s395 = scalar_lea.vmem %s4, %s394
        %s396 = smul.u32 2, %s23
        %s397 = smul.u32 4, %s22
        %s398 = smul.u32 2, %s23
        %v400 = vld [vmem:[%s389] sm:$0xff]
        %v401 = vld [vmem:[%s389 + $0x8] sm:$0xff]
        %v402 = vld [vmem:[%s389 + $0x10] sm:$0xff]
        %v403 = vld [vmem:[%s389 + $0x18] sm:$0xff]
        %404 = vadd.xlane.f32.xlu0 %v400
        %v405 = vpop.xlane.xlu0 %404
        %406 = vadd.xlane.f32.xlu0 %v401
        %v407 = vpop.xlane.xlu0 %406
        %408 = vadd.xlane.f32.xlu0 %v402
        %v409 = vpop.xlane.xlu0 %408
        %410 = vadd.xlane.f32.xlu0 %v403
        %v411 = vpop.xlane.xlu0 %410
        %v412 = vrcp.pop 128.0
        %v413 = vmul.f32 %v405, %v412
        %v414 = vmul.f32 %v407, %v412
        %v415 = vmul.f32 %v409, %v412
        %v416 = vmul.f32 %v411, %v412
        %v417 = vsub.f32 %v400, %v413
        %v418 = vsub.f32 %v401, %v414
        %v419 = vsub.f32 %v402, %v415
        %v420 = vsub.f32 %v403, %v416
        %v421 = vmul.f32 %v417, %v417
        %v422 = vmul.f32 %v418, %v418
        %v423 = vmul.f32 %v419, %v419
        %v424 = vmul.f32 %v420, %v420
        %425 = vadd.xlane.f32.xlu0 %v421
        %v426 = vpop.xlane.xlu0 %425
        %427 = vadd.xlane.f32.xlu0 %v422
        %v428 = vpop.xlane.xlu0 %427
        %429 = vadd.xlane.f32.xlu0 %v423
        %v430 = vpop.xlane.xlu0 %429
        %431 = vadd.xlane.f32.xlu0 %v424
        %v432 = vpop.xlane.xlu0 %431
        %v433 = vmul.f32 %v426, %v412
        %v434 = vmul.f32 %v428, %v412
        %v435 = vmul.f32 %v430, %v412
        %v436 = vmul.f32 %v432, %v412
        %v437 = vadd.f32 %v433, 1e-05
        %v438 = vadd.f32 %v434, 1e-05
        %v439 = vadd.f32 %v435, 1e-05
        %v440 = vadd.f32 %v436, 1e-05
        %v441 = vrsqrt.pop %v437
        %v442 = vrsqrt.pop %v438
        %v443 = vrsqrt.pop %v439
        %v444 = vrsqrt.pop %v440
        %v445 = vmul.f32 %v417, %v441
        %v446 = vmul.f32 %v418, %v442
        %v447 = vmul.f32 %v419, %v443
        %v448 = vmul.f32 %v420, %v444
        %v449 = vld [vmem:[#allocation2] sm:$0x1]
        %v451 = vlaneseq
        %v452 = vshrl.u32 %v451, 7
        %v453 = vsub.s32 0, %v452
        %v454 = vrot.slane %v449, %v453
        %v456 = vmul.f32 %v445, %v454
        %v457 = vmul.f32 %v446, %v454
        %v458 = vmul.f32 %v447, %v454
        %v459 = vmul.f32 %v448, %v454
        %v460 = vld [vmem:[#allocation4] sm:$0x1]
        %v462 = vlaneseq
        %v463 = vshrl.u32 %v462, 7
        %v464 = vsub.s32 0, %v463
        %v465 = vrot.slane %v460, %v464
        %v467 = vadd.f32 %v456, %v465
        %v468 = vadd.f32 %v457, %v465
        %v469 = vadd.f32 %v458, %v465
        %v470 = vadd.f32 %v459, %v465
        %v471 = vpack.c.bf16 %v468, %v467
        %v472 = vpack.c.bf16 %v470, %v469
        %v473 = vld [vmem:[%s352] sm:$0xff]
        %v474 = vld [vmem:[%s352 + $0x8] sm:$0xff]
        %v475 = vld [vmem:[%s352 + $0x10] sm:$0xff]
        %v476 = vld [vmem:[%s352 + $0x18] sm:$0xff]
        %v477 = vld [vmem:[%s352 + $0x20] sm:$0xff]
        %v478 = vld [vmem:[%s352 + $0x28] sm:$0xff]
        %v479 = vld [vmem:[%s352 + $0x30] sm:$0xff]
        %v480 = vld [vmem:[%s352 + $0x38] sm:$0xff]
        %v481 = vld [vmem:[%s352 + $0x40] sm:$0xff]
        %v482 = vld [vmem:[%s352 + $0x48] sm:$0xff]
        %v483 = vld [vmem:[%s352 + $0x50] sm:$0xff]
        %v484 = vld [vmem:[%s352 + $0x58] sm:$0xff]
        %v485 = vld [vmem:[%s352 + $0x60] sm:$0xff]
        %v486 = vld [vmem:[%s352 + $0x68] sm:$0xff]
        %v487 = vld [vmem:[%s352 + $0x70] sm:$0xff]
        %v488 = vld [vmem:[%s352 + $0x78] sm:$0xff]
        %v489 = vld [vmem:[%s395] sm:$0x3]
        %v491 = vlaneseq
        %v492 = vshrl.u32 %v491, 7
        %v493 = vsub.s32 0, %v492
        %v494 = vrot.slane %v489, %v493
        %v495 = vlaneseq
        %v496 = vshrl.u32 %v495, 7
        %v497 = vsub.s32 1, %v496
        %v498 = vrot.slane %v489, %v497
        %v517 = vunpack.c.l.b16 %v473
        %v518 = vunpack.c.h.b16 %v473
        %v519 = vunpack.c.l.b16 %v474
        %v520 = vunpack.c.h.b16 %v474
        %v521 = vunpack.c.l.b16 %v475
        %v522 = vunpack.c.h.b16 %v475
        %v523 = vunpack.c.l.b16 %v476
        %v524 = vunpack.c.h.b16 %v476
        %v525 = vunpack.c.l.b16 %v477
        %v526 = vunpack.c.h.b16 %v477
        %v527 = vunpack.c.l.b16 %v478
        %v528 = vunpack.c.h.b16 %v478
        %v529 = vunpack.c.l.b16 %v479
        %v530 = vunpack.c.h.b16 %v479
        %v531 = vunpack.c.l.b16 %v480
        %v532 = vunpack.c.h.b16 %v480
        %v533 = vunpack.c.l.b16 %v481
        %v534 = vunpack.c.h.b16 %v481
        %v535 = vunpack.c.l.b16 %v482
        %v536 = vunpack.c.h.b16 %v482
        %v537 = vunpack.c.l.b16 %v483
        %v538 = vunpack.c.h.b16 %v483
        %v539 = vunpack.c.l.b16 %v484
        %v540 = vunpack.c.h.b16 %v484
        %v541 = vunpack.c.l.b16 %v485
        %v542 = vunpack.c.h.b16 %v485
        %v543 = vunpack.c.l.b16 %v486
        %v544 = vunpack.c.h.b16 %v486
        %v545 = vunpack.c.l.b16 %v487
        %v546 = vunpack.c.h.b16 %v487
        %v547 = vunpack.c.l.b16 %v488
        %v548 = vunpack.c.h.b16 %v488
        %v549 = vpack.c.b16 %v519, %v517
        %v550 = vpack.c.b16 %v520, %v518
        %v551 = vpack.c.b16 %v523, %v521
        %v552 = vpack.c.b16 %v524, %v522
        %v553 = vpack.c.b16 %v527, %v525
        %v554 = vpack.c.b16 %v528, %v526
        %v555 = vpack.c.b16 %v531, %v529
        %v556 = vpack.c.b16 %v532, %v530
        %v557 = vpack.c.b16 %v535, %v533
        %v558 = vpack.c.b16 %v536, %v534
        %v559 = vpack.c.b16 %v539, %v537
        %v560 = vpack.c.b16 %v540, %v538
        %v561 = vpack.c.b16 %v543, %v541
        %v562 = vpack.c.b16 %v544, %v542
        %v563 = vpack.c.b16 %v547, %v545
        %v564 = vpack.c.b16 %v548, %v546
        %581 = vmatprep.subr.bf16.mxu0 %v564
        %582 = vmatpush1.bf16.msra.mxu0 %v563
        %583 = vmatprep.subr.bf16.mxu0 %v562
        %584 = vmatpush1.bf16.msra.mxu0 %v561
        %585 = vmatprep.subr.bf16.mxu0 %v560
        %586 = vmatpush1.bf16.msra.mxu0 %v559
        %587 = vmatprep.subr.bf16.mxu0 %v558
        %588 = vmatpush1.bf16.msra.mxu0 %v557
        %589 = vmatprep.subr.bf16.mxu0 %v556
        %590 = vmatpush1.bf16.msra.mxu0 %v555
        %591 = vmatprep.subr.bf16.mxu0 %v554
        %592 = vmatpush1.bf16.msra.mxu0 %v553
        %593 = vmatprep.subr.bf16.mxu0 %v552
        %594 = vmatpush1.bf16.msra.mxu0 %v551
        %595 = vmatprep.subr.bf16.mxu0 %v550
        %596 = vmatpush1.bf16.msra.mxu0 %v549
        %597 = vmatprep.subr.bf16.mxu0 0
        %598 = vmatpush2.bf16.msra.mxu0 0
        %599 = vmatprep.subr.bf16.mxu0 0
        %600 = vmatpush2.bf16.msra.mxu0 0
        %601 = vmatprep.subr.bf16.mxu0 0
        %602 = vmatpush2.bf16.msra.mxu0 0
        %603 = vmatprep.subr.bf16.mxu0 0
        %604 = vmatpush2.bf16.msra.mxu0 0
        %605 = vmatprep.subr.bf16.mxu0 0
        %606 = vmatpush2.bf16.msra.mxu0 0
        %607 = vmatprep.subr.bf16.mxu0 0
        %608 = vmatpush2.bf16.msra.mxu0 0
        %609 = vmatprep.subr.bf16.mxu0 0
        %610 = vmatpush2.bf16.msra.mxu0 0
        %611 = vmatprep.subr.bf16.mxu0 0
        %612 = vmatpush2.bf16.msra.mxu0 0
        %613 = vmatprep.mubr.bf16.mxu0 0
        %614 = vmatmul.mubr.bf16.gmra.mxu0 %v471
        %v615 = vpop.f32.mrf.mxu0
        %v616 = vadd.f32 %v494, %v615
        %v617 = vpop.f32.mrf.mxu0
        %v618 = vadd.f32 %v498, %v617
        %v619 = vpop.f32.mrf.mxu0
        %v620 = vadd.f32 %v494, %v619
        %v621 = vpop.f32.mrf.mxu0
        %v622 = vadd.f32 %v498, %v621
        %623 = vmatprep.mubr.bf16.mxu0 0
        %624 = vmatmul.mubr.bf16.gmra.mxu0 %v472
        %v625 = vpop.f32.mrf.mxu0
        %v626 = vadd.f32 %v494, %v625
        %v627 = vpop.f32.mrf.mxu0
        %v628 = vadd.f32 %v498, %v627
        %v629 = vpop.f32.mrf.mxu0
        %v630 = vadd.f32 %v494, %v629
        %v631 = vpop.f32.mrf.mxu0
        %v632 = vadd.f32 %v498, %v631
        %633 = vdwg.mxu0
        %v634 = vmul.f32 %v616, %v616
        %v635 = vmul.f32 %v618, %v618
        %v636 = vmul.f32 %v620, %v620
        %v637 = vmul.f32 %v622, %v622
        %v638 = vmul.f32 %v626, %v626
        %v639 = vmul.f32 %v628, %v628
        %v640 = vmul.f32 %v630, %v630
        %v641 = vmul.f32 %v632, %v632
        %v642 = vmul.f32 %v616, %v634
        %v643 = vmul.f32 %v618, %v635
        %v644 = vmul.f32 %v620, %v636
        %v645 = vmul.f32 %v622, %v637
        %v646 = vmul.f32 %v626, %v638
        %v647 = vmul.f32 %v628, %v639
        %v648 = vmul.f32 %v630, %v640
        %v649 = vmul.f32 %v632, %v641
        %v650 = vmul.f32 %v642, 0.044715
        %v651 = vmul.f32 %v643, 0.044715
        %v652 = vmul.f32 %v644, 0.044715
        %v653 = vmul.f32 %v645, 0.044715
        %v654 = vmul.f32 %v646, 0.044715
        %v655 = vmul.f32 %v647, 0.044715
        %v656 = vmul.f32 %v648, 0.044715
        %v657 = vmul.f32 %v649, 0.044715
        %v658 = vadd.f32 %v616, %v650
        %v659 = vadd.f32 %v618, %v651
        %v660 = vadd.f32 %v620, %v652
        %v661 = vadd.f32 %v622, %v653
        %v662 = vadd.f32 %v626, %v654
        %v663 = vadd.f32 %v628, %v655
        %v664 = vadd.f32 %v630, %v656
        %v665 = vadd.f32 %v632, %v657
        %v666 = vmul.f32 %v658, 0.7978846
        %v667 = vmul.f32 %v659, 0.7978846
        %v668 = vmul.f32 %v660, 0.7978846
        %v669 = vmul.f32 %v661, 0.7978846
        %v670 = vmul.f32 %v662, 0.7978846
        %v671 = vmul.f32 %v663, 0.7978846
        %v672 = vmul.f32 %v664, 0.7978846
        %v673 = vmul.f32 %v665, 0.7978846
        %v674 = vtanh.pop %v666
        %v675 = vtanh.pop %v667
        %v676 = vtanh.pop %v668
        %v677 = vtanh.pop %v669
        %v678 = vtanh.pop %v670
        %v679 = vtanh.pop %v671
        %v680 = vtanh.pop %v672
        %v681 = vtanh.pop %v673
        %v682 = vadd.f32 %v674, 1.0
        %v683 = vadd.f32 %v675, 1.0
        %v684 = vadd.f32 %v676, 1.0
        %v685 = vadd.f32 %v677, 1.0
        %v686 = vadd.f32 %v678, 1.0
        %v687 = vadd.f32 %v679, 1.0
        %v688 = vadd.f32 %v680, 1.0
        %v689 = vadd.f32 %v681, 1.0
        %v690 = vmul.f32 %v682, 0.5
        %v691 = vmul.f32 %v683, 0.5
        %v692 = vmul.f32 %v684, 0.5
        %v693 = vmul.f32 %v685, 0.5
        %v694 = vmul.f32 %v686, 0.5
        %v695 = vmul.f32 %v687, 0.5
        %v696 = vmul.f32 %v688, 0.5
        %v697 = vmul.f32 %v689, 0.5
        %v698 = vmul.f32 %v616, %v690
        %v699 = vmul.f32 %v618, %v691
        %v700 = vmul.f32 %v620, %v692
        %v701 = vmul.f32 %v622, %v693
        %v702 = vmul.f32 %v626, %v694
        %v703 = vmul.f32 %v628, %v695
        %v704 = vmul.f32 %v630, %v696
        %v705 = vmul.f32 %v632, %v697
        %v706 = vpack.c.bf16 %v700, %v698
        %v707 = vpack.c.bf16 %v701, %v699
        %v708 = vpack.c.bf16 %v704, %v702
        %v709 = vpack.c.bf16 %v705, %v703
        %v714 = vunpack.c.l.b16 %v706
        %v715 = vunpack.c.l.b16 %v707
        %v716 = vunpack.c.h.b16 %v706
        %v717 = vunpack.c.h.b16 %v707
        %v718 = vunpack.c.l.b16 %v708
        %v719 = vunpack.c.l.b16 %v709
        %v720 = vunpack.c.h.b16 %v708
        %v721 = vunpack.c.h.b16 %v709
        %v722 = vpack.c.b16 %v715, %v714
        %v723 = vpack.c.b16 %v717, %v716
        %v724 = vpack.c.b16 %v719, %v718
        %v725 = vpack.c.b16 %v721, %v720
        %730 = vst [vmem:[%s384] sm:$0xff] %v722
        %731 = vst [vmem:[%s384 + $0x8] sm:$0xff] %v723
        %732 = vst [vmem:[%s384 + $0x10] sm:$0xff] %v724
        %733 = vst [vmem:[%s384 + $0x18] sm:$0xff] %v725
        %s734 = sand.u32 %s160, 1
        %s735 = sand.u32 %s160, 1
        %s736 = smul.addr %s735, 32
        %s737 = scalar_lea.vmem [#allocation7], %s736
        // Predicated region
        $region87: #{wave_mae_forward.31} parent=73 // pred_check
          %p738 = pneg %p170
        $region88: #{wave_mae_forward.31} parent=73 // pred_check_branch
          %740 = sbr.rel (%p738) target = $region90
        $region89: #{wave_mae_forward.31} parent=73 // pred_region
          %s741 = smul.u32 4, %s22
          %s742 = smul.u32 2, %s23
          %s743 = smul.addr %s741, 4
          %s744 = sadd.s32 %s742, %s743
          %s745 = smul.addr %s744, 4
          %s746 = scalar_lea.vmem %s5, %s745
          // Predicated region
          $region91: #{wave_mae_forward.31} parent=89 // pred_check
            _
          $region92: #{wave_mae_forward.31} parent=89 // pred_check_branch
            %748 = sbr.rel (0) target = $region94
          $region93: #{wave_mae_forward.31} parent=89 // pred_region
            // Predicated region
            $region95: #{wave_mae_forward.31} parent=93 // pred_check
              _
            $region96: #{wave_mae_forward.31} parent=93 // pred_check_branch
              %750 = sbr.rel (0) target = $region98
            $region97: #{wave_mae_forward.31} parent=93 // pred_region
              // Predicated region
              $region110: #{wave_mae_forward.31} parent=97 // pred_check
                _
              $region111: #{wave_mae_forward.31} parent=97 // pred_check_branch
                %772 = sbr.rel (0) target = $region113
              $region112: #{wave_mae_forward.31} parent=97 // pred_region
                loop: start=0, step=1, limit=1
                $region114: #{wave_mae_forward.31} parent=112 // loop_pre_header
                  _
                $region115: #{wave_mae_forward.31} parent=112 // loop_header
                  %s774 = sphi 0, %s778
                  %p775 = scmp.ge.s32.totalorder %s774, 1
                  %s779 = sphi %s737, %s737
                  %s780 = sphi %s746, %s746
                $region116: #{wave_mae_forward.31} parent=112 // loop_header_branch
                  %777 = sbr.rel (%p775) target = $region120
                $region117: #{wave_mae_forward.31} parent=112 // loop_body
                  %v781 = vld [vmem:[%s779] sm:$0xff]
                  %782 = vst [vmem:[%s780] sm:$0xff] %v781
                  %v783 = vld [vmem:[%s779 + $0x8] sm:$0xff]
                  %784 = vst [vmem:[%s780 + $0x10] sm:$0xff] %v783
                  %v785 = vld [vmem:[%s779 + $0x10] sm:$0xff]
                  %786 = vst [vmem:[%s780 + $0x20] sm:$0xff] %v785
                  %v787 = vld [vmem:[%s779 + $0x18] sm:$0xff]
                  %788 = vst [vmem:[%s780 + $0x30] sm:$0xff] %v787
                $region118: #{wave_mae_forward.31} parent=112 // loop_footer
                  %s778 = sadd.s32 1, %s774
                $region119: #{wave_mae_forward.31} parent=112 // loop_footer_branch
                  %773 = sbr.rel target = $region115
                $region120: #{wave_mae_forward.31} parent=112 // loop_exit
                  _
              $region113: #{wave_mae_forward.31} parent=97 // pred_fallthru
                _
              // Predicated region
              $region121: #{wave_mae_forward.31} parent=97 // pred_check
                _
              $region122: #{wave_mae_forward.31} parent=97 // pred_check_branch
                %790 = sbr.rel target = $region124
              $region123: #{wave_mae_forward.31} parent=97 // pred_region
                _
              $region124: #{wave_mae_forward.31} parent=97 // pred_fallthru
                _
            $region98: #{wave_mae_forward.31} parent=93 // pred_fallthru
              _
            // Predicated region
            $region99: #{wave_mae_forward.31} parent=93 // pred_check
              _
            $region100: #{wave_mae_forward.31} parent=93 // pred_check_branch
              %752 = sbr.rel target = $region102
            $region101: #{wave_mae_forward.31} parent=93 // pred_region
              %s754 = ssub.s32 256, 1
              loop: start=0, step=1, limit=1
              $region103: #{wave_mae_forward.31} parent=101 // loop_pre_header
                _
              $region104: #{wave_mae_forward.31} parent=101 // loop_header
                %s756 = sphi 0, %s760
                %p757 = scmp.ge.s32.totalorder %s756, 1
                %s761 = sphi %s737, %s737
                %s762 = sphi %s746, %s746
              $region105: #{wave_mae_forward.31} parent=101 // loop_header_branch
                %759 = sbr.rel (%p757) target = $region109
              $region106: #{wave_mae_forward.31} parent=101 // loop_body
                %v763 = vld [vmem:[%s761] sm:%s754]
                %764 = vst [vmem:[%s762] sm:%s754] %v763
                %v765 = vld [vmem:[%s761 + $0x8] sm:%s754]
                %766 = vst [vmem:[%s762 + $0x10] sm:%s754] %v765
                %v767 = vld [vmem:[%s761 + $0x10] sm:%s754]
                %768 = vst [vmem:[%s762 + $0x20] sm:%s754] %v767
                %v769 = vld [vmem:[%s761 + $0x18] sm:%s754]
                %770 = vst [vmem:[%s762 + $0x30] sm:%s754] %v769
              $region107: #{wave_mae_forward.31} parent=101 // loop_footer
                %s760 = sadd.s32 1, %s756
              $region108: #{wave_mae_forward.31} parent=101 // loop_footer_branch
                %755 = sbr.rel target = $region104
              $region109: #{wave_mae_forward.31} parent=101 // loop_exit
                _
            $region102: #{wave_mae_forward.31} parent=93 // pred_fallthru
              _
          $region94: #{wave_mae_forward.31} parent=89 // pred_fallthru
            _
          %791 = vnop
        $region90: #{wave_mae_forward.31} parent=73 // pred_fallthru
          _
      $region74: #{wave_mae_forward.31} parent=5 // pred_fallthru
        _
      %p792 = scmp.le.s32.totalorder 2, %s13
      // Predicated region
      $region125: #{wave_mae_forward.31} parent=5 // pred_check
        %p793 = pneg %p792
      $region126: #{wave_mae_forward.31} parent=5 // pred_check_branch
        %795 = sbr.rel (%p793) target = $region128
      $region127: #{wave_mae_forward.31} parent=5 // pred_region
        %s796 = ssub.s32 %s13, 2
        // Predicated region
        $region129: #{wave_mae_forward.31} parent=127 // pred_check
          %p797 = pneg %p176
        $region130: #{wave_mae_forward.31} parent=127 // pred_check_branch
          %799 = sbr.rel (%p797) target = $region132
        $region131: #{wave_mae_forward.31} parent=127 // pred_region
          %s800 = sand.u32 %s161, 1
          %s801 = sand.u32 %s161, 1
          %s802 = smul.addr %s801, 32
          %s803 = scalar_lea.vmem [#allocation7], %s802
        $region132: #{wave_mae_forward.31} parent=127 // pred_fallthru
          _
      $region128: #{wave_mae_forward.31} parent=5 // pred_fallthru
        _
    $region6: #{wave_mae_forward.31} parent=1 // loop_footer
      %s17 = sadd.s32 1, %s13
    $region7: #{wave_mae_forward.31} parent=1 // loop_footer_branch
      %12 = sbr.rel target = $region3
    $region8: #{wave_mae_forward.31} parent=1 // loop_exit
      _
    %804 = vsyncpa [#allocation3], 1
    %s805 = scalar_lea.sflag [#allocation3], 1
    %806 = vsyncpa %s805, 1
    %807 = vsyncpa [#allocation5], 1

// kernel: wave_mae_forward.43
$region0: #{wave_mae_forward.43}
  #allocation0 [shape = 'u32[]', space=smem, size = 0x4, offset = 0x4, fixed_abs, tag = 'smem constant byte address 0x4 - core index']
  #allocation1 [shape = 'u32[144,128]{1,0:T(1,128)}', space=vmem, size = 0x12000, scoped, tag = 'internal scratch']
  %s0 = inlined_call_operand.vmem [shape: f32[32,128], index: 0, kind: input, shape index: {}]
  %s1 = inlined_call_operand.vmem [shape: bf16[128,256], index: 1, kind: input, shape index: {}]
  %s2 = inlined_call_operand.vmem [shape: f32[1,256], index: 2, kind: input, shape index: {}]
  %s3 = inlined_call_operand.vmem [shape: f32[32,256], index: 3, kind: output, shape index: {}]
  %s4 = sld [smem:[#allocation0]]
  $region22: #{wave_mae_forward.43} parent=0
    _
  %s6 = ssub.s32 1, %s4
  %s7 = scalar_select 0, %s6, %s4
  // Predicated region
  $region2: #{wave_mae_forward.43} parent=0 // pred_check
    _
  $region3: #{wave_mae_forward.43} parent=0 // pred_check_branch
    %9 = sbr.rel (0) target = $region5
  $region4: #{wave_mae_forward.43} parent=0 // pred_region
    _
  $region5: #{wave_mae_forward.43} parent=0 // pred_fallthru
    _
  // Predicated region
  $region6: #{wave_mae_forward.43} parent=0 // pred_check
    _
  $region7: #{wave_mae_forward.43} parent=0 // pred_check_branch
    %11 = sbr.rel (0) target = $region9
  $region8: #{wave_mae_forward.43} parent=0 // pred_region
    _
  $region9: #{wave_mae_forward.43} parent=0 // pred_fallthru
    _
  // Predicated region
  $region10: #{wave_mae_forward.43} parent=0 // pred_check
    _
  $region11: #{wave_mae_forward.43} parent=0 // pred_check_branch
    %13 = sbr.rel (0) target = $region13
  $region12: #{wave_mae_forward.43} parent=0 // pred_region
    _
  $region13: #{wave_mae_forward.43} parent=0 // pred_fallthru
    _
  %v15 = vld [vmem:[%s0] sm:$0xff]
  %v16 = vld [vmem:[%s0 + $0x8] sm:$0xff]
  %v17 = vld [vmem:[%s0 + $0x10] sm:$0xff]
  %v18 = vld [vmem:[%s0 + $0x18] sm:$0xff]
  %v19 = vpack.c.bf16 %v16, %v15
  %v20 = vpack.c.bf16 %v18, %v17
  %v21 = vld [vmem:[%s1] sm:$0xff]
  %v22 = vld [vmem:[%s1 + $0x8] sm:$0xff]
  %v23 = vld [vmem:[%s1 + $0x10] sm:$0xff]
  %v24 = vld [vmem:[%s1 + $0x18] sm:$0xff]
  %v25 = vld [vmem:[%s1 + $0x20] sm:$0xff]
  %v26 = vld [vmem:[%s1 + $0x28] sm:$0xff]
  %v27 = vld [vmem:[%s1 + $0x30] sm:$0xff]
  %v28 = vld [vmem:[%s1 + $0x38] sm:$0xff]
  %v29 = vld [vmem:[%s1 + $0x40] sm:$0xff]
  %v30 = vld [vmem:[%s1 + $0x48] sm:$0xff]
  %v31 = vld [vmem:[%s1 + $0x50] sm:$0xff]
  %v32 = vld [vmem:[%s1 + $0x58] sm:$0xff]
  %v33 = vld [vmem:[%s1 + $0x60] sm:$0xff]
  %v34 = vld [vmem:[%s1 + $0x68] sm:$0xff]
  %v35 = vld [vmem:[%s1 + $0x70] sm:$0xff]
  %v36 = vld [vmem:[%s1 + $0x78] sm:$0xff]
  %v37 = vld [vmem:[%s2] sm:$0x3]
  %v39 = vlaneseq
  %v40 = vshrl.u32 %v39, 7
  %v41 = vsub.s32 0, %v40
  %v42 = vrot.slane %v37, %v41
  %v43 = vlaneseq
  %v44 = vshrl.u32 %v43, 7
  %v45 = vsub.s32 1, %v44
  %v46 = vrot.slane %v37, %v45
  %v65 = vunpack.c.l.b16 %v21
  %v66 = vunpack.c.h.b16 %v21
  %v67 = vunpack.c.l.b16 %v22
  %v68 = vunpack.c.h.b16 %v22
  %v69 = vunpack.c.l.b16 %v23
  %v70 = vunpack.c.h.b16 %v23
  %v71 = vunpack.c.l.b16 %v24
  %v72 = vunpack.c.h.b16 %v24
  %v73 = vunpack.c.l.b16 %v25
  %v74 = vunpack.c.h.b16 %v25
  %v75 = vunpack.c.l.b16 %v26
  %v76 = vunpack.c.h.b16 %v26
  %v77 = vunpack.c.l.b16 %v27
  %v78 = vunpack.c.h.b16 %v27
  %v79 = vunpack.c.l.b16 %v28
  %v80 = vunpack.c.h.b16 %v28
  %v81 = vunpack.c.l.b16 %v29
  %v82 = vunpack.c.h.b16 %v29
  %v83 = vunpack.c.l.b16 %v30
  %v84 = vunpack.c.h.b16 %v30
  %v85 = vunpack.c.l.b16 %v31
  %v86 = vunpack.c.h.b16 %v31
  %v87 = vunpack.c.l.b16 %v32
  %v88 = vunpack.c.h.b16 %v32
  %v89 = vunpack.c.l.b16 %v33
  %v90 = vunpack.c.h.b16 %v33
  %v91 = vunpack.c.l.b16 %v34
  %v92 = vunpack.c.h.b16 %v34
  %v93 = vunpack.c.l.b16 %v35
  %v94 = vunpack.c.h.b16 %v35
  %v95 = vunpack.c.l.b16 %v36
  %v96 = vunpack.c.h.b16 %v36
  %v97 = vpack.c.b16 %v67, %v65
  %v98 = vpack.c.b16 %v68, %v66
  %v99 = vpack.c.b16 %v71, %v69
  %v100 = vpack.c.b16 %v72, %v70
  %v101 = vpack.c.b16 %v75, %v73
  %v102 = vpack.c.b16 %v76, %v74
  %v103 = vpack.c.b16 %v79, %v77
  %v104 = vpack.c.b16 %v80, %v78
  %v105 = vpack.c.b16 %v83, %v81
  %v106 = vpack.c.b16 %v84, %v82
  %v107 = vpack.c.b16 %v87, %v85
  %v108 = vpack.c.b16 %v88, %v86
  %v109 = vpack.c.b16 %v91, %v89
  %v110 = vpack.c.b16 %v92, %v90
  %v111 = vpack.c.b16 %v95, %v93
  %v112 = vpack.c.b16 %v96, %v94
  %129 = vmatprep.subr.bf16.mxu0 %v112
  %130 = vmatpush1.bf16.msra.mxu0 %v111
  %131 = vmatprep.subr.bf16.mxu0 %v110
  %132 = vmatpush1.bf16.msra.mxu0 %v109
  %133 = vmatprep.subr.bf16.mxu0 %v108
  %134 = vmatpush1.bf16.msra.mxu0 %v107
  %135 = vmatprep.subr.bf16.mxu0 %v106
  %136 = vmatpush1.bf16.msra.mxu0 %v105
  %137 = vmatprep.subr.bf16.mxu0 %v104
  %138 = vmatpush1.bf16.msra.mxu0 %v103
  %139 = vmatprep.subr.bf16.mxu0 %v102
  %140 = vmatpush1.bf16.msra.mxu0 %v101
  %141 = vmatprep.subr.bf16.mxu0 %v100
  %142 = vmatpush1.bf16.msra.mxu0 %v99
  %143 = vmatprep.subr.bf16.mxu0 %v98
  %144 = vmatpush1.bf16.msra.mxu0 %v97
  %145 = vmatprep.subr.bf16.mxu0 0
  %146 = vmatpush2.bf16.msra.mxu0 0
  %147 = vmatprep.subr.bf16.mxu0 0
  %148 = vmatpush2.bf16.msra.mxu0 0
  %149 = vmatprep.subr.bf16.mxu0 0
  %150 = vmatpush2.bf16.msra.mxu0 0
  %151 = vmatprep.subr.bf16.mxu0 0
  %152 = vmatpush2.bf16.msra.mxu0 0
  %153 = vmatprep.subr.bf16.mxu0 0
  %154 = vmatpush2.bf16.msra.mxu0 0
  %155 = vmatprep.subr.bf16.mxu0 0
  %156 = vmatpush2.bf16.msra.mxu0 0
  %157 = vmatprep.subr.bf16.mxu0 0
  %158 = vmatpush2.bf16.msra.mxu0 0
  %159 = vmatprep.subr.bf16.mxu0 0
  %160 = vmatpush2.bf16.msra.mxu0 0
  %161 = vmatprep.mubr.bf16.mxu0 0
  %162 = vmatmul.mubr.bf16.gmra.mxu0 %v19
  %v163 = vpop.f32.mrf.mxu0
  %v164 = vadd.f32 %v42, %v163
  %v165 = vpop.f32.mrf.mxu0
  %v166 = vadd.f32 %v46, %v165
  %v167 = vpop.f32.mrf.mxu0
  %v168 = vadd.f32 %v42, %v167
  %v169 = vpop.f32.mrf.mxu0
  %v170 = vadd.f32 %v46, %v169
  %171 = vmatprep.mubr.bf16.mxu0 0
  %172 = vmatmul.mubr.bf16.gmra.mxu0 %v20
  %v173 = vpop.f32.mrf.mxu0
  %v174 = vadd.f32 %v42, %v173
  %v175 = vpop.f32.mrf.mxu0
  %v176 = vadd.f32 %v46, %v175
  %v177 = vpop.f32.mrf.mxu0
  %v178 = vadd.f32 %v42, %v177
  %v179 = vpop.f32.mrf.mxu0
  %v180 = vadd.f32 %v46, %v179
  %181 = vdwg.mxu0
  %182 = vst [vmem:[%s3] sm:$0xff] %v164
  %183 = vst [vmem:[%s3 + $0x8] sm:$0xff] %v166
  %184 = vst [vmem:[%s3 + $0x10] sm:$0xff] %v168
  %185 = vst [vmem:[%s3 + $0x18] sm:$0xff] %v170
  %186 = vst [vmem:[%s3 + $0x20] sm:$0xff] %v174
  %187 = vst [vmem:[%s3 + $0x28] sm:$0xff] %v176
  %188 = vst [vmem:[%s3 + $0x30] sm:$0xff] %v178
  %189 = vst [vmem:[%s3 + $0x38] sm:$0xff] %v180
  // Predicated region
  $region14: #{wave_mae_forward.43} parent=0 // pred_check
    _
  $region15: #{wave_mae_forward.43} parent=0 // pred_check_branch
    %191 = sbr.rel (0) target = $region17
  $region16: #{wave_mae_forward.43} parent=0 // pred_region
    _
  $region17: #{wave_mae_forward.43} parent=0 // pred_fallthru
    _
  // Predicated region
  $region18: #{wave_mae_forward.43} parent=0 // pred_check
    _
  $region19: #{wave_mae_forward.43} parent=0 // pred_check_branch
    %193 = sbr.rel (0) target = $region21
  $region20: #{wave_mae_forward.43} parent=0 // pred_region
    _
  $region21: #{wave_mae_forward.43} parent=0 // pred_fallthru
    _

</llo_original>
